<compile_context>
chip_gen: v7x
topology: tpu7x:2x2x1
jax: 0.10.0
libtpu: 0.0.40
codegen_flags: <defaults>
</compile_context>

<pallas_src>
import jax
import jax.numpy as jnp
from jax import lax
from jax.experimental import pallas as pl
from jax.experimental.pallas import tpu as pltpu

_NEG_BIG = -1.0e30


def _kg_agg_kernel(ent_ref, w_ref, head_ref, tail_ref, ridx_ref, eagg_ref,
                   m_tbl, gmax, gsum):
    """KG aggregation: attention + segment softmax + scatter-sum over edge tiles."""
    f32 = jnp.float32
    HI = jax.lax.Precision.HIGHEST

    phase = pl.program_id(0)       # 0: segment max, 1: segment exp-sum, 2: scatter
    eblk = pl.program_id(1)        # edge tile index

    ent = ent_ref[...]             # [Np, Dp] f32 (resident)
    w = w_ref[...]                 # [R,  Dp] f32 (resident)
    head = head_ref[...]           # [TE, 1] int32 (padded edges carry head == Np)
    tail = tail_ref[...]           # [TE, 1] int32
    ridx = ridx_ref[...]           # [TE, 1] int32

    Np = ent.shape[0]
    TE = head.shape[0]
    R = w.shape[0]

    # One-time init + factorized norm table M[n, r] = ||ent[n] * w[r]||^2.
    @pl.when((phase == 0) & (eblk == 0))
    def _init():
        eagg_ref[...] = jnp.zeros_like(eagg_ref)
        gmax[...] = jnp.full(gmax.shape, _NEG_BIG, dtype=f32)
        gsum[...] = jnp.zeros(gsum.shape, dtype=f32)
        m_tbl[...] = jnp.einsum('nd,rd->nr', ent * ent, w * w,
                                precision=HI, preferred_element_type=f32)

    valid = head < Np                                           # pad edges -> False
    ids_n = lax.broadcasted_iota(jnp.int32, (TE, Np), 1)
    ids_r = lax.broadcasted_iota(jnp.int32, (TE, R), 1)
    oh_head_b = ids_n == head                                   # [TE, Np] bool
    oh_head = oh_head_b.astype(f32)
    oh_tail = (ids_n == tail).astype(f32)                       # [TE, Np]
    oh_rel = (ids_r == ridx).astype(f32)                        # [TE, R]

    # att[e] = (||ent[h]*w[r]|| * ||ent[t]*w[r]||)^2 = M[h, r] * M[t, r]  (no sqrt, no e_head gather)
    m = m_tbl[...]                                              # [Np, R]
    mh = jnp.dot(oh_head, m, precision=HI, preferred_element_type=f32)   # [TE, R]
    mt = jnp.dot(oh_tail, m, precision=HI, preferred_element_type=f32)   # [TE, R]
    att = jnp.sum(mh * mt * oh_rel, axis=1, keepdims=True)               # [TE, 1]
    att = jnp.where(valid, att, f32(_NEG_BIG))

    @pl.when(phase == 0)      # pass 1: per-head running max (scatter_softmax max)
    def _seg_max():
        blk = jnp.max(jnp.where(oh_head_b, att, f32(_NEG_BIG)), axis=0, keepdims=True)  # [1, Np]
        gmax[...] = jnp.maximum(gmax[...], blk)

    @pl.when(phase == 1)      # pass 2: per-head sum of exp(att - max)
    def _seg_sum():
        edge_max = jnp.sum(jnp.where(oh_head_b, gmax[...], f32(0.0)), axis=1, keepdims=True)  # [TE,1]
        ex = jnp.exp(att - edge_max)
        gsum[...] += jnp.sum(jnp.where(oh_head_b, ex, f32(0.0)), axis=0, keepdims=True)

    @pl.when(phase == 2)      # pass 3: normalized message scatter into entity_agg
    def _scatter():
        edge_max = jnp.sum(jnp.where(oh_head_b, gmax[...], f32(0.0)), axis=1, keepdims=True)  # [TE,1]
        edge_sum = jnp.sum(jnp.where(oh_head_b, gsum[...], f32(0.0)), axis=1, keepdims=True)  # [TE,1]
        ex = jnp.exp(att - edge_max)
        softw = jnp.where(edge_sum > 0, ex / edge_sum, f32(0.0))                 # scatter_softmax weight
        rel = jnp.dot(oh_rel, w, precision=HI, preferred_element_type=f32)       # weight[ridx]    [TE, Dp]
        e_tail = jnp.dot(oh_tail, ent, preferred_element_type=f32)               # entity_emb[tail] (default prec)
        contrib = softw * e_tail * rel                                            # [TE, Dp]
        eagg_ref[...] += jnp.einsum('en,ed->nd', oh_head, contrib,               # scatter_sum (default prec)
                                    preferred_element_type=f32)


def _user_agg_kernel(inter_ref, ent_ref, usr_ref, w_ref, out_ref):
    """user_agg = interact_mat @ entity_emb, then relation-aware gating."""
    f32 = jnp.float32
    HI = jax.lax.Precision.HIGHEST
    k = pl.program_id(1)

    @pl.when(k == 0)
    def _init():
        out_ref[...] = jnp.zeros_like(out_ref)

    # bf16 x bf16 -> f32 accumulate (interact_mat values are 0/1, exact in bf16).
    out_ref[...] += jnp.dot(inter_ref[...], ent_ref[...], preferred_element_type=f32)

    @pl.when(k == pl.num_programs(1) - 1)
    def _finish():
        usr = usr_ref[...]
        w = w_ref[...]
        logits = jnp.einsum('ud,rd->ur', usr, w, precision=HI, preferred_element_type=f32)  # [TU, R]
        logits = logits - jnp.max(logits, axis=1, keepdims=True)
        p = jnp.exp(logits)
        score = p / jnp.sum(p, axis=1, keepdims=True)                                        # softmax(dim=-1)
        gate = jnp.dot(score, w, precision=HI, preferred_element_type=f32)                   # [TU, Dp]
        out_ref[...] = out_ref[...] * (1.0 + gate)      # user_agg + (score @ w) * user_agg


def _round_up(x, m):
    return ((x + m - 1) // m) * m


def aggregator_forward(entity_emb, user_emb, edge_index, edge_type, interact_mat, weight,
                       *, edge_tile=256, user_tile=256, ent_tile=512):
    f32 = jnp.float32
    bf16 = jnp.bfloat16
    N, D = entity_emb.shape
    U = user_emb.shape[0]
    R = weight.shape[0]
    E = edge_index.shape[1]

    # ---- tile sizes (second-minor dims multiples of 8, feature dim lane-dense) ----
    te = _round_up(min(edge_tile, _round_up(E, 8)), 8)
    tn = _round_up(min(ent_tile, _round_up(N, 8)), 8)
    tu = _round_up(min(user_tile, _round_up(U, 8)), 8)
    Dp = _round_up(D, 128)
    Np = _round_up(N, tn)
    Up = _round_up(U, tu)
    Ep = _round_up(E, te)

    # ---- index preprocessing (matches the torch clamps + negative-index wrap) ----
    head = jnp.clip(edge_index[0], 0, N - 1).astype(jnp.int32)
    tail = jnp.clip(edge_index[1], 0, N - 1).astype(jnp.int32)
    et = jnp.clip(edge_type - 1, 0, R - 1).astype(jnp.int32)
    ridx = jnp.mod(et - 1, R).astype(jnp.int32)   # weight[edge_type - 1] after the clamp (wraps -1 -> R-1)
    head_c = jnp.pad(head, (0, Ep - E), constant_values=Np).reshape(Ep, 1)  # sentinel Np marks padding
    tail_c = jnp.pad(tail, (0, Ep - E)).reshape(Ep, 1)
    ridx_c = jnp.pad(ridx, (0, Ep - E)).reshape(Ep, 1)

    # ---- lane-dense, zero-padded operands ----
    ent_p = jnp.zeros((Np, Dp), f32).at[:N, :D].set(entity_emb.astype(f32))
    w_p = jnp.zeros((R, Dp), f32).at[:, :D].set(weight.astype(f32))
    usr_p = jnp.zeros((Up, Dp), f32).at[:U, :D].set(user_emb.astype(f32))
    # TODO(synk): interact_mat is a torch sparse [U, N] matrix in the original module;
    # it is densified here (0/1 values, exact in bf16).
    inter_p = jnp.zeros((Up, Np), bf16).at[:U, :N].set(interact_mat.astype(bf16))
    ent_b = ent_p.astype(bf16)

    cparams_a = pltpu.CompilerParams(
        dimension_semantics=("arbitrary", "arbitrary"),
        vmem_limit_bytes=32 * 1024 * 1024)
    cparams_b = pltpu.CompilerParams(
        dimension_semantics=("parallel", "arbitrary"),
        vmem_limit_bytes=32 * 1024 * 1024)

    # ---- kernel A: KG aggregation (3 passes over edge tiles) ----
    n_eblk = Ep // te
    eagg_p = pl.pallas_call(
        _kg_agg_kernel,
        out_shape=jax.ShapeDtypeStruct((Np, Dp), f32),
        grid_spec=pltpu.PrefetchScalarGridSpec(
            num_scalar_prefetch=0,
            grid=(3, n_eblk),
            in_specs=[
                pl.BlockSpec((Np, Dp), lambda p, e: (0, 0)),   # entity table (resident)
                pl.BlockSpec((R, Dp), lambda p, e: (0, 0)),    # relation table (resident)
                pl.BlockSpec((te, 1), lambda p, e: (e, 0)),    # head indices
                pl.BlockSpec((te, 1), lambda p, e: (e, 0)),    # tail indices
                pl.BlockSpec((te, 1), lambda p, e: (e, 0)),    # relation indices
            ],
            out_specs=pl.BlockSpec((Np, Dp), lambda p, e: (0, 0)),
            scratch_shapes=[
                pltpu.VMEM((Np, R), f32),     # M = ent^2 @ (w^2)^T
                pltpu.VMEM((1, Np), f32),     # per-head running max
                pltpu.VMEM((1, Np), f32),     # per-head exp-sum
            ]),
        compiler_params=cparams_a,
    )(ent_p, w_p, head_c, tail_c, ridx_c)

    # ---- kernel B: user aggregation (users parallel across cores, entities as contraction) ----
    uagg_p = pl.pallas_call(
        _user_agg_kernel,
        out_shape=jax.ShapeDtypeStruct((Up, Dp), f32),
        grid_spec=pltpu.PrefetchScalarGridSpec(
            num_scalar_prefetch=0,
            grid=(Up // tu, Np // tn),
            in_specs=[
                pl.BlockSpec((tu, tn), lambda u, k: (u, k)),   # interact_mat (bf16)
                pl.BlockSpec((tn, Dp), lambda u, k: (k, 0)),   # entity_emb   (bf16)
                pl.BlockSpec((tu, Dp), lambda u, k: (u, 0)),   # user_emb
                pl.BlockSpec((R, Dp), lambda u, k: (0, 0)),    # weight
            ],
            out_specs=pl.BlockSpec((tu, Dp), lambda u, k: (u, 0)),
        ),
        compiler_params=cparams_b,
    )(inter_p, ent_b, usr_p, w_p)

    return eagg_p[:N, :D], uagg_p[:U, :D]


def aggregator_reference(entity_emb, user_emb, edge_index, edge_type, interact_mat, weight):
    """Pure-JAX reference matching the PyTorch forward."""
    N, D = entity_emb.shape
    R = weight.shape[0]
    head = jnp.clip(edge_index[0], 0, N - 1)
    tail = jnp.clip(edge_index[1], 0, N - 1)
    et = jnp.clip(edge_type - 1, 0, R - 1)
    ridx = jnp.mod(et - 1, R)

    e_head = entity_emb[head]
    e_tail = entity_emb[tail]
    rel = weight[ridx]
    neigh = e_tail * rel
    tn = jnp.linalg.norm(e_tail * rel, axis=1)
    hn = jnp.linalg.norm(e_head * rel, axis=1)
    att = (hn * tn) ** 2                                      # [E]

    gmax = jax.ops.segment_max(att, head, num_segments=N)
    ex = jnp.exp(att - gmax[head])
    gsum = jax.ops.segment_sum(ex, head, num_segments=N)
    softw = ex / gsum[head]
    eagg = jax.ops.segment_sum(softw[:, None] * neigh, head, num_segments=N)

    uagg = interact_mat @ entity_emb
    score = jax.nn.softmax(user_emb @ weight.T, axis=-1)
    uagg = uagg + (score @ weight) * uagg
    return eagg, uagg


if __name__ == "__main__":
    key = jax.random.PRNGKey(0)
    k1, k2, k3, k4, k5, k6 = jax.random.split(key, 6)

    # n_entities, hidden, n_users, n_relations, n_edges  (small, but multi-tile + edge padding)
    N, D, U, R, E = 64, 32, 16, 6, 130

    entity_emb = 0.5 * jax.random.normal(k1, (N, D), dtype=jnp.float32)
    user_emb = 0.5 * jax.random.normal(k2, (U, D), dtype=jnp.float32)
    weight = 0.5 * jax.random.normal(k3, (R, D), dtype=jnp.float32)
    edge_index = jax.random.randint(k4, (2, E), 0, N + 4, dtype=jnp.int32)   # exercises the clamps
    edge_type = jax.random.randint(k5, (E,), 0, R + 2, dtype=jnp.int32)
    interact_mat = (jax.random.uniform(k6, (U, N)) < 0.2).astype(jnp.float32)  # dense stand-in for sparse mat

    eagg, uagg = aggregator_forward(entity_emb, user_emb, edge_index, edge_type,
                                    interact_mat, weight,
                                    edge_tile=32, user_tile=8, ent_tile=32)
    eagg, uagg = jax.block_until_ready((eagg, uagg))

    with jax.default_matmul_precision("highest"):
        eagg_ref, uagg_ref = aggregator_reference(entity_emb, user_emb, edge_index,
                                                  edge_type, interact_mat, weight)
    eagg_ref, uagg_ref = jax.block_until_ready((eagg_ref, uagg_ref))

    assert jnp.allclose(eagg, eagg_ref, rtol=2e-2, atol=2e-2), \
        float(jnp.max(jnp.abs(eagg - eagg_ref)))
    assert jnp.allclose(uagg, uagg_ref, rtol=2e-2, atol=2e-2), \
        float(jnp.max(jnp.abs(uagg - uagg_ref)))

    print("KERNEL_OK")
</pallas_src>

<mosaic_0001>
module attributes {stable_mosaic.version = 11 : i64} {
  func.func @_kg_agg_kernel(%arg0: i32, %arg1: i32, %arg2: memref<64x128xf32, #tpu.memory_space<vmem>>, %arg3: memref<6x128xf32, #tpu.memory_space<vmem>>, %arg4: memref<32x1xi32, #tpu.memory_space<vmem>>, %arg5: memref<32x1xi32, #tpu.memory_space<vmem>>, %arg6: memref<32x1xi32, #tpu.memory_space<vmem>>, %arg7: memref<64x128xf32, #tpu.memory_space<vmem>>, %arg8: memref<64x6xf32, #tpu.memory_space<vmem>>, %arg9: memref<1x64xf32, #tpu.memory_space<vmem>>, %arg10: memref<1x64xf32, #tpu.memory_space<vmem>>) attributes {dimension_semantics = [#tpu.dimension_semantics<arbitrary>, #tpu.dimension_semantics<arbitrary>], iteration_bounds = array<i64: 3, 5>, scalar_prefetch = 0 : i64, scratch_operands = 3 : i64, tpu.core_type = #tpu.core_type<tc>, window_params = [{pipeline_mode = #tpu.pipeline_mode<synchronous>, transform_indices = @transform_0, window_bounds = array<i64: 64, 128>}, {pipeline_mode = #tpu.pipeline_mode<synchronous>, transform_indices = @transform_1, window_bounds = array<i64: 6, 128>}, {transform_indices = @transform_2, window_bounds = array<i64: 32, 1>}, {transform_indices = @transform_3, window_bounds = array<i64: 32, 1>}, {transform_indices = @transform_4, window_bounds = array<i64: 32, 1>}, {pipeline_mode = #tpu.pipeline_mode<synchronous>, transform_indices = @transform_5, window_bounds = array<i64: 64, 128>}]} {
    %c0 = arith.constant 0 : index
    %c0_0 = arith.constant 0 : index
    %0 = vector.load %arg2[%c0, %c0_0] : memref<64x128xf32, #tpu.memory_space<vmem>>, vector<64x128xf32>
    %c0_1 = arith.constant 0 : index
    %c0_2 = arith.constant 0 : index
    %1 = vector.load %arg3[%c0_1, %c0_2] : memref<6x128xf32, #tpu.memory_space<vmem>>, vector<6x128xf32>
    %c0_3 = arith.constant 0 : index
    %c0_4 = arith.constant 0 : index
    %2 = vector.load %arg4[%c0_3, %c0_4] : memref<32x1xi32, #tpu.memory_space<vmem>>, vector<32x1xi32>
    %c0_5 = arith.constant 0 : index
    %c0_6 = arith.constant 0 : index
    %3 = vector.load %arg5[%c0_5, %c0_6] : memref<32x1xi32, #tpu.memory_space<vmem>>, vector<32x1xi32>
    %c0_7 = arith.constant 0 : index
    %c0_8 = arith.constant 0 : index
    %4 = vector.load %arg6[%c0_7, %c0_8] : memref<32x1xi32, #tpu.memory_space<vmem>>, vector<32x1xi32>
    %c0_i32 = arith.constant 0 : i32
    %5 = arith.cmpi eq, %arg0, %c0_i32 : i32
    %c0_i32_9 = arith.constant 0 : i32
    %6 = arith.cmpi eq, %arg1, %c0_i32_9 : i32
    %7 = arith.andi %5, %6 : i1
    %8 = arith.extui %7 : i1 to i32
    %c0_i32_10 = arith.constant 0 : i32
    %9 = arith.cmpi ne, %8, %c0_i32_10 : i32
    scf.if %9 {
      %cst_20 = arith.constant 0.000000e+00 : f32
      %44 = vector.broadcast %cst_20 : f32 to vector<64x128xf32>
      %c0_21 = arith.constant 0 : index
      %c0_22 = arith.constant 0 : index
      %45 = vector.load %arg7[%c0_21, %c0_22] : memref<64x128xf32, #tpu.memory_space<vmem>>, vector<64x128xf32>
      tpu.vector_store %arg7[%c0_21, %c0_22], %44 {strides = array<i32>} : memref<64x128xf32, #tpu.memory_space<vmem>>, vector<64x128xf32>,
      %cst_23 = arith.constant -1.000000e+30 : f32
      %46 = vector.broadcast %cst_23 : f32 to vector<1x64xf32>
      %c0_24 = arith.constant 0 : index
      %c0_25 = arith.constant 0 : index
      %47 = vector.load %arg9[%c0_24, %c0_25] : memref<1x64xf32, #tpu.memory_space<vmem>>, vector<1x64xf32>
      tpu.vector_store %arg9[%c0_24, %c0_25], %46 {strides = array<i32>} : memref<1x64xf32, #tpu.memory_space<vmem>>, vector<1x64xf32>,
      %cst_26 = arith.constant 0.000000e+00 : f32
      %48 = vector.broadcast %cst_26 : f32 to vector<1x64xf32>
      %c0_27 = arith.constant 0 : index
      %c0_28 = arith.constant 0 : index
      %49 = vector.load %arg10[%c0_27, %c0_28] : memref<1x64xf32, #tpu.memory_space<vmem>>, vector<1x64xf32>
      tpu.vector_store %arg10[%c0_27, %c0_28], %48 {strides = array<i32>} : memref<1x64xf32, #tpu.memory_space<vmem>>, vector<1x64xf32>,
      %50 = arith.mulf %0, %0 : vector<64x128xf32>
      %51 = arith.mulf %1, %1 : vector<6x128xf32>
      "tpu.trace_start"() <{level = 10 : i32, message = "nd,rd->nr"}> : () -> ()
      %cst_29 = arith.constant dense<0.000000e+00> : vector<64x6xf32>
      %52 = tpu.matmul %50, %51, %cst_29 {dimension_numbers = #tpu.dot_dimension_numbers<[1], [1], [0], [0], [0, 0, 1, 0], [], []>, precision = #tpu.contract_precision<fp32>} : vector<64x128xf32>, vector<6x128xf32>, vector<64x6xf32> -> vector<64x6xf32>
      "tpu.trace_stop"() : () -> ()
      %c0_30 = arith.constant 0 : index
      %c0_31 = arith.constant 0 : index
      %53 = vector.load %arg8[%c0_30, %c0_31] : memref<64x6xf32, #tpu.memory_space<vmem>>, vector<64x6xf32>
      tpu.vector_store %arg8[%c0_30, %c0_31], %52 {strides = array<i32>} : memref<64x6xf32, #tpu.memory_space<vmem>>, vector<64x6xf32>,
    } else {
    }
    %c64_i32 = arith.constant 64 : i32
    %10 = vector.broadcast %c64_i32 : i32 to vector<32x1xi32>
    %11 = arith.cmpi slt, %2, %10 : vector<32x1xi32>
    %12 = tpu.iota {dimensions = array<i32: 1>} : vector<32x64xi32>
    %13 = tpu.iota {dimensions = array<i32: 1>} : vector<32x6xi32>
    %14 = vector.broadcast %2 : vector<32x1xi32> to vector<32x64xi32>
    %15 = arith.cmpi eq, %12, %14 : vector<32x64xi32>
    %16 = arith.extui %15 : vector<32x64xi1> to vector<32x64xi32>
    %17 = arith.sitofp %16 : vector<32x64xi32> to vector<32x64xf32>
    %18 = vector.broadcast %3 : vector<32x1xi32> to vector<32x64xi32>
    %19 = arith.cmpi eq, %12, %18 : vector<32x64xi32>
    %20 = arith.extui %19 : vector<32x64xi1> to vector<32x64xi32>
    %21 = arith.sitofp %20 : vector<32x64xi32> to vector<32x64xf32>
    %22 = vector.broadcast %4 : vector<32x1xi32> to vector<32x6xi32>
    %23 = arith.cmpi eq, %13, %22 : vector<32x6xi32>
    %24 = arith.extui %23 : vector<32x6xi1> to vector<32x6xi32>
    %25 = arith.sitofp %24 : vector<32x6xi32> to vector<32x6xf32>
    %c0_11 = arith.constant 0 : index
    %c0_12 = arith.constant 0 : index
    %26 = vector.load %arg8[%c0_11, %c0_12] : memref<64x6xf32, #tpu.memory_space<vmem>>, vector<64x6xf32>
    %cst = arith.constant dense<0.000000e+00> : vector<32x6xf32>
    %27 = tpu.matmul %17, %26, %cst {dimension_numbers = #tpu.dot_dimension_numbers<[1], [0], [0], [1], [0, 0, 1, 1], [], []>, precision = #tpu.contract_precision<fp32>} : vector<32x64xf32>, vector<64x6xf32>, vector<32x6xf32> -> vector<32x6xf32>
    %cst_13 = arith.constant dense<0.000000e+00> : vector<32x6xf32>
    %28 = tpu.matmul %21, %26, %cst_13 {dimension_numbers = #tpu.dot_dimension_numbers<[1], [0], [0], [1], [0, 0, 1, 1], [], []>, precision = #tpu.contract_precision<fp32>} : vector<32x64xf32>, vector<64x6xf32>, vector<32x6xf32> -> vector<32x6xf32>
    %29 = arith.mulf %27, %28 : vector<32x6xf32>
    %30 = arith.mulf %29, %25 : vector<32x6xf32>
    %cst_14 = arith.constant dense<0.000000e+00> : vector<32xf32>
    %31 = vector.multi_reduction <add>, %30, %cst_14 [1] : vector<32x6xf32> to vector<32xf32>
    %32 = vector.shape_cast %31 : vector<32xf32> to vector<32x1xf32>
    %cst_15 = arith.constant -1.000000e+30 : f32
    %33 = vector.broadcast %cst_15 : f32 to vector<32x1xf32>
    %34 = arith.select %11, %32, %33 : vector<32x1xi1>, vector<32x1xf32>
    %c0_i32_16 = arith.constant 0 : i32
    %35 = arith.cmpi eq, %arg0, %c0_i32_16 : i32
    %36 = arith.extui %35 : i1 to i32
    %c0_i32_17 = arith.constant 0 : i32
    %37 = arith.cmpi ne, %36, %c0_i32_17 : i32
    scf.if %37 {
      %cst_20 = arith.constant -1.000000e+30 : f32
      %44 = vector.shape_cast %34 : vector<32x1xf32> to vector<32x1xf32>
      %45 = vector.broadcast %44 : vector<32x1xf32> to vector<32x64xf32>
      %46 = vector.broadcast %cst_20 : f32 to vector<32x64xf32>
      %47 = arith.select %15, %45, %46 : vector<32x64xi1>, vector<32x64xf32>
      %cst_21 = arith.constant dense<0xFF800000> : vector<64xf32>
      %48 = vector.multi_reduction <maximumf>, %47, %cst_21 [0] : vector<32x64xf32> to vector<64xf32>
      %49 = vector.shape_cast %48 : vector<64xf32> to vector<1x64xf32>
      %c0_22 = arith.constant 0 : index
      %c0_23 = arith.constant 0 : index
      %50 = vector.load %arg9[%c0_22, %c0_23] : memref<1x64xf32, #tpu.memory_space<vmem>>, vector<1x64xf32>
      %51 = arith.maximumf %50, %49 : vector<1x64xf32>
      %c0_24 = arith.constant 0 : index
      %c0_25 = arith.constant 0 : index
      %52 = vector.load %arg9[%c0_24, %c0_25] : memref<1x64xf32, #tpu.memory_space<vmem>>, vector<1x64xf32>
      tpu.vector_store %arg9[%c0_24, %c0_25], %51 {strides = array<i32>} : memref<1x64xf32, #tpu.memory_space<vmem>>, vector<1x64xf32>,
    } else {
    }
    %c1_i32 = arith.constant 1 : i32
    %38 = arith.cmpi eq, %arg0, %c1_i32 : i32
    %39 = arith.extui %38 : i1 to i32
    %c0_i32_18 = arith.constant 0 : i32
    %40 = arith.cmpi ne, %39, %c0_i32_18 : i32
    scf.if %40 {
      %c0_20 = arith.constant 0 : index
      %c0_21 = arith.constant 0 : index
      %44 = vector.load %arg9[%c0_20, %c0_21] : memref<1x64xf32, #tpu.memory_space<vmem>>, vector<1x64xf32>
      %cst_22 = arith.constant 0.000000e+00 : f32
      %45 = vector.shape_cast %44 : vector<1x64xf32> to vector<1x64xf32>
      %46 = vector.broadcast %45 : vector<1x64xf32> to vector<32x64xf32>
      %47 = vector.broadcast %cst_22 : f32 to vector<32x64xf32>
      %48 = arith.select %15, %46, %47 : vector<32x64xi1>, vector<32x64xf32>
      %cst_23 = arith.constant dense<0.000000e+00> : vector<32xf32>
      %49 = vector.multi_reduction <add>, %48, %cst_23 [1] : vector<32x64xf32> to vector<32xf32>
      %50 = vector.shape_cast %49 : vector<32xf32> to vector<32x1xf32>
      %51 = arith.subf %34, %50 : vector<32x1xf32>
      %52 = math.exp %51 : vector<32x1xf32>
      %c0_24 = arith.constant 0 : index
      %c0_25 = arith.constant 0 : index
      %53 = vector.load %arg10[%c0_24, %c0_25] : memref<1x64xf32, #tpu.memory_space<vmem>>, vector<1x64xf32>
      %cst_26 = arith.constant 0.000000e+00 : f32
      %54 = vector.shape_cast %52 : vector<32x1xf32> to vector<32x1xf32>
      %55 = vector.broadcast %54 : vector<32x1xf32> to vector<32x64xf32>
      %56 = vector.broadcast %cst_26 : f32 to vector<32x64xf32>
      %57 = arith.select %15, %55, %56 : vector<32x64xi1>, vector<32x64xf32>
      %cst_27 = arith.constant dense<0.000000e+00> : vector<64xf32>
      %58 = vector.multi_reduction <add>, %57, %cst_27 [0] : vector<32x64xf32> to vector<64xf32>
      %59 = vector.shape_cast %58 : vector<64xf32> to vector<1x64xf32>
      %60 = arith.addf %53, %59 : vector<1x64xf32>
      %c0_28 = arith.constant 0 : index
      %c0_29 = arith.constant 0 : index
      %61 = vector.load %arg10[%c0_28, %c0_29] : memref<1x64xf32, #tpu.memory_space<vmem>>, vector<1x64xf32>
      tpu.vector_store %arg10[%c0_28, %c0_29], %60 {strides = array<i32>} : memref<1x64xf32, #tpu.memory_space<vmem>>, vector<1x64xf32>,
    } else {
    }
    %c2_i32 = arith.constant 2 : i32
    %41 = arith.cmpi eq, %arg0, %c2_i32 : i32
    %42 = arith.extui %41 : i1 to i32
    %c0_i32_19 = arith.constant 0 : i32
    %43 = arith.cmpi ne, %42, %c0_i32_19 : i32
    scf.if %43 {
      %c0_20 = arith.constant 0 : index
      %c0_21 = arith.constant 0 : index
      %44 = vector.load %arg9[%c0_20, %c0_21] : memref<1x64xf32, #tpu.memory_space<vmem>>, vector<1x64xf32>
      %cst_22 = arith.constant 0.000000e+00 : f32
      %45 = vector.shape_cast %44 : vector<1x64xf32> to vector<1x64xf32>
      %46 = vector.broadcast %45 : vector<1x64xf32> to vector<32x64xf32>
      %47 = vector.broadcast %cst_22 : f32 to vector<32x64xf32>
      %48 = arith.select %15, %46, %47 : vector<32x64xi1>, vector<32x64xf32>
      %cst_23 = arith.constant dense<0.000000e+00> : vector<32xf32>
      %49 = vector.multi_reduction <add>, %48, %cst_23 [1] : vector<32x64xf32> to vector<32xf32>
      %50 = vector.shape_cast %49 : vector<32xf32> to vector<32x1xf32>
      %c0_24 = arith.constant 0 : index
      %c0_25 = arith.constant 0 : index
      %51 = vector.load %arg10[%c0_24, %c0_25] : memref<1x64xf32, #tpu.memory_space<vmem>>, vector<1x64xf32>
      %cst_26 = arith.constant 0.000000e+00 : f32
      %52 = vector.shape_cast %51 : vector<1x64xf32> to vector<1x64xf32>
      %53 = vector.broadcast %52 : vector<1x64xf32> to vector<32x64xf32>
      %54 = vector.broadcast %cst_26 : f32 to vector<32x64xf32>
      %55 = arith.select %15, %53, %54 : vector<32x64xi1>, vector<32x64xf32>
      %cst_27 = arith.constant dense<0.000000e+00> : vector<32xf32>
      %56 = vector.multi_reduction <add>, %55, %cst_27 [1] : vector<32x64xf32> to vector<32xf32>
      %57 = vector.shape_cast %56 : vector<32xf32> to vector<32x1xf32>
      %58 = arith.subf %34, %50 : vector<32x1xf32>
      %59 = math.exp %58 : vector<32x1xf32>
      %cst_28 = arith.constant 0.000000e+00 : f32
      %60 = vector.broadcast %cst_28 : f32 to vector<32x1xf32>
      %61 = arith.cmpf ogt, %57, %60 : vector<32x1xf32>
      %62 = arith.divf %59, %57 : vector<32x1xf32>
      %cst_29 = arith.constant 0.000000e+00 : f32
      %63 = vector.broadcast %cst_29 : f32 to vector<32x1xf32>
      %64 = arith.select %61, %62, %63 : vector<32x1xi1>, vector<32x1xf32>
      %cst_30 = arith.constant dense<0.000000e+00> : vector<32x128xf32>
      %65 = tpu.matmul %25, %1, %cst_30 {dimension_numbers = #tpu.dot_dimension_numbers<[1], [0], [0], [1], [0, 0, 1, 1], [], []>, precision = #tpu.contract_precision<fp32>} : vector<32x6xf32>, vector<6x128xf32>, vector<32x128xf32> -> vector<32x128xf32>
      %cst_31 = arith.constant dense<0.000000e+00> : vector<32x128xf32>
      %66 = tpu.matmul %21, %0, %cst_31 {dimension_numbers = #tpu.dot_dimension_numbers<[1], [0], [0], [1], [0, 0, 1, 1], [], []>} : vector<32x64xf32>, vector<64x128xf32>, vector<32x128xf32> -> vector<32x128xf32>
      %67 = vector.broadcast %64 : vector<32x1xf32> to vector<32x128xf32>
      %68 = arith.mulf %67, %66 : vector<32x128xf32>
      %69 = arith.mulf %68, %65 : vector<32x128xf32>
      %c0_32 = arith.constant 0 : index
      %c0_33 = arith.constant 0 : index
      %70 = vector.load %arg7[%c0_32, %c0_33] : memref<64x128xf32, #tpu.memory_space<vmem>>, vector<64x128xf32>
      "tpu.trace_start"() <{level = 10 : i32, message = "en,ed->nd"}> : () -> ()
      %cst_34 = arith.constant dense<0.000000e+00> : vector<64x128xf32>
      %71 = tpu.matmul %17, %69, %cst_34 {dimension_numbers = #tpu.dot_dimension_numbers<[0], [0], [1], [1], [0, 1, 1, 1], [], []>} : vector<32x64xf32>, vector<32x128xf32>, vector<64x128xf32> -> vector<64x128xf32>
      "tpu.trace_stop"() : () -> ()
      %72 = arith.addf %70, %71 : vector<64x128xf32>
      %c0_35 = arith.constant 0 : index
      %c0_36 = arith.constant 0 : index
      %73 = vector.load %arg7[%c0_35, %c0_36] : memref<64x128xf32, #tpu.memory_space<vmem>>, vector<64x128xf32>
      tpu.vector_store %arg7[%c0_35, %c0_36], %72 {strides = array<i32>} : memref<64x128xf32, #tpu.memory_space<vmem>>, vector<64x128xf32>,
    } else {
    }
    return
  }
  func.func @transform_0(%arg0: i32, %arg1: i32) -> (i32, i32) {
    %c0_i32 = arith.constant 0 : i32
    %c0_i32_0 = arith.constant 0 : i32
    %c0_i32_1 = arith.constant 0 : i32
    return %c0_i32, %c0_i32_0 : i32, i32
  }
  func.func @transform_1(%arg0: i32, %arg1: i32) -> (i32, i32) {
    %c0_i32 = arith.constant 0 : i32
    %c0_i32_0 = arith.constant 0 : i32
    %c0_i32_1 = arith.constant 0 : i32
    return %c0_i32, %c0_i32_0 : i32, i32
  }
  func.func @transform_2(%arg0: i32, %arg1: i32) -> (i32, i32) {
    %c0_i32 = arith.constant 0 : i32
    %c0_i32_0 = arith.constant 0 : i32
    return %arg1, %c0_i32 : i32, i32
  }
  func.func @transform_3(%arg0: i32, %arg1: i32) -> (i32, i32) {
    %c0_i32 = arith.constant 0 : i32
    %c0_i32_0 = arith.constant 0 : i32
    return %arg1, %c0_i32 : i32, i32
  }
  func.func @transform_4(%arg0: i32, %arg1: i32) -> (i32, i32) {
    %c0_i32 = arith.constant 0 : i32
    %c0_i32_0 = arith.constant 0 : i32
    return %arg1, %c0_i32 : i32, i32
  }
  func.func @transform_5(%arg0: i32, %arg1: i32) -> (i32, i32) {
    %c0_i32 = arith.constant 0 : i32
    %c0_i32_0 = arith.constant 0 : i32
    %c0_i32_1 = arith.constant 0 : i32
    return %c0_i32, %c0_i32_0 : i32, i32
  }
}

</mosaic_0001>

<llo_original>
// kernel: tpu_custom_call.1
$region0: #{tpu_custom_call.1}
  #allocation0 [shape = 'u32[]', space=smem, size = 0x4, offset = 0x4, fixed_abs, tag = 'smem constant byte address 0x4 - core index']
  #allocation1 [shape = 'u32[144,128]{1,0:T(1,128)}', space=vmem, size = 0x12000, scoped, tag = 'internal scratch']
  #allocation2 [shape = 'f32[64,6]{1,0:T(8,128)}', space=vmem, size = 0x8000, scoped, tag = 'scratch operand']
  #allocation3 [shape = 'f32[1,64]{1,0:T(1,128)}', space=vmem, size = 0x200, scoped, tag = 'scratch operand']
  #allocation4 [shape = 'f32[1,64]{1,0:T(1,128)}', space=vmem, size = 0x200, scoped, tag = 'scratch operand']
  %s0 = inlined_call_operand.vmem [shape: f32[64,128], index: 0, kind: input, shape index: {}]
  %s1 = inlined_call_operand.vmem [shape: f32[6,128], index: 1, kind: input, shape index: {}]
  %s2 = inlined_call_operand.vmem [shape: s32[160,1], index: 2, kind: input, shape index: {}]
  %s3 = inlined_call_operand.vmem [shape: s32[160,1], index: 3, kind: input, shape index: {}]
  %s4 = inlined_call_operand.vmem [shape: s32[160,1], index: 4, kind: input, shape index: {}]
  %s5 = inlined_call_operand.hbm [shape: f32[64,128], index: 5, kind: output, shape index: {}]
  %s6 = sld [smem:[#allocation0]]
  $region69: #{tpu_custom_call.1} parent=0
    _
  %s8 = ssub.s32 1, %s6
  %s9 = scalar_select 0, %s8, %s6
  $region1: #{tpu_custom_call.1} parent=0
    #allocation5 [shape = 'u8[32768]{0}', space=vmem, size = 0x8000, scoped, tag = 'output window, operand 0, single buffered']
    #allocation6 [shape = 's32[2]{0}', space=sflag, size = 0x8, scoped, tag = 'scoped memory for tpu_custom_call.1']
    %10 = vsyncpa [#allocation6], 0
    loop: start=0, step=1, limit=17
    $region2: #{tpu_custom_call.1} parent=1 // loop_pre_header
      _
    $region3: #{tpu_custom_call.1} parent=1 // loop_header
      %s12 = sphi 0, %s16
      %p13 = scmp.ge.s32.totalorder %s12, 17
      %s19 = sphi 0, %s31
      %s20 = sphi 0, %s27
      %s21 = sphi 0, %s19
      %s22 = sphi 0, %s20
      %s23 = sphi 0, %s21
      %s24 = sphi 0, %s22
      %s32 = sphi 0, %s32
      %s34 = sphi 0, %s32
      %s35 = sphi 0, %s34
      %s49 = sphi 0, %s35
      %s53 = sphi 0, %s53
      %s55 = sphi 0, %s53
      %s56 = sphi 0, %s55
      %s70 = sphi 0, %s56
      %s76 = sphi 0, %s78
      %s79 = sphi 0, %s76
      %s80 = sphi 0, %s79
      %s96 = sphi 0, %s80
      %s102 = sphi 0, %s104
      %s105 = sphi 0, %s102
      %s106 = sphi 0, %s105
      %s122 = sphi 0, %s106
      %s128 = sphi 0, %s130
      %s131 = sphi 0, %s128
      %s132 = sphi 0, %s131
      %s148 = sphi 0, %s132
      %s152 = sphi 0, %s152
      %s154 = sphi 0, %s152
      %s155 = sphi 0, %s154
      %s169 = sphi 0, %s155
    $region4: #{tpu_custom_call.1} parent=1 // loop_header_branch
      %15 = sbr.rel (%p13) target = $region8
    $region5: #{tpu_custom_call.1} parent=1 // loop_body
      %s17 = ssub.s32 %s12, 1
      %s18 = ssub.s32 %s12, 2
      %s25 = sadd.s32 1, %s20
      %p26 = scmp.ge.s32.totalorder %s25, 5
      %s27 = scalar_select %p26, 0, %s25
      %s28 = sadd.s32 1, %s19
      %s29 = scalar_select %p26, %s28, %s19
      %p30 = scmp.ge.s32.totalorder %s29, 3
      %s31 = scalar_select %p30, 0, %s29
      %s33 = sadd.s32 %s32, 1
      %p36 = scmp.eq.s32.totalorder %s12, 14
      %p37 = scmp.ne.s32.totalorder %s32, %s34
      %p38 = scmp.eq.s32.totalorder %s12, 0
      %p39 = por %p37, %p38
      %p40 = scmp.ne.s32.totalorder %s32, %s34
      %p41 = scmp.eq.s32.totalorder %s17, 14
      %p42 = por %p40, %p41
      %p43 = scmp.ne.s32.totalorder %s34, %s35
      %p44 = scmp.eq.s32.totalorder %s17, 0
      %p45 = por %p43, %p44
      %p46 = scmp.ne.s32.totalorder %s34, %s35
      %p47 = scmp.eq.s32.totalorder %s18, 14
      %p48 = por %p46, %p47
      %p50 = scmp.ne.s32.totalorder %s35, %s49
      %p51 = scmp.eq.s32.totalorder %s18, 0
      %p52 = por %p50, %p51
      %s54 = sadd.s32 %s53, 1
      %p57 = scmp.eq.s32.totalorder %s12, 14
      %p58 = scmp.ne.s32.totalorder %s53, %s55
      %p59 = scmp.eq.s32.totalorder %s12, 0
      %p60 = por %p58, %p59
      %p61 = scmp.ne.s32.totalorder %s53, %s55
      %p62 = scmp.eq.s32.totalorder %s17, 14
      %p63 = por %p61, %p62
      %p64 = scmp.ne.s32.totalorder %s55, %s56
      %p65 = scmp.eq.s32.totalorder %s17, 0
      %p66 = por %p64, %p65
      %p67 = scmp.ne.s32.totalorder %s55, %s56
      %p68 = scmp.eq.s32.totalorder %s18, 14
      %p69 = por %p67, %p68
      %p71 = scmp.ne.s32.totalorder %s56, %s70
      %p72 = scmp.eq.s32.totalorder %s18, 0
      %p73 = por %p71, %p72
      %s74 = ssub.s32 %s20, %s27
      %p75 = scmp.eq.s32.totalorder %s74, 0
      %s77 = sadd.s32 %s76, 1
      %s78 = scalar_select %p75, %s76, %s77
      %p81 = pneg %p75
      %p82 = scmp.eq.s32.totalorder %s12, 14
      %p83 = por %p81, %p82
      %p84 = scmp.ne.s32.totalorder %s76, %s79
      %p85 = scmp.eq.s32.totalorder %s12, 0
      %p86 = por %p84, %p85
      %p87 = scmp.ne.s32.totalorder %s76, %s79
      %p88 = scmp.eq.s32.totalorder %s17, 14
      %p89 = por %p87, %p88
      %p90 = scmp.ne.s32.totalorder %s79, %s80
      %p91 = scmp.eq.s32.totalorder %s17, 0
      %p92 = por %p90, %p91
      %p93 = scmp.ne.s32.totalorder %s79, %s80
      %p94 = scmp.eq.s32.totalorder %s18, 14
      %p95 = por %p93, %p94
      %p97 = scmp.ne.s32.totalorder %s80, %s96
      %p98 = scmp.eq.s32.totalorder %s18, 0
      %p99 = por %p97, %p98
      %s100 = ssub.s32 %s20, %s27
      %p101 = scmp.eq.s32.totalorder %s100, 0
      %s103 = sadd.s32 %s102, 1
      %s104 = scalar_select %p101, %s102, %s103
      %p107 = pneg %p101
      %p108 = scmp.eq.s32.totalorder %s12, 14
      %p109 = por %p107, %p108
      %p110 = scmp.ne.s32.totalorder %s102, %s105
      %p111 = scmp.eq.s32.totalorder %s12, 0
      %p112 = por %p110, %p111
      %p113 = scmp.ne.s32.totalorder %s102, %s105
      %p114 = scmp.eq.s32.totalorder %s17, 14
      %p115 = por %p113, %p114
      %p116 = scmp.ne.s32.totalorder %s105, %s106
      %p117 = scmp.eq.s32.totalorder %s17, 0
      %p118 = por %p116, %p117
      %p119 = scmp.ne.s32.totalorder %s105, %s106
      %p120 = scmp.eq.s32.totalorder %s18, 14
      %p121 = por %p119, %p120
      %p123 = scmp.ne.s32.totalorder %s106, %s122
      %p124 = scmp.eq.s32.totalorder %s18, 0
      %p125 = por %p123, %p124
      %s126 = ssub.s32 %s20, %s27
      %p127 = scmp.eq.s32.totalorder %s126, 0
      %s129 = sadd.s32 %s128, 1
      %s130 = scalar_select %p127, %s128, %s129
      %p133 = pneg %p127
      %p134 = scmp.eq.s32.totalorder %s12, 14
      %p135 = por %p133, %p134
      %p136 = scmp.ne.s32.totalorder %s128, %s131
      %p137 = scmp.eq.s32.totalorder %s12, 0
      %p138 = por %p136, %p137
      %p139 = scmp.ne.s32.totalorder %s128, %s131
      %p140 = scmp.eq.s32.totalorder %s17, 14
      %p141 = por %p139, %p140
      %p142 = scmp.ne.s32.totalorder %s131, %s132
      %p143 = scmp.eq.s32.totalorder %s17, 0
      %p144 = por %p142, %p143
      %p145 = scmp.ne.s32.totalorder %s131, %s132
      %p146 = scmp.eq.s32.totalorder %s18, 14
      %p147 = por %p145, %p146
      %p149 = scmp.ne.s32.totalorder %s132, %s148
      %p150 = scmp.eq.s32.totalorder %s18, 0
      %p151 = por %p149, %p150
      %s153 = sadd.s32 %s152, 1
      %p156 = scmp.eq.s32.totalorder %s12, 14
      %p157 = scmp.ne.s32.totalorder %s152, %s154
      %p158 = scmp.eq.s32.totalorder %s12, 0
      %p159 = por %p157, %p158
      %p160 = scmp.ne.s32.totalorder %s152, %s154
      %p161 = scmp.eq.s32.totalorder %s17, 14
      %p162 = por %p160, %p161
      %p163 = scmp.ne.s32.totalorder %s154, %s155
      %p164 = scmp.eq.s32.totalorder %s17, 0
      %p165 = por %p163, %p164
      %p166 = scmp.ne.s32.totalorder %s154, %s155
      %p167 = scmp.eq.s32.totalorder %s18, 14
      %p168 = por %p166, %p167
      %p170 = scmp.ne.s32.totalorder %s155, %s169
      %p171 = scmp.eq.s32.totalorder %s18, 0
      %p172 = por %p170, %p171
      %p173 = scmp.le.s32.totalorder 1, %s12
      %p174 = scmp.lt.s32.totalorder %s12, 16
      %p175 = pnand %p173, %p174
      %p176 = pneg %p175
      // Predicated region
      $region9: #{tpu_custom_call.1} parent=5 // pred_check
        _
      $region10: #{tpu_custom_call.1} parent=5 // pred_check_branch
        %178 = sbr.rel (%p175) target = $region12
      $region11: #{tpu_custom_call.1} parent=5 // pred_region
        %s179 = ssub.s32 %s12, 1
        // Predicated region
        $region13: #{tpu_custom_call.1} parent=11 // pred_check
          %p180 = pneg %p45
        $region14: #{tpu_custom_call.1} parent=11 // pred_check_branch
          %182 = sbr.rel (%p180) target = $region16
        $region15: #{tpu_custom_call.1} parent=11 // pred_region
          _
        $region16: #{tpu_custom_call.1} parent=11 // pred_fallthru
          _
        // Predicated region
        $region17: #{tpu_custom_call.1} parent=11 // pred_check
          %p183 = pneg %p66
        $region18: #{tpu_custom_call.1} parent=11 // pred_check_branch
          %185 = sbr.rel (%p183) target = $region20
        $region19: #{tpu_custom_call.1} parent=11 // pred_region
          _
        $region20: #{tpu_custom_call.1} parent=11 // pred_fallthru
          _
      $region12: #{tpu_custom_call.1} parent=5 // pred_fallthru
        _
      %p186 = scmp.lt.s32.totalorder %s12, 15
      // Predicated region
      $region21: #{tpu_custom_call.1} parent=5 // pred_check
        %p187 = pneg %p186
      $region22: #{tpu_custom_call.1} parent=5 // pred_check_branch
        %189 = sbr.rel (%p187) target = $region24
      $region23: #{tpu_custom_call.1} parent=5 // pred_region
        // Predicated region
        $region25: #{tpu_custom_call.1} parent=23 // pred_check
          %p190 = pneg %p86
        $region26: #{tpu_custom_call.1} parent=23 // pred_check_branch
          %192 = sbr.rel (%p190) target = $region28
        $region27: #{tpu_custom_call.1} parent=23 // pred_region
          %s193 = smul.u32 4, %s20
          %p194 = scmp.lt.s32.totalorder %s193, 19
          %s195 = scalar_select %p194, %s193, 19
          %s196 = smul.addr %s195, 8
          %s197 = scalar_lea.vmem %s2, %s196
          %s198 = smul.u32 4, %s20
        $region28: #{tpu_custom_call.1} parent=23 // pred_fallthru
          _
        // Predicated region
        $region29: #{tpu_custom_call.1} parent=23 // pred_check
          %p199 = pneg %p112
        $region30: #{tpu_custom_call.1} parent=23 // pred_check_branch
          %201 = sbr.rel (%p199) target = $region32
        $region31: #{tpu_custom_call.1} parent=23 // pred_region
          %s202 = smul.u32 4, %s20
          %p203 = scmp.lt.s32.totalorder %s202, 19
          %s204 = scalar_select %p203, %s202, 19
          %s205 = smul.addr %s204, 8
          %s206 = scalar_lea.vmem %s3, %s205
          %s207 = smul.u32 4, %s20
        $region32: #{tpu_custom_call.1} parent=23 // pred_fallthru
          _
        // Predicated region
        $region33: #{tpu_custom_call.1} parent=23 // pred_check
          %p208 = pneg %p138
        $region34: #{tpu_custom_call.1} parent=23 // pred_check_branch
          %210 = sbr.rel (%p208) target = $region36
        $region35: #{tpu_custom_call.1} parent=23 // pred_region
          %s211 = smul.u32 4, %s20
          %p212 = scmp.lt.s32.totalorder %s211, 19
          %s213 = scalar_select %p212, %s211, 19
          %s214 = smul.addr %s213, 8
          %s215 = scalar_lea.vmem %s4, %s214
          %s216 = smul.u32 4, %s20
        $region36: #{tpu_custom_call.1} parent=23 // pred_fallthru
          _
      $region24: #{tpu_custom_call.1} parent=5 // pred_fallthru
        _
      %p217 = scmp.le.s32.totalorder 1, %s12
      %p218 = scmp.lt.s32.totalorder %s12, 16
      %p219 = pnand %p217, %p218
      %p220 = pneg %p219
      // Predicated region
      $region37: #{tpu_custom_call.1} parent=5 // pred_check
        _
      $region38: #{tpu_custom_call.1} parent=5 // pred_check_branch
        %222 = sbr.rel (%p219) target = $region40
      $region39: #{tpu_custom_call.1} parent=5 // pred_region
        %s223 = ssub.s32 %s12, 1
        %p224 = pneg %p45
        %p225 = pneg %p42
        %p226 = pneg %p66
        %p227 = pneg %p63
        %s228 = smul.u32 4, %s22
        %p229 = scmp.lt.s32.totalorder %s228, 19
        %s230 = scalar_select %p229, %s228, 19
        %s231 = smul.addr %s230, 8
        %s232 = scalar_lea.vmem %s2, %s231
        %p233 = pneg %p92
        %p234 = pneg %p89
        %s235 = smul.u32 4, %s22
        %p236 = scmp.lt.s32.totalorder %s235, 19
        %s237 = scalar_select %p236, %s235, 19
        %s238 = smul.addr %s237, 8
        %s239 = scalar_lea.vmem %s3, %s238
        %p240 = pneg %p118
        %p241 = pneg %p115
        %s242 = smul.u32 4, %s22
        %p243 = scmp.lt.s32.totalorder %s242, 19
        %s244 = scalar_select %p243, %s242, 19
        %s245 = smul.addr %s244, 8
        %s246 = scalar_lea.vmem %s4, %s245
        %p247 = pneg %p144
        %p248 = pneg %p141
        %p249 = pneg %p165
        %p250 = pneg %p162
        %s251 = smul.u32 4, %s22
        %p252 = scmp.lt.s32.totalorder %s251, 19
        %s253 = scalar_select %p252, %s251, 19
        %s254 = smul.addr %s253, 8
        %s255 = scalar_lea.vmem %s2, %s254
        %s256 = smul.u32 4, %s22
        %s257 = smul.u32 4, %s22
        %p258 = scmp.lt.s32.totalorder %s257, 19
        %s259 = scalar_select %p258, %s257, 19
        %s260 = smul.addr %s259, 8
        %s261 = scalar_lea.vmem %s3, %s260
        %s262 = smul.u32 4, %s22
        %s263 = smul.u32 4, %s22
        %p264 = scmp.lt.s32.totalorder %s263, 19
        %s265 = scalar_select %p264, %s263, 19
        %s266 = smul.addr %s265, 8
        %s267 = scalar_lea.vmem %s4, %s266
        %s268 = smul.u32 4, %s22
        %v269 = vld [vmem:[%s0] sm:$0xff]
        %v270 = vld [vmem:[%s0 + $0x8] sm:$0xff]
        %v271 = vld [vmem:[%s0 + $0x10] sm:$0xff]
        %v272 = vld [vmem:[%s0 + $0x18] sm:$0xff]
        %v273 = vld [vmem:[%s0 + $0x20] sm:$0xff]
        %v274 = vld [vmem:[%s0 + $0x28] sm:$0xff]
        %v275 = vld [vmem:[%s0 + $0x30] sm:$0xff]
        %v276 = vld [vmem:[%s0 + $0x38] sm:$0xff]
        %v277 = vld [vmem:[%s1] sm:$0x3f]
        %v278 = vld [vmem:[%s255] sm:$0xff]
        %v279 = vld [vmem:[%s255 + $0x8] sm:$0xff]
        %v280 = vld [vmem:[%s255 + $0x10] sm:$0xff]
        %v281 = vld [vmem:[%s255 + $0x18] sm:$0xff]
        %v282 = vld [vmem:[%s261] sm:$0xff]
        %v283 = vld [vmem:[%s261 + $0x8] sm:$0xff]
        %v284 = vld [vmem:[%s261 + $0x10] sm:$0xff]
        %v285 = vld [vmem:[%s261 + $0x18] sm:$0xff]
        %v286 = vld [vmem:[%s267] sm:$0xff]
        %v287 = vld [vmem:[%s267 + $0x8] sm:$0xff]
        %v288 = vld [vmem:[%s267 + $0x10] sm:$0xff]
        %v289 = vld [vmem:[%s267 + $0x18] sm:$0xff]
        %p290 = scmp.eq.s32.totalorder %s21, 0
        %p291 = scmp.eq.s32.totalorder %s22, 0
        %p292 = pnand %p290, %p291
        %p293 = pneg %p292
        // Predicated region
        $region41: #{tpu_custom_call.1} parent=39 // pred_check
          _
        $region42: #{tpu_custom_call.1} parent=39 // pred_check_branch
          %295 = sbr.rel (%p292) target = $region44
        $region43: #{tpu_custom_call.1} parent=39 // pred_region
          %296 = vst [vmem:[#allocation5] sm:$0xff] 0.0
          %297 = vst [vmem:[#allocation5 + $0x8] sm:$0xff] 0.0
          %298 = vst [vmem:[#allocation5 + $0x10] sm:$0xff] 0.0
          %299 = vst [vmem:[#allocation5 + $0x18] sm:$0xff] 0.0
          %300 = vst [vmem:[#allocation5 + $0x20] sm:$0xff] 0.0
          %301 = vst [vmem:[#allocation5 + $0x28] sm:$0xff] 0.0
          %302 = vst [vmem:[#allocation5 + $0x30] sm:$0xff] 0.0
          %303 = vst [vmem:[#allocation5 + $0x38] sm:$0xff] 0.0
          %vm304 = vcmask 516096
          %305 = vst.msk [vmem:[#allocation3] sm:$0x1] %vm304, -1e+30
          %306 = vst.msk [vmem:[#allocation4] sm:$0x1] %vm304, 0.0
          %v307 = vmul.f32 %v269, %v269
          %v308 = vmul.f32 %v270, %v270
          %v309 = vmul.f32 %v271, %v271
          %v310 = vmul.f32 %v272, %v272
          %v311 = vmul.f32 %v273, %v273
          %v312 = vmul.f32 %v274, %v274
          %v313 = vmul.f32 %v275, %v275
          %v314 = vmul.f32 %v276, %v276
          %v315 = vmul.f32 %v277, %v277
          %316 = vmatprep.subr.mxu0 0.0
          %v317 = vand.u32 %v315, 4294901760
          %318 = vmatpush1.xpose.msra.mxu0 %v317
          %319 = vmatprep.subr.mxu0 0.0
          %320 = vmatpush1.xpose.msra.mxu0 0.0
          %321 = vmatprep.subr.mxu0 0.0
          %322 = vmatpush1.xpose.msra.mxu0 0.0
          %323 = vmatprep.subr.mxu0 0.0
          %324 = vmatpush1.xpose.msra.mxu0 0.0
          %325 = vmatprep.subr.mxu0 0.0
          %326 = vmatpush1.xpose.msra.mxu0 0.0
          %327 = vmatprep.subr.mxu0 0.0
          %328 = vmatpush1.xpose.msra.mxu0 0.0
          %329 = vmatprep.subr.mxu0 0.0
          %330 = vmatpush1.xpose.msra.mxu0 0.0
          %331 = vmatprep.subr.mxu0 0.0
          %332 = vmatpush1.xpose.msra.mxu0 0.0
          %333 = vmatprep.subr.mxu0 0.0
          %334 = vmatpush1.xpose.msra.mxu0 0.0
          %335 = vmatprep.subr.mxu0 0.0
          %336 = vmatpush1.xpose.msra.mxu0 0.0
          %337 = vmatprep.subr.mxu0 0.0
          %338 = vmatpush1.xpose.msra.mxu0 0.0
          %339 = vmatprep.subr.mxu0 0.0
          %340 = vmatpush1.xpose.msra.mxu0 0.0
          %341 = vmatprep.subr.mxu0 0.0
          %342 = vmatpush1.xpose.msra.mxu0 0.0
          %343 = vmatprep.subr.mxu0 0.0
          %344 = vmatpush1.xpose.msra.mxu0 0.0
          %345 = vmatprep.subr.mxu0 0.0
          %346 = vmatpush1.xpose.msra.mxu0 0.0
          %347 = vmatprep.subr.mxu0 0.0
          %348 = vmatpush1.xpose.msra.mxu0 0.0
          %349 = vmatprep.subr.mxu0 0.0
          %350 = vmatpush1.xpose.msra.mxu0 0.0
          %351 = vmatprep.subr.mxu0 0.0
          %352 = vmatpush1.xpose.msra.mxu0 0.0
          %353 = vmatprep.subr.mxu0 0.0
          %354 = vmatpush1.xpose.msra.mxu0 0.0
          %355 = vmatprep.subr.mxu0 0.0
          %356 = vmatpush1.xpose.msra.mxu0 0.0
          %357 = vmatprep.subr.mxu0 0.0
          %358 = vmatpush1.xpose.msra.mxu0 0.0
          %359 = vmatprep.subr.mxu0 0.0
          %360 = vmatpush1.xpose.msra.mxu0 0.0
          %361 = vmatprep.subr.mxu0 0.0
          %362 = vmatpush1.xpose.msra.mxu0 0.0
          %363 = vmatprep.subr.mxu0 0.0
          %364 = vmatpush1.xpose.msra.mxu0 0.0
          %365 = vmatprep.subr.mxu0 0.0
          %366 = vmatpush1.xpose.msra.mxu0 0.0
          %367 = vmatprep.subr.mxu0 0.0
          %368 = vmatpush1.xpose.msra.mxu0 0.0
          %369 = vmatprep.subr.mxu0 0.0
          %370 = vmatpush1.xpose.msra.mxu0 0.0
          %371 = vmatprep.subr.mxu0 0.0
          %372 = vmatpush1.xpose.msra.mxu0 0.0
          %373 = vmatprep.subr.mxu0 0.0
          %374 = vmatpush1.xpose.msra.mxu0 0.0
          %375 = vmatprep.subr.mxu0 0.0
          %376 = vmatpush1.xpose.msra.mxu0 0.0
          %377 = vmatprep.subr.mxu0 0.0
          %378 = vmatpush1.xpose.msra.mxu0 0.0
          %379 = vmatprep.subr.mxu0 0.0
          %380 = vmatpush1.xpose.msra.mxu0 0.0
          %381 = vmatprep.mubr.f32.mxu0 0.0
          %v382 = vand.u32 %v307, 4294901760
          %v383 = vsub.f32 %v307, %v382
          %v384 = vand.u32 %v383, 4294901760
          %v385 = vsub.f32 %v383, %v384
          %v386 = vand.u32 %v385, 4294901760
          %387 = vmatmul.mubr.f32.gmra.mrb[0].mxu0 %v386
          %v388 = vpop.f32.mrb[0].mxu0
          %v389 = vadd.f32 0.0, %v388
          %v390 = vpop.f32.mrb[0].mxu0
          %391 = vmatprep.mubr.f32.mxu0 0.0
          %v392 = vand.u32 %v308, 4294901760
          %v393 = vsub.f32 %v308, %v392
          %v394 = vand.u32 %v393, 4294901760
          %v395 = vsub.f32 %v393, %v394
          %v396 = vand.u32 %v395, 4294901760
          %397 = vmatmul.mubr.f32.gmra.mrb[0].mxu0 %v396
          %v398 = vpop.f32.mrb[0].mxu0
          %v399 = vadd.f32 0.0, %v398
          %v400 = vpop.f32.mrb[0].mxu0
          %401 = vmatprep.mubr.f32.mxu0 0.0
          %v402 = vand.u32 %v309, 4294901760
          %v403 = vsub.f32 %v309, %v402
          %v404 = vand.u32 %v403, 4294901760
          %v405 = vsub.f32 %v403, %v404
          %v406 = vand.u32 %v405, 4294901760
          %407 = vmatmul.mubr.f32.gmra.mrb[0].mxu0 %v406
          %v408 = vpop.f32.mrb[0].mxu0
          %v409 = vadd.f32 0.0, %v408
          %v410 = vpop.f32.mrb[0].mxu0
          %411 = vmatprep.mubr.f32.mxu0 0.0
          %v412 = vand.u32 %v310, 4294901760
          %v413 = vsub.f32 %v310, %v412
          %v414 = vand.u32 %v413, 4294901760
          %v415 = vsub.f32 %v413, %v414
          %v416 = vand.u32 %v415, 4294901760
          %417 = vmatmul.mubr.f32.gmra.mrb[0].mxu0 %v416
          %v418 = vpop.f32.mrb[0].mxu0
          %v419 = vadd.f32 0.0, %v418
          %v420 = vpop.f32.mrb[0].mxu0
          %421 = vmatprep.mubr.f32.mxu0 0.0
          %v422 = vand.u32 %v311, 4294901760
          %v423 = vsub.f32 %v311, %v422
          %v424 = vand.u32 %v423, 4294901760
          %v425 = vsub.f32 %v423, %v424
          %v426 = vand.u32 %v425, 4294901760
          %427 = vmatmul.mubr.f32.gmra.mrb[0].mxu0 %v426
          %v428 = vpop.f32.mrb[0].mxu0
          %v429 = vadd.f32 0.0, %v428
          %v430 = vpop.f32.mrb[0].mxu0
          %431 = vmatprep.mubr.f32.mxu0 0.0
          %v432 = vand.u32 %v312, 4294901760
          %v433 = vsub.f32 %v312, %v432
          %v434 = vand.u32 %v433, 4294901760
          %v435 = vsub.f32 %v433, %v434
          %v436 = vand.u32 %v435, 4294901760
          %437 = vmatmul.mubr.f32.gmra.mrb[0].mxu0 %v436
          %v438 = vpop.f32.mrb[0].mxu0
          %v439 = vadd.f32 0.0, %v438
          %v440 = vpop.f32.mrb[0].mxu0
          %441 = vmatprep.mubr.f32.mxu0 0.0
          %v442 = vand.u32 %v313, 4294901760
          %v443 = vsub.f32 %v313, %v442
          %v444 = vand.u32 %v443, 4294901760
          %v445 = vsub.f32 %v443, %v444
          %v446 = vand.u32 %v445, 4294901760
          %447 = vmatmul.mubr.f32.gmra.mrb[0].mxu0 %v446
          %v448 = vpop.f32.mrb[0].mxu0
          %v449 = vadd.f32 0.0, %v448
          %v450 = vpop.f32.mrb[0].mxu0
          %451 = vmatprep.mubr.f32.mxu0 0.0
          %v452 = vand.u32 %v314, 4294901760
          %v453 = vsub.f32 %v314, %v452
          %v454 = vand.u32 %v453, 4294901760
          %v455 = vsub.f32 %v453, %v454
          %v456 = vand.u32 %v455, 4294901760
          %457 = vmatmul.mubr.f32.gmra.mrb[0].mxu0 %v456
          %v458 = vpop.f32.mrb[0].mxu0
          %v459 = vadd.f32 0.0, %v458
          %v460 = vpop.f32.mrb[0].mxu0
          %461 = vdwg.mxu0
          %462 = vmatprep.subr.mxu0 0.0
          %v463 = vand.u32 %v315, 4294901760
          %v464 = vsub.f32 %v315, %v463
          %v465 = vand.u32 %v464, 4294901760
          %v466 = vsub.f32 %v464, %v465
          %v467 = vand.u32 %v466, 4294901760
          %468 = vmatpush1.xpose.msra.mxu0 %v467
          %469 = vmatprep.subr.mxu0 0.0
          %470 = vmatpush1.xpose.msra.mxu0 0.0
          %471 = vmatprep.subr.mxu0 0.0
          %472 = vmatpush1.xpose.msra.mxu0 0.0
          %473 = vmatprep.subr.mxu0 0.0
          %474 = vmatpush1.xpose.msra.mxu0 0.0
          %475 = vmatprep.subr.mxu0 0.0
          %476 = vmatpush1.xpose.msra.mxu0 0.0
          %477 = vmatprep.subr.mxu0 0.0
          %478 = vmatpush1.xpose.msra.mxu0 0.0
          %479 = vmatprep.subr.mxu0 0.0
          %480 = vmatpush1.xpose.msra.mxu0 0.0
          %481 = vmatprep.subr.mxu0 0.0
          %482 = vmatpush1.xpose.msra.mxu0 0.0
          %483 = vmatprep.subr.mxu0 0.0
          %484 = vmatpush1.xpose.msra.mxu0 0.0
          %485 = vmatprep.subr.mxu0 0.0
          %486 = vmatpush1.xpose.msra.mxu0 0.0
          %487 = vmatprep.subr.mxu0 0.0
          %488 = vmatpush1.xpose.msra.mxu0 0.0
          %489 = vmatprep.subr.mxu0 0.0
          %490 = vmatpush1.xpose.msra.mxu0 0.0
          %491 = vmatprep.subr.mxu0 0.0
          %492 = vmatpush1.xpose.msra.mxu0 0.0
          %493 = vmatprep.subr.mxu0 0.0
          %494 = vmatpush1.xpose.msra.mxu0 0.0
          %495 = vmatprep.subr.mxu0 0.0
          %496 = vmatpush1.xpose.msra.mxu0 0.0
          %497 = vmatprep.subr.mxu0 0.0
          %498 = vmatpush1.xpose.msra.mxu0 0.0
          %499 = vmatprep.subr.mxu0 0.0
          %500 = vmatpush1.xpose.msra.mxu0 0.0
          %501 = vmatprep.subr.mxu0 0.0
          %502 = vmatpush1.xpose.msra.mxu0 0.0
          %503 = vmatprep.subr.mxu0 0.0
          %504 = vmatpush1.xpose.msra.mxu0 0.0
          %505 = vmatprep.subr.mxu0 0.0
          %506 = vmatpush1.xpose.msra.mxu0 0.0
          %507 = vmatprep.subr.mxu0 0.0
          %508 = vmatpush1.xpose.msra.mxu0 0.0
          %509 = vmatprep.subr.mxu0 0.0
          %510 = vmatpush1.xpose.msra.mxu0 0.0
          %511 = vmatprep.subr.mxu0 0.0
          %512 = vmatpush1.xpose.msra.mxu0 0.0
          %513 = vmatprep.subr.mxu0 0.0
          %514 = vmatpush1.xpose.msra.mxu0 0.0
          %515 = vmatprep.subr.mxu0 0.0
          %516 = vmatpush1.xpose.msra.mxu0 0.0
          %517 = vmatprep.subr.mxu0 0.0
          %518 = vmatpush1.xpose.msra.mxu0 0.0
          %519 = vmatprep.subr.mxu0 0.0
          %520 = vmatpush1.xpose.msra.mxu0 0.0
          %521 = vmatprep.subr.mxu0 0.0
          %522 = vmatpush1.xpose.msra.mxu0 0.0
          %523 = vmatprep.subr.mxu0 0.0
          %524 = vmatpush1.xpose.msra.mxu0 0.0
          %525 = vmatprep.subr.mxu0 0.0
          %526 = vmatpush1.xpose.msra.mxu0 0.0
          %527 = vmatprep.subr.mxu0 0.0
          %528 = vmatpush1.xpose.msra.mxu0 0.0
          %529 = vmatprep.subr.mxu0 0.0
          %530 = vmatpush1.xpose.msra.mxu0 0.0
          %531 = vmatprep.mubr.f32.mxu0 0.0
          %v532 = vand.u32 %v307, 4294901760
          %533 = vmatmul.mubr.f32.gmra.mrb[0].mxu0 %v532
          %v534 = vpop.f32.mrb[0].mxu0
          %v535 = vadd.f32 %v389, %v534
          %v536 = vpop.f32.mrb[0].mxu0
          %537 = vmatprep.mubr.f32.mxu0 0.0
          %v538 = vand.u32 %v308, 4294901760
          %539 = vmatmul.mubr.f32.gmra.mrb[0].mxu0 %v538
          %v540 = vpop.f32.mrb[0].mxu0
          %v541 = vadd.f32 %v399, %v540
          %v542 = vpop.f32.mrb[0].mxu0
          %543 = vmatprep.mubr.f32.mxu0 0.0
          %v544 = vand.u32 %v309, 4294901760
          %545 = vmatmul.mubr.f32.gmra.mrb[0].mxu0 %v544
          %v546 = vpop.f32.mrb[0].mxu0
          %v547 = vadd.f32 %v409, %v546
          %v548 = vpop.f32.mrb[0].mxu0
          %549 = vmatprep.mubr.f32.mxu0 0.0
          %v550 = vand.u32 %v310, 4294901760
          %551 = vmatmul.mubr.f32.gmra.mrb[0].mxu0 %v550
          %v552 = vpop.f32.mrb[0].mxu0
          %v553 = vadd.f32 %v419, %v552
          %v554 = vpop.f32.mrb[0].mxu0
          %555 = vmatprep.mubr.f32.mxu0 0.0
          %v556 = vand.u32 %v311, 4294901760
          %557 = vmatmul.mubr.f32.gmra.mrb[0].mxu0 %v556
          %v558 = vpop.f32.mrb[0].mxu0
          %v559 = vadd.f32 %v429, %v558
          %v560 = vpop.f32.mrb[0].mxu0
          %561 = vmatprep.mubr.f32.mxu0 0.0
          %v562 = vand.u32 %v312, 4294901760
          %563 = vmatmul.mubr.f32.gmra.mrb[0].mxu0 %v562
          %v564 = vpop.f32.mrb[0].mxu0
          %v565 = vadd.f32 %v439, %v564
          %v566 = vpop.f32.mrb[0].mxu0
          %567 = vmatprep.mubr.f32.mxu0 0.0
          %v568 = vand.u32 %v313, 4294901760
          %569 = vmatmul.mubr.f32.gmra.mrb[0].mxu0 %v568
          %v570 = vpop.f32.mrb[0].mxu0
          %v571 = vadd.f32 %v449, %v570
          %v572 = vpop.f32.mrb[0].mxu0
          %573 = vmatprep.mubr.f32.mxu0 0.0
          %v574 = vand.u32 %v314, 4294901760
          %575 = vmatmul.mubr.f32.gmra.mrb[0].mxu0 %v574
          %v576 = vpop.f32.mrb[0].mxu0
          %v577 = vadd.f32 %v459, %v576
          %v578 = vpop.f32.mrb[0].mxu0
          %579 = vdwg.mxu0
          %580 = vmatprep.subr.mxu0 0.0
          %v581 = vand.u32 %v315, 4294901760
          %v582 = vsub.f32 %v315, %v581
          %583 = vmatpush1.xpose.msra.mxu0 %v582
          %584 = vmatprep.subr.mxu0 0.0
          %585 = vmatpush1.xpose.msra.mxu0 0.0
          %586 = vmatprep.subr.mxu0 0.0
          %587 = vmatpush1.xpose.msra.mxu0 0.0
          %588 = vmatprep.subr.mxu0 0.0
          %589 = vmatpush1.xpose.msra.mxu0 0.0
          %590 = vmatprep.subr.mxu0 0.0
          %591 = vmatpush1.xpose.msra.mxu0 0.0
          %592 = vmatprep.subr.mxu0 0.0
          %593 = vmatpush1.xpose.msra.mxu0 0.0
          %594 = vmatprep.subr.mxu0 0.0
          %595 = vmatpush1.xpose.msra.mxu0 0.0
          %596 = vmatprep.subr.mxu0 0.0
          %597 = vmatpush1.xpose.msra.mxu0 0.0
          %598 = vmatprep.subr.mxu0 0.0
          %599 = vmatpush1.xpose.msra.mxu0 0.0
          %600 = vmatprep.subr.mxu0 0.0
          %601 = vmatpush1.xpose.msra.mxu0 0.0
          %602 = vmatprep.subr.mxu0 0.0
          %603 = vmatpush1.xpose.msra.mxu0 0.0
          %604 = vmatprep.subr.mxu0 0.0
          %605 = vmatpush1.xpose.msra.mxu0 0.0
          %606 = vmatprep.subr.mxu0 0.0
          %607 = vmatpush1.xpose.msra.mxu0 0.0
          %608 = vmatprep.subr.mxu0 0.0
          %609 = vmatpush1.xpose.msra.mxu0 0.0
          %610 = vmatprep.subr.mxu0 0.0
          %611 = vmatpush1.xpose.msra.mxu0 0.0
          %612 = vmatprep.subr.mxu0 0.0
          %613 = vmatpush1.xpose.msra.mxu0 0.0
          %614 = vmatprep.subr.mxu0 0.0
          %615 = vmatpush1.xpose.msra.mxu0 0.0
          %616 = vmatprep.subr.mxu0 0.0
          %617 = vmatpush1.xpose.msra.mxu0 0.0
          %618 = vmatprep.subr.mxu0 0.0
          %619 = vmatpush1.xpose.msra.mxu0 0.0
          %620 = vmatprep.subr.mxu0 0.0
          %621 = vmatpush1.xpose.msra.mxu0 0.0
          %622 = vmatprep.subr.mxu0 0.0
          %623 = vmatpush1.xpose.msra.mxu0 0.0
          %624 = vmatprep.subr.mxu0 0.0
          %625 = vmatpush1.xpose.msra.mxu0 0.0
          %626 = vmatprep.subr.mxu0 0.0
          %627 = vmatpush1.xpose.msra.mxu0 0.0
          %628 = vmatprep.subr.mxu0 0.0
          %629 = vmatpush1.xpose.msra.mxu0 0.0
          %630 = vmatprep.subr.mxu0 0.0
          %631 = vmatpush1.xpose.msra.mxu0 0.0
          %632 = vmatprep.subr.mxu0 0.0
          %633 = vmatpush1.xpose.msra.mxu0 0.0
          %634 = vmatprep.subr.mxu0 0.0
          %635 = vmatpush1.xpose.msra.mxu0 0.0
          %636 = vmatprep.subr.mxu0 0.0
          %637 = vmatpush1.xpose.msra.mxu0 0.0
          %638 = vmatprep.subr.mxu0 0.0
          %639 = vmatpush1.xpose.msra.mxu0 0.0
          %640 = vmatprep.subr.mxu0 0.0
          %641 = vmatpush1.xpose.msra.mxu0 0.0
          %642 = vmatprep.subr.mxu0 0.0
          %643 = vmatpush1.xpose.msra.mxu0 0.0
          %644 = vmatprep.subr.mxu0 0.0
          %645 = vmatpush1.xpose.msra.mxu0 0.0
          %646 = vmatprep.mubr.f32.mxu0 0.0
          %v647 = vand.u32 %v307, 4294901760
          %v648 = vsub.f32 %v307, %v647
          %649 = vmatmul.mubr.f32.gmra.mrb[0].mxu0 %v648
          %v650 = vpop.f32.mrb[0].mxu0
          %v651 = vadd.f32 %v535, %v650
          %v652 = vpop.f32.mrb[0].mxu0
          %653 = vmatprep.mubr.f32.mxu0 0.0
          %v654 = vand.u32 %v308, 4294901760
          %v655 = vsub.f32 %v308, %v654
          %656 = vmatmul.mubr.f32.gmra.mrb[0].mxu0 %v655
          %v657 = vpop.f32.mrb[0].mxu0
          %v658 = vadd.f32 %v541, %v657
          %v659 = vpop.f32.mrb[0].mxu0
          %660 = vmatprep.mubr.f32.mxu0 0.0
          %v661 = vand.u32 %v309, 4294901760
          %v662 = vsub.f32 %v309, %v661
          %663 = vmatmul.mubr.f32.gmra.mrb[0].mxu0 %v662
          %v664 = vpop.f32.mrb[0].mxu0
          %v665 = vadd.f32 %v547, %v664
          %v666 = vpop.f32.mrb[0].mxu0
          %667 = vmatprep.mubr.f32.mxu0 0.0
          %v668 = vand.u32 %v310, 4294901760
          %v669 = vsub.f32 %v310, %v668
          %670 = vmatmul.mubr.f32.gmra.mrb[0].mxu0 %v669
          %v671 = vpop.f32.mrb[0].mxu0
          %v672 = vadd.f32 %v553, %v671
          %v673 = vpop.f32.mrb[0].mxu0
          %674 = vmatprep.mubr.f32.mxu0 0.0
          %v675 = vand.u32 %v311, 4294901760
          %v676 = vsub.f32 %v311, %v675
          %677 = vmatmul.mubr.f32.gmra.mrb[0].mxu0 %v676
          %v678 = vpop.f32.mrb[0].mxu0
          %v679 = vadd.f32 %v559, %v678
          %v680 = vpop.f32.mrb[0].mxu0
          %681 = vmatprep.mubr.f32.mxu0 0.0
          %v682 = vand.u32 %v312, 4294901760
          %v683 = vsub.f32 %v312, %v682
          %684 = vmatmul.mubr.f32.gmra.mrb[0].mxu0 %v683
          %v685 = vpop.f32.mrb[0].mxu0
          %v686 = vadd.f32 %v565, %v685
          %v687 = vpop.f32.mrb[0].mxu0
          %688 = vmatprep.mubr.f32.mxu0 0.0
          %v689 = vand.u32 %v313, 4294901760
          %v690 = vsub.f32 %v313, %v689
          %691 = vmatmul.mubr.f32.gmra.mrb[0].mxu0 %v690
          %v692 = vpop.f32.mrb[0].mxu0
          %v693 = vadd.f32 %v571, %v692
          %v694 = vpop.f32.mrb[0].mxu0
          %695 = vmatprep.mubr.f32.mxu0 0.0
          %v696 = vand.u32 %v314, 4294901760
          %v697 = vsub.f32 %v314, %v696
          %698 = vmatmul.mubr.f32.gmra.mrb[0].mxu0 %v697
          %v699 = vpop.f32.mrb[0].mxu0
          %v700 = vadd.f32 %v577, %v699
          %v701 = vpop.f32.mrb[0].mxu0
          %702 = vdwg.mxu0
          %703 = vmatprep.subr.mxu0 0.0
          %v704 = vand.u32 %v315, 4294901760
          %705 = vmatpush1.xpose.msra.mxu0 %v704
          %706 = vmatprep.subr.mxu0 0.0
          %707 = vmatpush1.xpose.msra.mxu0 0.0
          %708 = vmatprep.subr.mxu0 0.0
          %709 = vmatpush1.xpose.msra.mxu0 0.0
          %710 = vmatprep.subr.mxu0 0.0
          %711 = vmatpush1.xpose.msra.mxu0 0.0
          %712 = vmatprep.subr.mxu0 0.0
          %713 = vmatpush1.xpose.msra.mxu0 0.0
          %714 = vmatprep.subr.mxu0 0.0
          %715 = vmatpush1.xpose.msra.mxu0 0.0
          %716 = vmatprep.subr.mxu0 0.0
          %717 = vmatpush1.xpose.msra.mxu0 0.0
          %718 = vmatprep.subr.mxu0 0.0
          %719 = vmatpush1.xpose.msra.mxu0 0.0
          %720 = vmatprep.subr.mxu0 0.0
          %721 = vmatpush1.xpose.msra.mxu0 0.0
          %722 = vmatprep.subr.mxu0 0.0
          %723 = vmatpush1.xpose.msra.mxu0 0.0
          %724 = vmatprep.subr.mxu0 0.0
          %725 = vmatpush1.xpose.msra.mxu0 0.0
          %726 = vmatprep.subr.mxu0 0.0
          %727 = vmatpush1.xpose.msra.mxu0 0.0
          %728 = vmatprep.subr.mxu0 0.0
          %729 = vmatpush1.xpose.msra.mxu0 0.0
          %730 = vmatprep.subr.mxu0 0.0
          %731 = vmatpush1.xpose.msra.mxu0 0.0
          %732 = vmatprep.subr.mxu0 0.0
          %733 = vmatpush1.xpose.msra.mxu0 0.0
          %734 = vmatprep.subr.mxu0 0.0
          %735 = vmatpush1.xpose.msra.mxu0 0.0
          %736 = vmatprep.subr.mxu0 0.0
          %737 = vmatpush1.xpose.msra.mxu0 0.0
          %738 = vmatprep.subr.mxu0 0.0
          %739 = vmatpush1.xpose.msra.mxu0 0.0
          %740 = vmatprep.subr.mxu0 0.0
          %741 = vmatpush1.xpose.msra.mxu0 0.0
          %742 = vmatprep.subr.mxu0 0.0
          %743 = vmatpush1.xpose.msra.mxu0 0.0
          %744 = vmatprep.subr.mxu0 0.0
          %745 = vmatpush1.xpose.msra.mxu0 0.0
          %746 = vmatprep.subr.mxu0 0.0
          %747 = vmatpush1.xpose.msra.mxu0 0.0
          %748 = vmatprep.subr.mxu0 0.0
          %749 = vmatpush1.xpose.msra.mxu0 0.0
          %750 = vmatprep.subr.mxu0 0.0
          %751 = vmatpush1.xpose.msra.mxu0 0.0
          %752 = vmatprep.subr.mxu0 0.0
          %753 = vmatpush1.xpose.msra.mxu0 0.0
          %754 = vmatprep.subr.mxu0 0.0
          %755 = vmatpush1.xpose.msra.mxu0 0.0
          %756 = vmatprep.subr.mxu0 0.0
          %757 = vmatpush1.xpose.msra.mxu0 0.0
          %758 = vmatprep.subr.mxu0 0.0
          %759 = vmatpush1.xpose.msra.mxu0 0.0
          %760 = vmatprep.subr.mxu0 0.0
          %761 = vmatpush1.xpose.msra.mxu0 0.0
          %762 = vmatprep.subr.mxu0 0.0
          %763 = vmatpush1.xpose.msra.mxu0 0.0
          %764 = vmatprep.subr.mxu0 0.0
          %765 = vmatpush1.xpose.msra.mxu0 0.0
          %766 = vmatprep.subr.mxu0 0.0
          %767 = vmatpush1.xpose.msra.mxu0 0.0
          %768 = vmatprep.mubr.f32.mxu0 0.0
          %v769 = vand.u32 %v307, 4294901760
          %v770 = vsub.f32 %v307, %v769
          %v771 = vand.u32 %v770, 4294901760
          %772 = vmatmul.mubr.f32.gmra.mrb[0].mxu0 %v771
          %v773 = vpop.f32.mrb[0].mxu0
          %v774 = vadd.f32 %v651, %v773
          %v775 = vpop.f32.mrb[0].mxu0
          %776 = vmatprep.mubr.f32.mxu0 0.0
          %v777 = vand.u32 %v308, 4294901760
          %v778 = vsub.f32 %v308, %v777
          %v779 = vand.u32 %v778, 4294901760
          %780 = vmatmul.mubr.f32.gmra.mrb[0].mxu0 %v779
          %v781 = vpop.f32.mrb[0].mxu0
          %v782 = vadd.f32 %v658, %v781
          %v783 = vpop.f32.mrb[0].mxu0
          %784 = vmatprep.mubr.f32.mxu0 0.0
          %v785 = vand.u32 %v309, 4294901760
          %v786 = vsub.f32 %v309, %v785
          %v787 = vand.u32 %v786, 4294901760
          %788 = vmatmul.mubr.f32.gmra.mrb[0].mxu0 %v787
          %v789 = vpop.f32.mrb[0].mxu0
          %v790 = vadd.f32 %v665, %v789
          %v791 = vpop.f32.mrb[0].mxu0
          %792 = vmatprep.mubr.f32.mxu0 0.0
          %v793 = vand.u32 %v310, 4294901760
          %v794 = vsub.f32 %v310, %v793
          %v795 = vand.u32 %v794, 4294901760
          %796 = vmatmul.mubr.f32.gmra.mrb[0].mxu0 %v795
          %v797 = vpop.f32.mrb[0].mxu0
          %v798 = vadd.f32 %v672, %v797
          %v799 = vpop.f32.mrb[0].mxu0
          %800 = vmatprep.mubr.f32.mxu0 0.0
          %v801 = vand.u32 %v311, 4294901760
          %v802 = vsub.f32 %v311, %v801
          %v803 = vand.u32 %v802, 4294901760
          %804 = vmatmul.mubr.f32.gmra.mrb[0].mxu0 %v803
          %v805 = vpop.f32.mrb[0].mxu0
          %v806 = vadd.f32 %v679, %v805
          %v807 = vpop.f32.mrb[0].mxu0
          %808 = vmatprep.mubr.f32.mxu0 0.0
          %v809 = vand.u32 %v312, 4294901760
          %v810 = vsub.f32 %v312, %v809
          %v811 = vand.u32 %v810, 4294901760
          %812 = vmatmul.mubr.f32.gmra.mrb[0].mxu0 %v811
          %v813 = vpop.f32.mrb[0].mxu0
          %v814 = vadd.f32 %v686, %v813
          %v815 = vpop.f32.mrb[0].mxu0
          %816 = vmatprep.mubr.f32.mxu0 0.0
          %v817 = vand.u32 %v313, 4294901760
          %v818 = vsub.f32 %v313, %v817
          %v819 = vand.u32 %v818, 4294901760
          %820 = vmatmul.mubr.f32.gmra.mrb[0].mxu0 %v819
          %v821 = vpop.f32.mrb[0].mxu0
          %v822 = vadd.f32 %v693, %v821
          %v823 = vpop.f32.mrb[0].mxu0
          %824 = vmatprep.mubr.f32.mxu0 0.0
          %v825 = vand.u32 %v314, 4294901760
          %v826 = vsub.f32 %v314, %v825
          %v827 = vand.u32 %v826, 4294901760
          %828 = vmatmul.mubr.f32.gmra.mrb[0].mxu0 %v827
          %v829 = vpop.f32.mrb[0].mxu0
          %v830 = vadd.f32 %v700, %v829
          %v831 = vpop.f32.mrb[0].mxu0
          %832 = vdwg.mxu0
          %833 = vmatprep.subr.mxu0 0.0
          %v834 = vand.u32 %v315, 4294901760
          %v835 = vsub.f32 %v315, %v834
          %v836 = vand.u32 %v835, 4294901760
          %837 = vmatpush1.xpose.msra.mxu0 %v836
          %838 = vmatprep.subr.mxu0 0.0
          %839 = vmatpush1.xpose.msra.mxu0 0.0
          %840 = vmatprep.subr.mxu0 0.0
          %841 = vmatpush1.xpose.msra.mxu0 0.0
          %842 = vmatprep.subr.mxu0 0.0
          %843 = vmatpush1.xpose.msra.mxu0 0.0
          %844 = vmatprep.subr.mxu0 0.0
          %845 = vmatpush1.xpose.msra.mxu0 0.0
          %846 = vmatprep.subr.mxu0 0.0
          %847 = vmatpush1.xpose.msra.mxu0 0.0
          %848 = vmatprep.subr.mxu0 0.0
          %849 = vmatpush1.xpose.msra.mxu0 0.0
          %850 = vmatprep.subr.mxu0 0.0
          %851 = vmatpush1.xpose.msra.mxu0 0.0
          %852 = vmatprep.subr.mxu0 0.0
          %853 = vmatpush1.xpose.msra.mxu0 0.0
          %854 = vmatprep.subr.mxu0 0.0
          %855 = vmatpush1.xpose.msra.mxu0 0.0
          %856 = vmatprep.subr.mxu0 0.0
          %857 = vmatpush1.xpose.msra.mxu0 0.0
          %858 = vmatprep.subr.mxu0 0.0
          %859 = vmatpush1.xpose.msra.mxu0 0.0
          %860 = vmatprep.subr.mxu0 0.0
          %861 = vmatpush1.xpose.msra.mxu0 0.0
          %862 = vmatprep.subr.mxu0 0.0
          %863 = vmatpush1.xpose.msra.mxu0 0.0
          %864 = vmatprep.subr.mxu0 0.0
          %865 = vmatpush1.xpose.msra.mxu0 0.0
          %866 = vmatprep.subr.mxu0 0.0
          %867 = vmatpush1.xpose.msra.mxu0 0.0
          %868 = vmatprep.subr.mxu0 0.0
          %869 = vmatpush1.xpose.msra.mxu0 0.0
          %870 = vmatprep.subr.mxu0 0.0
          %871 = vmatpush1.xpose.msra.mxu0 0.0
          %872 = vmatprep.subr.mxu0 0.0
          %873 = vmatpush1.xpose.msra.mxu0 0.0
          %874 = vmatprep.subr.mxu0 0.0
          %875 = vmatpush1.xpose.msra.mxu0 0.0
          %876 = vmatprep.subr.mxu0 0.0
          %877 = vmatpush1.xpose.msra.mxu0 0.0
          %878 = vmatprep.subr.mxu0 0.0
          %879 = vmatpush1.xpose.msra.mxu0 0.0
          %880 = vmatprep.subr.mxu0 0.0
          %881 = vmatpush1.xpose.msra.mxu0 0.0
          %882 = vmatprep.subr.mxu0 0.0
          %883 = vmatpush1.xpose.msra.mxu0 0.0
          %884 = vmatprep.subr.mxu0 0.0
          %885 = vmatpush1.xpose.msra.mxu0 0.0
          %886 = vmatprep.subr.mxu0 0.0
          %887 = vmatpush1.xpose.msra.mxu0 0.0
          %888 = vmatprep.subr.mxu0 0.0
          %889 = vmatpush1.xpose.msra.mxu0 0.0
          %890 = vmatprep.subr.mxu0 0.0
          %891 = vmatpush1.xpose.msra.mxu0 0.0
          %892 = vmatprep.subr.mxu0 0.0
          %893 = vmatpush1.xpose.msra.mxu0 0.0
          %894 = vmatprep.subr.mxu0 0.0
          %895 = vmatpush1.xpose.msra.mxu0 0.0
          %896 = vmatprep.subr.mxu0 0.0
          %897 = vmatpush1.xpose.msra.mxu0 0.0
          %898 = vmatprep.subr.mxu0 0.0
          %899 = vmatpush1.xpose.msra.mxu0 0.0
          %900 = vmatprep.mubr.f32.mxu0 0.0
          %v901 = vand.u32 %v307, 4294901760
          %902 = vmatmul.mubr.f32.gmra.mrb[0].mxu0 %v901
          %v903 = vpop.f32.mrb[0].mxu0
          %v904 = vadd.f32 %v774, %v903
          %v905 = vpop.f32.mrb[0].mxu0
          %906 = vmatprep.mubr.f32.mxu0 0.0
          %v907 = vand.u32 %v308, 4294901760
          %908 = vmatmul.mubr.f32.gmra.mrb[0].mxu0 %v907
          %v909 = vpop.f32.mrb[0].mxu0
          %v910 = vadd.f32 %v782, %v909
          %v911 = vpop.f32.mrb[0].mxu0
          %912 = vmatprep.mubr.f32.mxu0 0.0
          %v913 = vand.u32 %v309, 4294901760
          %914 = vmatmul.mubr.f32.gmra.mrb[0].mxu0 %v913
          %v915 = vpop.f32.mrb[0].mxu0
          %v916 = vadd.f32 %v790, %v915
          %v917 = vpop.f32.mrb[0].mxu0
          %918 = vmatprep.mubr.f32.mxu0 0.0
          %v919 = vand.u32 %v310, 4294901760
          %920 = vmatmul.mubr.f32.gmra.mrb[0].mxu0 %v919
          %v921 = vpop.f32.mrb[0].mxu0
          %v922 = vadd.f32 %v798, %v921
          %v923 = vpop.f32.mrb[0].mxu0
          %924 = vmatprep.mubr.f32.mxu0 0.0
          %v925 = vand.u32 %v311, 4294901760
          %926 = vmatmul.mubr.f32.gmra.mrb[0].mxu0 %v925
          %v927 = vpop.f32.mrb[0].mxu0
          %v928 = vadd.f32 %v806, %v927
          %v929 = vpop.f32.mrb[0].mxu0
          %930 = vmatprep.mubr.f32.mxu0 0.0
          %v931 = vand.u32 %v312, 4294901760
          %932 = vmatmul.mubr.f32.gmra.mrb[0].mxu0 %v931
          %v933 = vpop.f32.mrb[0].mxu0
          %v934 = vadd.f32 %v814, %v933
          %v935 = vpop.f32.mrb[0].mxu0
          %936 = vmatprep.mubr.f32.mxu0 0.0
          %v937 = vand.u32 %v313, 4294901760
          %938 = vmatmul.mubr.f32.gmra.mrb[0].mxu0 %v937
          %v939 = vpop.f32.mrb[0].mxu0
          %v940 = vadd.f32 %v822, %v939
          %v941 = vpop.f32.mrb[0].mxu0
          %942 = vmatprep.mubr.f32.mxu0 0.0
          %v943 = vand.u32 %v314, 4294901760
          %944 = vmatmul.mubr.f32.gmra.mrb[0].mxu0 %v943
          %v945 = vpop.f32.mrb[0].mxu0
          %v946 = vadd.f32 %v830, %v945
          %v947 = vpop.f32.mrb[0].mxu0
          %948 = vdwg.mxu0
          %949 = vmatprep.subr.mxu0 0.0
          %v950 = vand.u32 %v315, 4294901760
          %951 = vmatpush1.xpose.msra.mxu0 %v950
          %952 = vmatprep.subr.mxu0 0.0
          %953 = vmatpush1.xpose.msra.mxu0 0.0
          %954 = vmatprep.subr.mxu0 0.0
          %955 = vmatpush1.xpose.msra.mxu0 0.0
          %956 = vmatprep.subr.mxu0 0.0
          %957 = vmatpush1.xpose.msra.mxu0 0.0
          %958 = vmatprep.subr.mxu0 0.0
          %959 = vmatpush1.xpose.msra.mxu0 0.0
          %960 = vmatprep.subr.mxu0 0.0
          %961 = vmatpush1.xpose.msra.mxu0 0.0
          %962 = vmatprep.subr.mxu0 0.0
          %963 = vmatpush1.xpose.msra.mxu0 0.0
          %964 = vmatprep.subr.mxu0 0.0
          %965 = vmatpush1.xpose.msra.mxu0 0.0
          %966 = vmatprep.subr.mxu0 0.0
          %967 = vmatpush1.xpose.msra.mxu0 0.0
          %968 = vmatprep.subr.mxu0 0.0
          %969 = vmatpush1.xpose.msra.mxu0 0.0
          %970 = vmatprep.subr.mxu0 0.0
          %971 = vmatpush1.xpose.msra.mxu0 0.0
          %972 = vmatprep.subr.mxu0 0.0
          %973 = vmatpush1.xpose.msra.mxu0 0.0
          %974 = vmatprep.subr.mxu0 0.0
          %975 = vmatpush1.xpose.msra.mxu0 0.0
          %976 = vmatprep.subr.mxu0 0.0
          %977 = vmatpush1.xpose.msra.mxu0 0.0
          %978 = vmatprep.subr.mxu0 0.0
          %979 = vmatpush1.xpose.msra.mxu0 0.0
          %980 = vmatprep.subr.mxu0 0.0
          %981 = vmatpush1.xpose.msra.mxu0 0.0
          %982 = vmatprep.subr.mxu0 0.0
          %983 = vmatpush1.xpose.msra.mxu0 0.0
          %984 = vmatprep.subr.mxu0 0.0
          %985 = vmatpush1.xpose.msra.mxu0 0.0
          %986 = vmatprep.subr.mxu0 0.0
          %987 = vmatpush1.xpose.msra.mxu0 0.0
          %988 = vmatprep.subr.mxu0 0.0
          %989 = vmatpush1.xpose.msra.mxu0 0.0
          %990 = vmatprep.subr.mxu0 0.0
          %991 = vmatpush1.xpose.msra.mxu0 0.0
          %992 = vmatprep.subr.mxu0 0.0
          %993 = vmatpush1.xpose.msra.mxu0 0.0
          %994 = vmatprep.subr.mxu0 0.0
          %995 = vmatpush1.xpose.msra.mxu0 0.0
          %996 = vmatprep.subr.mxu0 0.0
          %997 = vmatpush1.xpose.msra.mxu0 0.0
          %998 = vmatprep.subr.mxu0 0.0
          %999 = vmatpush1.xpose.msra.mxu0 0.0
          %1000 = vmatprep.subr.mxu0 0.0
          %1001 = vmatpush1.xpose.msra.mxu0 0.0
          %1002 = vmatprep.subr.mxu0 0.0
          %1003 = vmatpush1.xpose.msra.mxu0 0.0
          %1004 = vmatprep.subr.mxu0 0.0
          %1005 = vmatpush1.xpose.msra.mxu0 0.0
          %1006 = vmatprep.subr.mxu0 0.0
          %1007 = vmatpush1.xpose.msra.mxu0 0.0
          %1008 = vmatprep.subr.mxu0 0.0
          %1009 = vmatpush1.xpose.msra.mxu0 0.0
          %1010 = vmatprep.subr.mxu0 0.0
          %1011 = vmatpush1.xpose.msra.mxu0 0.0
          %1012 = vmatprep.subr.mxu0 0.0
          %1013 = vmatpush1.xpose.msra.mxu0 0.0
          %1014 = vmatprep.mubr.f32.mxu0 0.0
          %v1015 = vand.u32 %v307, 4294901760
          %1016 = vmatmul.mubr.f32.gmra.mrb[0].mxu0 %v1015
          %v1017 = vpop.f32.mrb[0].mxu0
          %v1018 = vadd.f32 %v904, %v1017
          %v1019 = vpop.f32.mrb[0].mxu0
          %1020 = vmatprep.mubr.f32.mxu0 0.0
          %v1021 = vand.u32 %v308, 4294901760
          %1022 = vmatmul.mubr.f32.gmra.mrb[0].mxu0 %v1021
          %v1023 = vpop.f32.mrb[0].mxu0
          %v1024 = vadd.f32 %v910, %v1023
          %v1025 = vpop.f32.mrb[0].mxu0
          %1026 = vmatprep.mubr.f32.mxu0 0.0
          %v1027 = vand.u32 %v309, 4294901760
          %1028 = vmatmul.mubr.f32.gmra.mrb[0].mxu0 %v1027
          %v1029 = vpop.f32.mrb[0].mxu0
          %v1030 = vadd.f32 %v916, %v1029
          %v1031 = vpop.f32.mrb[0].mxu0
          %1032 = vmatprep.mubr.f32.mxu0 0.0
          %v1033 = vand.u32 %v310, 4294901760
          %1034 = vmatmul.mubr.f32.gmra.mrb[0].mxu0 %v1033
          %v1035 = vpop.f32.mrb[0].mxu0
          %v1036 = vadd.f32 %v922, %v1035
          %v1037 = vpop.f32.mrb[0].mxu0
          %1038 = vmatprep.mubr.f32.mxu0 0.0
          %v1039 = vand.u32 %v311, 4294901760
          %1040 = vmatmul.mubr.f32.gmra.mrb[0].mxu0 %v1039
          %v1041 = vpop.f32.mrb[0].mxu0
          %v1042 = vadd.f32 %v928, %v1041
          %v1043 = vpop.f32.mrb[0].mxu0
          %1044 = vmatprep.mubr.f32.mxu0 0.0
          %v1045 = vand.u32 %v312, 4294901760
          %1046 = vmatmul.mubr.f32.gmra.mrb[0].mxu0 %v1045
          %v1047 = vpop.f32.mrb[0].mxu0
          %v1048 = vadd.f32 %v934, %v1047
          %v1049 = vpop.f32.mrb[0].mxu0
          %1050 = vmatprep.mubr.f32.mxu0 0.0
          %v1051 = vand.u32 %v313, 4294901760
          %1052 = vmatmul.mubr.f32.gmra.mrb[0].mxu0 %v1051
          %v1053 = vpop.f32.mrb[0].mxu0
          %v1054 = vadd.f32 %v940, %v1053
          %v1055 = vpop.f32.mrb[0].mxu0
          %1056 = vmatprep.mubr.f32.mxu0 0.0
          %v1057 = vand.u32 %v314, 4294901760
          %1058 = vmatmul.mubr.f32.gmra.mrb[0].mxu0 %v1057
          %v1059 = vpop.f32.mrb[0].mxu0
          %v1060 = vadd.f32 %v946, %v1059
          %v1061 = vpop.f32.mrb[0].mxu0
          %1062 = vdwg.mxu0
          %vm1063 = vcmask 48128
          %1064 = vst.msk [vmem:[#allocation2] sm:$0xff] %vm1063, %v1018
          %1065 = vst.msk [vmem:[#allocation2 + $0x8] sm:$0xff] %vm1063, %v1024
          %1066 = vst.msk [vmem:[#allocation2 + $0x10] sm:$0xff] %vm1063, %v1030
          %1067 = vst.msk [vmem:[#allocation2 + $0x18] sm:$0xff] %vm1063, %v1036
          %1068 = vst.msk [vmem:[#allocation2 + $0x20] sm:$0xff] %vm1063, %v1042
          %1069 = vst.msk [vmem:[#allocation2 + $0x28] sm:$0xff] %vm1063, %v1048
          %1070 = vst.msk [vmem:[#allocation2 + $0x30] sm:$0xff] %vm1063, %v1054
          %1071 = vst.msk [vmem:[#allocation2 + $0x38] sm:$0xff] %vm1063, %v1060
        $region44: #{tpu_custom_call.1} parent=39 // pred_fallthru
          _
        %vm1072 = vcmp.lt.s32.totalorder %v278, 64
        %vm1073 = vcmp.lt.s32.totalorder %v279, 64
        %vm1074 = vcmp.lt.s32.totalorder %v280, 64
        %vm1075 = vcmp.lt.s32.totalorder %v281, 64
        %v1076 = vlaneseq
        %v1077 = vand.u32 %v1076, 127
        %1078 = vset.pattern.permute.xlu0 0
        %1079 = vperm.xlu0 %1078, %v278
        %v1080 = vpop.permute.xlu0 %1079
        %1081 = vset.pattern.permute.xlu0 0
        %1082 = vperm.xlu0 %1081, %v279
        %v1083 = vpop.permute.xlu0 %1082
        %1084 = vset.pattern.permute.xlu0 0
        %1085 = vperm.xlu0 %1084, %v280
        %v1086 = vpop.permute.xlu0 %1085
        %1087 = vset.pattern.permute.xlu0 0
        %1088 = vperm.xlu0 %1087, %v281
        %v1089 = vpop.permute.xlu0 %1088
        %vm1090 = vcmp.eq.s32.totalorder %v1077, %v1080
        %vm1091 = vcmp.eq.s32.totalorder %v1077, %v1083
        %vm1092 = vcmp.eq.s32.totalorder %v1077, %v1086
        %vm1093 = vcmp.eq.s32.totalorder %v1077, %v1089
        %v1094 = vsel %vm1090, 1, 0
        %v1095 = vsel %vm1091, 1, 0
        %v1096 = vsel %vm1092, 1, 0
        %v1097 = vsel %vm1093, 1, 0
        %v1098 = vcvt.s32.f32 %v1094
        %v1099 = vcvt.s32.f32 %v1095
        %v1100 = vcvt.s32.f32 %v1096
        %v1101 = vcvt.s32.f32 %v1097
        %1102 = vset.pattern.permute.xlu0 0
        %1103 = vperm.xlu0 %1102, %v282
        %v1104 = vpop.permute.xlu0 %1103
        %1105 = vset.pattern.permute.xlu0 0
        %1106 = vperm.xlu0 %1105, %v283
        %v1107 = vpop.permute.xlu0 %1106
        %1108 = vset.pattern.permute.xlu0 0
        %1109 = vperm.xlu0 %1108, %v284
        %v1110 = vpop.permute.xlu0 %1109
        %1111 = vset.pattern.permute.xlu0 0
        %1112 = vperm.xlu0 %1111, %v285
        %v1113 = vpop.permute.xlu0 %1112
        %vm1114 = vcmp.eq.s32.totalorder %v1077, %v1104
        %vm1115 = vcmp.eq.s32.totalorder %v1077, %v1107
        %vm1116 = vcmp.eq.s32.totalorder %v1077, %v1110
        %vm1117 = vcmp.eq.s32.totalorder %v1077, %v1113
        %v1118 = vsel %vm1114, 1, 0
        %v1119 = vsel %vm1115, 1, 0
        %v1120 = vsel %vm1116, 1, 0
        %v1121 = vsel %vm1117, 1, 0
        %v1122 = vcvt.s32.f32 %v1118
        %v1123 = vcvt.s32.f32 %v1119
        %v1124 = vcvt.s32.f32 %v1120
        %v1125 = vcvt.s32.f32 %v1121
        %1126 = vset.pattern.permute.xlu0 0
        %1127 = vperm.xlu0 %1126, %v286
        %v1128 = vpop.permute.xlu0 %1127
        %1129 = vset.pattern.permute.xlu0 0
        %1130 = vperm.xlu0 %1129, %v287
        %v1131 = vpop.permute.xlu0 %1130
        %1132 = vset.pattern.permute.xlu0 0
        %1133 = vperm.xlu0 %1132, %v288
        %v1134 = vpop.permute.xlu0 %1133
        %1135 = vset.pattern.permute.xlu0 0
        %1136 = vperm.xlu0 %1135, %v289
        %v1137 = vpop.permute.xlu0 %1136
        %vm1138 = vcmp.eq.s32.totalorder %v1077, %v1128
        %vm1139 = vcmp.eq.s32.totalorder %v1077, %v1131
        %vm1140 = vcmp.eq.s32.totalorder %v1077, %v1134
        %vm1141 = vcmp.eq.s32.totalorder %v1077, %v1137
        %v1142 = vsel %vm1138, 1, 0
        %v1143 = vsel %vm1139, 1, 0
        %v1144 = vsel %vm1140, 1, 0
        %v1145 = vsel %vm1141, 1, 0
        %v1146 = vcvt.s32.f32 %v1142
        %v1147 = vcvt.s32.f32 %v1143
        %v1148 = vcvt.s32.f32 %v1144
        %v1149 = vcvt.s32.f32 %v1145
        %v1150 = vld [vmem:[#allocation2] sm:$0xff]
        %v1151 = vld [vmem:[#allocation2 + $0x8] sm:$0xff]
        %v1152 = vld [vmem:[#allocation2 + $0x10] sm:$0xff]
        %v1153 = vld [vmem:[#allocation2 + $0x18] sm:$0xff]
        %v1154 = vld [vmem:[#allocation2 + $0x20] sm:$0xff]
        %v1155 = vld [vmem:[#allocation2 + $0x28] sm:$0xff]
        %v1156 = vld [vmem:[#allocation2 + $0x30] sm:$0xff]
        %v1157 = vld [vmem:[#allocation2 + $0x38] sm:$0xff]
        %vm1158 = vcmask 523264
        %v1160 = vsel %vm1158, %v1098, 0
        %v1163 = vsel %vm1158, %v1099, 0
        %v1166 = vsel %vm1158, %v1100, 0
        %v1169 = vsel %vm1158, %v1101, 0
        %1171 = vmatprep.subr.mxu0 0.0
        %v1172 = vand.u32 %v1150, 4294901760
        %1173 = vmatpush1.msra.mxu0 %v1172
        %1174 = vmatprep.subr.mxu0 0.0
        %v1175 = vand.u32 %v1151, 4294901760
        %1176 = vmatpush1.msra.mxu0 %v1175
        %1177 = vmatprep.subr.mxu0 0.0
        %v1178 = vand.u32 %v1152, 4294901760
        %1179 = vmatpush1.msra.mxu0 %v1178
        %1180 = vmatprep.subr.mxu0 0.0
        %v1181 = vand.u32 %v1153, 4294901760
        %1182 = vmatpush1.msra.mxu0 %v1181
        %1183 = vmatprep.subr.mxu0 0.0
        %v1184 = vand.u32 %v1154, 4294901760
        %1185 = vmatpush1.msra.mxu0 %v1184
        %1186 = vmatprep.subr.mxu0 0.0
        %v1187 = vand.u32 %v1155, 4294901760
        %1188 = vmatpush1.msra.mxu0 %v1187
        %1189 = vmatprep.subr.mxu0 0.0
        %v1190 = vand.u32 %v1156, 4294901760
        %1191 = vmatpush1.msra.mxu0 %v1190
        %1192 = vmatprep.subr.mxu0 0.0
        %v1193 = vand.u32 %v1157, 4294901760
        %1194 = vmatpush1.msra.mxu0 %v1193
        %1195 = vmatprep.subr.mxu0 0.0
        %1196 = vmatpush1.msra.mxu0 0.0
        %1197 = vmatprep.subr.mxu0 0.0
        %1198 = vmatpush1.msra.mxu0 0.0
        %1199 = vmatprep.subr.mxu0 0.0
        %1200 = vmatpush1.msra.mxu0 0.0
        %1201 = vmatprep.subr.mxu0 0.0
        %1202 = vmatpush1.msra.mxu0 0.0
        %1203 = vmatprep.subr.mxu0 0.0
        %1204 = vmatpush1.msra.mxu0 0.0
        %1205 = vmatprep.subr.mxu0 0.0
        %1206 = vmatpush1.msra.mxu0 0.0
        %1207 = vmatprep.subr.mxu0 0.0
        %1208 = vmatpush1.msra.mxu0 0.0
        %1209 = vmatprep.subr.mxu0 0.0
        %1210 = vmatpush1.msra.mxu0 0.0
        %1211 = vmatprep.subr.mxu0 0.0
        %1212 = vmatpush1.msra.mxu0 0.0
        %1213 = vmatprep.subr.mxu0 0.0
        %1214 = vmatpush1.msra.mxu0 0.0
        %1215 = vmatprep.subr.mxu0 0.0
        %1216 = vmatpush1.msra.mxu0 0.0
        %1217 = vmatprep.subr.mxu0 0.0
        %1218 = vmatpush1.msra.mxu0 0.0
        %1219 = vmatprep.subr.mxu0 0.0
        %1220 = vmatpush1.msra.mxu0 0.0
        %1221 = vmatprep.subr.mxu0 0.0
        %1222 = vmatpush1.msra.mxu0 0.0
        %1223 = vmatprep.subr.mxu0 0.0
        %1224 = vmatpush1.msra.mxu0 0.0
        %1225 = vmatprep.subr.mxu0 0.0
        %1226 = vmatpush1.msra.mxu0 0.0
        %1227 = vmatprep.subr.mxu0 0.0
        %1228 = vmatpush1.msra.mxu0 0.0
        %1229 = vmatprep.subr.mxu0 0.0
        %1230 = vmatpush1.msra.mxu0 0.0
        %1231 = vmatprep.subr.mxu0 0.0
        %1232 = vmatpush1.msra.mxu0 0.0
        %1233 = vmatprep.subr.mxu0 0.0
        %1234 = vmatpush1.msra.mxu0 0.0
        %1235 = vmatprep.subr.mxu0 0.0
        %1236 = vmatpush1.msra.mxu0 0.0
        %1237 = vmatprep.subr.mxu0 0.0
        %1238 = vmatpush1.msra.mxu0 0.0
        %1239 = vmatprep.subr.mxu0 0.0
        %1240 = vmatpush1.msra.mxu0 0.0
        %1241 = vmatprep.subr.mxu0 0.0
        %1242 = vmatpush1.msra.mxu0 0.0
        %1243 = vmatprep.mubr.f32.mxu0 0.0
        %v1244 = vand.u32 %v1160, 4294901760
        %v1245 = vsub.f32 %v1160, %v1244
        %v1246 = vand.u32 %v1245, 4294901760
        %v1247 = vsub.f32 %v1245, %v1246
        %v1248 = vand.u32 %v1247, 4294901760
        %1249 = vmatmul.mubr.f32.gmra.mrb[0].mxu0 %v1248
        %v1250 = vpop.f32.mrb[0].mxu0
        %v1251 = vadd.f32 0.0, %v1250
        %v1252 = vpop.f32.mrb[0].mxu0
        %1253 = vmatprep.mubr.f32.mxu0 0.0
        %v1254 = vand.u32 %v1163, 4294901760
        %v1255 = vsub.f32 %v1163, %v1254
        %v1256 = vand.u32 %v1255, 4294901760
        %v1257 = vsub.f32 %v1255, %v1256
        %v1258 = vand.u32 %v1257, 4294901760
        %1259 = vmatmul.mubr.f32.gmra.mrb[0].mxu0 %v1258
        %v1260 = vpop.f32.mrb[0].mxu0
        %v1261 = vadd.f32 0.0, %v1260
        %v1262 = vpop.f32.mrb[0].mxu0
        %1263 = vmatprep.mubr.f32.mxu0 0.0
        %v1264 = vand.u32 %v1166, 4294901760
        %v1265 = vsub.f32 %v1166, %v1264
        %v1266 = vand.u32 %v1265, 4294901760
        %v1267 = vsub.f32 %v1265, %v1266
        %v1268 = vand.u32 %v1267, 4294901760
        %1269 = vmatmul.mubr.f32.gmra.mrb[0].mxu0 %v1268
        %v1270 = vpop.f32.mrb[0].mxu0
        %v1271 = vadd.f32 0.0, %v1270
        %v1272 = vpop.f32.mrb[0].mxu0
        %1273 = vmatprep.mubr.f32.mxu0 0.0
        %v1274 = vand.u32 %v1169, 4294901760
        %v1275 = vsub.f32 %v1169, %v1274
        %v1276 = vand.u32 %v1275, 4294901760
        %v1277 = vsub.f32 %v1275, %v1276
        %v1278 = vand.u32 %v1277, 4294901760
        %1279 = vmatmul.mubr.f32.gmra.mrb[0].mxu0 %v1278
        %v1280 = vpop.f32.mrb[0].mxu0
        %v1281 = vadd.f32 0.0, %v1280
        %v1282 = vpop.f32.mrb[0].mxu0
        %1283 = vdwg.mxu0
        %1284 = vmatprep.subr.mxu0 0.0
        %v1285 = vand.u32 %v1150, 4294901760
        %v1286 = vsub.f32 %v1150, %v1285
        %v1287 = vand.u32 %v1286, 4294901760
        %v1288 = vsub.f32 %v1286, %v1287
        %v1289 = vand.u32 %v1288, 4294901760
        %1290 = vmatpush1.msra.mxu0 %v1289
        %1291 = vmatprep.subr.mxu0 0.0
        %v1292 = vand.u32 %v1151, 4294901760
        %v1293 = vsub.f32 %v1151, %v1292
        %v1294 = vand.u32 %v1293, 4294901760
        %v1295 = vsub.f32 %v1293, %v1294
        %v1296 = vand.u32 %v1295, 4294901760
        %1297 = vmatpush1.msra.mxu0 %v1296
        %1298 = vmatprep.subr.mxu0 0.0
        %v1299 = vand.u32 %v1152, 4294901760
        %v1300 = vsub.f32 %v1152, %v1299
        %v1301 = vand.u32 %v1300, 4294901760
        %v1302 = vsub.f32 %v1300, %v1301
        %v1303 = vand.u32 %v1302, 4294901760
        %1304 = vmatpush1.msra.mxu0 %v1303
        %1305 = vmatprep.subr.mxu0 0.0
        %v1306 = vand.u32 %v1153, 4294901760
        %v1307 = vsub.f32 %v1153, %v1306
        %v1308 = vand.u32 %v1307, 4294901760
        %v1309 = vsub.f32 %v1307, %v1308
        %v1310 = vand.u32 %v1309, 4294901760
        %1311 = vmatpush1.msra.mxu0 %v1310
        %1312 = vmatprep.subr.mxu0 0.0
        %v1313 = vand.u32 %v1154, 4294901760
        %v1314 = vsub.f32 %v1154, %v1313
        %v1315 = vand.u32 %v1314, 4294901760
        %v1316 = vsub.f32 %v1314, %v1315
        %v1317 = vand.u32 %v1316, 4294901760
        %1318 = vmatpush1.msra.mxu0 %v1317
        %1319 = vmatprep.subr.mxu0 0.0
        %v1320 = vand.u32 %v1155, 4294901760
        %v1321 = vsub.f32 %v1155, %v1320
        %v1322 = vand.u32 %v1321, 4294901760
        %v1323 = vsub.f32 %v1321, %v1322
        %v1324 = vand.u32 %v1323, 4294901760
        %1325 = vmatpush1.msra.mxu0 %v1324
        %1326 = vmatprep.subr.mxu0 0.0
        %v1327 = vand.u32 %v1156, 4294901760
        %v1328 = vsub.f32 %v1156, %v1327
        %v1329 = vand.u32 %v1328, 4294901760
        %v1330 = vsub.f32 %v1328, %v1329
        %v1331 = vand.u32 %v1330, 4294901760
        %1332 = vmatpush1.msra.mxu0 %v1331
        %1333 = vmatprep.subr.mxu0 0.0
        %v1334 = vand.u32 %v1157, 4294901760
        %v1335 = vsub.f32 %v1157, %v1334
        %v1336 = vand.u32 %v1335, 4294901760
        %v1337 = vsub.f32 %v1335, %v1336
        %v1338 = vand.u32 %v1337, 4294901760
        %1339 = vmatpush1.msra.mxu0 %v1338
        %1340 = vmatprep.subr.mxu0 0.0
        %1341 = vmatpush1.msra.mxu0 0.0
        %1342 = vmatprep.subr.mxu0 0.0
        %1343 = vmatpush1.msra.mxu0 0.0
        %1344 = vmatprep.subr.mxu0 0.0
        %1345 = vmatpush1.msra.mxu0 0.0
        %1346 = vmatprep.subr.mxu0 0.0
        %1347 = vmatpush1.msra.mxu0 0.0
        %1348 = vmatprep.subr.mxu0 0.0
        %1349 = vmatpush1.msra.mxu0 0.0
        %1350 = vmatprep.subr.mxu0 0.0
        %1351 = vmatpush1.msra.mxu0 0.0
        %1352 = vmatprep.subr.mxu0 0.0
        %1353 = vmatpush1.msra.mxu0 0.0
        %1354 = vmatprep.subr.mxu0 0.0
        %1355 = vmatpush1.msra.mxu0 0.0
        %1356 = vmatprep.subr.mxu0 0.0
        %1357 = vmatpush1.msra.mxu0 0.0
        %1358 = vmatprep.subr.mxu0 0.0
        %1359 = vmatpush1.msra.mxu0 0.0
        %1360 = vmatprep.subr.mxu0 0.0
        %1361 = vmatpush1.msra.mxu0 0.0
        %1362 = vmatprep.subr.mxu0 0.0
        %1363 = vmatpush1.msra.mxu0 0.0
        %1364 = vmatprep.subr.mxu0 0.0
        %1365 = vmatpush1.msra.mxu0 0.0
        %1366 = vmatprep.subr.mxu0 0.0
        %1367 = vmatpush1.msra.mxu0 0.0
        %1368 = vmatprep.subr.mxu0 0.0
        %1369 = vmatpush1.msra.mxu0 0.0
        %1370 = vmatprep.subr.mxu0 0.0
        %1371 = vmatpush1.msra.mxu0 0.0
        %1372 = vmatprep.subr.mxu0 0.0
        %1373 = vmatpush1.msra.mxu0 0.0
        %1374 = vmatprep.subr.mxu0 0.0
        %1375 = vmatpush1.msra.mxu0 0.0
        %1376 = vmatprep.subr.mxu0 0.0
        %1377 = vmatpush1.msra.mxu0 0.0
        %1378 = vmatprep.subr.mxu0 0.0
        %1379 = vmatpush1.msra.mxu0 0.0
        %1380 = vmatprep.subr.mxu0 0.0
        %1381 = vmatpush1.msra.mxu0 0.0
        %1382 = vmatprep.subr.mxu0 0.0
        %1383 = vmatpush1.msra.mxu0 0.0
        %1384 = vmatprep.subr.mxu0 0.0
        %1385 = vmatpush1.msra.mxu0 0.0
        %1386 = vmatprep.subr.mxu0 0.0
        %1387 = vmatpush1.msra.mxu0 0.0
        %1388 = vmatprep.mubr.f32.mxu0 0.0
        %v1389 = vand.u32 %v1160, 4294901760
        %1390 = vmatmul.mubr.f32.gmra.mrb[0].mxu0 %v1389
        %v1391 = vpop.f32.mrb[0].mxu0
        %v1392 = vadd.f32 %v1251, %v1391
        %v1393 = vpop.f32.mrb[0].mxu0
        %1394 = vmatprep.mubr.f32.mxu0 0.0
        %v1395 = vand.u32 %v1163, 4294901760
        %1396 = vmatmul.mubr.f32.gmra.mrb[0].mxu0 %v1395
        %v1397 = vpop.f32.mrb[0].mxu0
        %v1398 = vadd.f32 %v1261, %v1397
        %v1399 = vpop.f32.mrb[0].mxu0
        %1400 = vmatprep.mubr.f32.mxu0 0.0
        %v1401 = vand.u32 %v1166, 4294901760
        %1402 = vmatmul.mubr.f32.gmra.mrb[0].mxu0 %v1401
        %v1403 = vpop.f32.mrb[0].mxu0
        %v1404 = vadd.f32 %v1271, %v1403
        %v1405 = vpop.f32.mrb[0].mxu0
        %1406 = vmatprep.mubr.f32.mxu0 0.0
        %v1407 = vand.u32 %v1169, 4294901760
        %1408 = vmatmul.mubr.f32.gmra.mrb[0].mxu0 %v1407
        %v1409 = vpop.f32.mrb[0].mxu0
        %v1410 = vadd.f32 %v1281, %v1409
        %v1411 = vpop.f32.mrb[0].mxu0
        %1412 = vdwg.mxu0
        %1413 = vmatprep.subr.mxu0 0.0
        %v1414 = vand.u32 %v1150, 4294901760
        %v1415 = vsub.f32 %v1150, %v1414
        %1416 = vmatpush1.msra.mxu0 %v1415
        %1417 = vmatprep.subr.mxu0 0.0
        %v1418 = vand.u32 %v1151, 4294901760
        %v1419 = vsub.f32 %v1151, %v1418
        %1420 = vmatpush1.msra.mxu0 %v1419
        %1421 = vmatprep.subr.mxu0 0.0
        %v1422 = vand.u32 %v1152, 4294901760
        %v1423 = vsub.f32 %v1152, %v1422
        %1424 = vmatpush1.msra.mxu0 %v1423
        %1425 = vmatprep.subr.mxu0 0.0
        %v1426 = vand.u32 %v1153, 4294901760
        %v1427 = vsub.f32 %v1153, %v1426
        %1428 = vmatpush1.msra.mxu0 %v1427
        %1429 = vmatprep.subr.mxu0 0.0
        %v1430 = vand.u32 %v1154, 4294901760
        %v1431 = vsub.f32 %v1154, %v1430
        %1432 = vmatpush1.msra.mxu0 %v1431
        %1433 = vmatprep.subr.mxu0 0.0
        %v1434 = vand.u32 %v1155, 4294901760
        %v1435 = vsub.f32 %v1155, %v1434
        %1436 = vmatpush1.msra.mxu0 %v1435
        %1437 = vmatprep.subr.mxu0 0.0
        %v1438 = vand.u32 %v1156, 4294901760
        %v1439 = vsub.f32 %v1156, %v1438
        %1440 = vmatpush1.msra.mxu0 %v1439
        %1441 = vmatprep.subr.mxu0 0.0
        %v1442 = vand.u32 %v1157, 4294901760
        %v1443 = vsub.f32 %v1157, %v1442
        %1444 = vmatpush1.msra.mxu0 %v1443
        %1445 = vmatprep.subr.mxu0 0.0
        %1446 = vmatpush1.msra.mxu0 0.0
        %1447 = vmatprep.subr.mxu0 0.0
        %1448 = vmatpush1.msra.mxu0 0.0
        %1449 = vmatprep.subr.mxu0 0.0
        %1450 = vmatpush1.msra.mxu0 0.0
        %1451 = vmatprep.subr.mxu0 0.0
        %1452 = vmatpush1.msra.mxu0 0.0
        %1453 = vmatprep.subr.mxu0 0.0
        %1454 = vmatpush1.msra.mxu0 0.0
        %1455 = vmatprep.subr.mxu0 0.0
        %1456 = vmatpush1.msra.mxu0 0.0
        %1457 = vmatprep.subr.mxu0 0.0
        %1458 = vmatpush1.msra.mxu0 0.0
        %1459 = vmatprep.subr.mxu0 0.0
        %1460 = vmatpush1.msra.mxu0 0.0
        %1461 = vmatprep.subr.mxu0 0.0
        %1462 = vmatpush1.msra.mxu0 0.0
        %1463 = vmatprep.subr.mxu0 0.0
        %1464 = vmatpush1.msra.mxu0 0.0
        %1465 = vmatprep.subr.mxu0 0.0
        %1466 = vmatpush1.msra.mxu0 0.0
        %1467 = vmatprep.subr.mxu0 0.0
        %1468 = vmatpush1.msra.mxu0 0.0
        %1469 = vmatprep.subr.mxu0 0.0
        %1470 = vmatpush1.msra.mxu0 0.0
        %1471 = vmatprep.subr.mxu0 0.0
        %1472 = vmatpush1.msra.mxu0 0.0
        %1473 = vmatprep.subr.mxu0 0.0
        %1474 = vmatpush1.msra.mxu0 0.0
        %1475 = vmatprep.subr.mxu0 0.0
        %1476 = vmatpush1.msra.mxu0 0.0
        %1477 = vmatprep.subr.mxu0 0.0
        %1478 = vmatpush1.msra.mxu0 0.0
        %1479 = vmatprep.subr.mxu0 0.0
        %1480 = vmatpush1.msra.mxu0 0.0
        %1481 = vmatprep.subr.mxu0 0.0
        %1482 = vmatpush1.msra.mxu0 0.0
        %1483 = vmatprep.subr.mxu0 0.0
        %1484 = vmatpush1.msra.mxu0 0.0
        %1485 = vmatprep.subr.mxu0 0.0
        %1486 = vmatpush1.msra.mxu0 0.0
        %1487 = vmatprep.subr.mxu0 0.0
        %1488 = vmatpush1.msra.mxu0 0.0
        %1489 = vmatprep.subr.mxu0 0.0
        %1490 = vmatpush1.msra.mxu0 0.0
        %1491 = vmatprep.subr.mxu0 0.0
        %1492 = vmatpush1.msra.mxu0 0.0
        %1493 = vmatprep.mubr.f32.mxu0 0.0
        %v1494 = vand.u32 %v1160, 4294901760
        %v1495 = vsub.f32 %v1160, %v1494
        %1496 = vmatmul.mubr.f32.gmra.mrb[0].mxu0 %v1495
        %v1497 = vpop.f32.mrb[0].mxu0
        %v1498 = vadd.f32 %v1392, %v1497
        %v1499 = vpop.f32.mrb[0].mxu0
        %1500 = vmatprep.mubr.f32.mxu0 0.0
        %v1501 = vand.u32 %v1163, 4294901760
        %v1502 = vsub.f32 %v1163, %v1501
        %1503 = vmatmul.mubr.f32.gmra.mrb[0].mxu0 %v1502
        %v1504 = vpop.f32.mrb[0].mxu0
        %v1505 = vadd.f32 %v1398, %v1504
        %v1506 = vpop.f32.mrb[0].mxu0
        %1507 = vmatprep.mubr.f32.mxu0 0.0
        %v1508 = vand.u32 %v1166, 4294901760
        %v1509 = vsub.f32 %v1166, %v1508
        %1510 = vmatmul.mubr.f32.gmra.mrb[0].mxu0 %v1509
        %v1511 = vpop.f32.mrb[0].mxu0
        %v1512 = vadd.f32 %v1404, %v1511
        %v1513 = vpop.f32.mrb[0].mxu0
        %1514 = vmatprep.mubr.f32.mxu0 0.0
        %v1515 = vand.u32 %v1169, 4294901760
        %v1516 = vsub.f32 %v1169, %v1515
        %1517 = vmatmul.mubr.f32.gmra.mrb[0].mxu0 %v1516
        %v1518 = vpop.f32.mrb[0].mxu0
        %v1519 = vadd.f32 %v1410, %v1518
        %v1520 = vpop.f32.mrb[0].mxu0
        %1521 = vdwg.mxu0
        %1522 = vmatprep.subr.mxu0 0.0
        %v1523 = vand.u32 %v1150, 4294901760
        %1524 = vmatpush1.msra.mxu0 %v1523
        %1525 = vmatprep.subr.mxu0 0.0
        %v1526 = vand.u32 %v1151, 4294901760
        %1527 = vmatpush1.msra.mxu0 %v1526
        %1528 = vmatprep.subr.mxu0 0.0
        %v1529 = vand.u32 %v1152, 4294901760
        %1530 = vmatpush1.msra.mxu0 %v1529
        %1531 = vmatprep.subr.mxu0 0.0
        %v1532 = vand.u32 %v1153, 4294901760
        %1533 = vmatpush1.msra.mxu0 %v1532
        %1534 = vmatprep.subr.mxu0 0.0
        %v1535 = vand.u32 %v1154, 4294901760
        %1536 = vmatpush1.msra.mxu0 %v1535
        %1537 = vmatprep.subr.mxu0 0.0
        %v1538 = vand.u32 %v1155, 4294901760
        %1539 = vmatpush1.msra.mxu0 %v1538
        %1540 = vmatprep.subr.mxu0 0.0
        %v1541 = vand.u32 %v1156, 4294901760
        %1542 = vmatpush1.msra.mxu0 %v1541
        %1543 = vmatprep.subr.mxu0 0.0
        %v1544 = vand.u32 %v1157, 4294901760
        %1545 = vmatpush1.msra.mxu0 %v1544
        %1546 = vmatprep.subr.mxu0 0.0
        %1547 = vmatpush1.msra.mxu0 0.0
        %1548 = vmatprep.subr.mxu0 0.0
        %1549 = vmatpush1.msra.mxu0 0.0
        %1550 = vmatprep.subr.mxu0 0.0
        %1551 = vmatpush1.msra.mxu0 0.0
        %1552 = vmatprep.subr.mxu0 0.0
        %1553 = vmatpush1.msra.mxu0 0.0
        %1554 = vmatprep.subr.mxu0 0.0
        %1555 = vmatpush1.msra.mxu0 0.0
        %1556 = vmatprep.subr.mxu0 0.0
        %1557 = vmatpush1.msra.mxu0 0.0
        %1558 = vmatprep.subr.mxu0 0.0
        %1559 = vmatpush1.msra.mxu0 0.0
        %1560 = vmatprep.subr.mxu0 0.0
        %1561 = vmatpush1.msra.mxu0 0.0
        %1562 = vmatprep.subr.mxu0 0.0
        %1563 = vmatpush1.msra.mxu0 0.0
        %1564 = vmatprep.subr.mxu0 0.0
        %1565 = vmatpush1.msra.mxu0 0.0
        %1566 = vmatprep.subr.mxu0 0.0
        %1567 = vmatpush1.msra.mxu0 0.0
        %1568 = vmatprep.subr.mxu0 0.0
        %1569 = vmatpush1.msra.mxu0 0.0
        %1570 = vmatprep.subr.mxu0 0.0
        %1571 = vmatpush1.msra.mxu0 0.0
        %1572 = vmatprep.subr.mxu0 0.0
        %1573 = vmatpush1.msra.mxu0 0.0
        %1574 = vmatprep.subr.mxu0 0.0
        %1575 = vmatpush1.msra.mxu0 0.0
        %1576 = vmatprep.subr.mxu0 0.0
        %1577 = vmatpush1.msra.mxu0 0.0
        %1578 = vmatprep.subr.mxu0 0.0
        %1579 = vmatpush1.msra.mxu0 0.0
        %1580 = vmatprep.subr.mxu0 0.0
        %1581 = vmatpush1.msra.mxu0 0.0
        %1582 = vmatprep.subr.mxu0 0.0
        %1583 = vmatpush1.msra.mxu0 0.0
        %1584 = vmatprep.subr.mxu0 0.0
        %1585 = vmatpush1.msra.mxu0 0.0
        %1586 = vmatprep.subr.mxu0 0.0
        %1587 = vmatpush1.msra.mxu0 0.0
        %1588 = vmatprep.subr.mxu0 0.0
        %1589 = vmatpush1.msra.mxu0 0.0
        %1590 = vmatprep.subr.mxu0 0.0
        %1591 = vmatpush1.msra.mxu0 0.0
        %1592 = vmatprep.subr.mxu0 0.0
        %1593 = vmatpush1.msra.mxu0 0.0
        %1594 = vmatprep.mubr.f32.mxu0 0.0
        %v1595 = vand.u32 %v1160, 4294901760
        %v1596 = vsub.f32 %v1160, %v1595
        %v1597 = vand.u32 %v1596, 4294901760
        %1598 = vmatmul.mubr.f32.gmra.mrb[0].mxu0 %v1597
        %v1599 = vpop.f32.mrb[0].mxu0
        %v1600 = vadd.f32 %v1498, %v1599
        %v1601 = vpop.f32.mrb[0].mxu0
        %1602 = vmatprep.mubr.f32.mxu0 0.0
        %v1603 = vand.u32 %v1163, 4294901760
        %v1604 = vsub.f32 %v1163, %v1603
        %v1605 = vand.u32 %v1604, 4294901760
        %1606 = vmatmul.mubr.f32.gmra.mrb[0].mxu0 %v1605
        %v1607 = vpop.f32.mrb[0].mxu0
        %v1608 = vadd.f32 %v1505, %v1607
        %v1609 = vpop.f32.mrb[0].mxu0
        %1610 = vmatprep.mubr.f32.mxu0 0.0
        %v1611 = vand.u32 %v1166, 4294901760
        %v1612 = vsub.f32 %v1166, %v1611
        %v1613 = vand.u32 %v1612, 4294901760
        %1614 = vmatmul.mubr.f32.gmra.mrb[0].mxu0 %v1613
        %v1615 = vpop.f32.mrb[0].mxu0
        %v1616 = vadd.f32 %v1512, %v1615
        %v1617 = vpop.f32.mrb[0].mxu0
        %1618 = vmatprep.mubr.f32.mxu0 0.0
        %v1619 = vand.u32 %v1169, 4294901760
        %v1620 = vsub.f32 %v1169, %v1619
        %v1621 = vand.u32 %v1620, 4294901760
        %1622 = vmatmul.mubr.f32.gmra.mrb[0].mxu0 %v1621
        %v1623 = vpop.f32.mrb[0].mxu0
        %v1624 = vadd.f32 %v1519, %v1623
        %v1625 = vpop.f32.mrb[0].mxu0
        %1626 = vdwg.mxu0
        %1627 = vmatprep.subr.mxu0 0.0
        %v1628 = vand.u32 %v1150, 4294901760
        %v1629 = vsub.f32 %v1150, %v1628
        %v1630 = vand.u32 %v1629, 4294901760
        %1631 = vmatpush1.msra.mxu0 %v1630
        %1632 = vmatprep.subr.mxu0 0.0
        %v1633 = vand.u32 %v1151, 4294901760
        %v1634 = vsub.f32 %v1151, %v1633
        %v1635 = vand.u32 %v1634, 4294901760
        %1636 = vmatpush1.msra.mxu0 %v1635
        %1637 = vmatprep.subr.mxu0 0.0
        %v1638 = vand.u32 %v1152, 4294901760
        %v1639 = vsub.f32 %v1152, %v1638
        %v1640 = vand.u32 %v1639, 4294901760
        %1641 = vmatpush1.msra.mxu0 %v1640
        %1642 = vmatprep.subr.mxu0 0.0
        %v1643 = vand.u32 %v1153, 4294901760
        %v1644 = vsub.f32 %v1153, %v1643
        %v1645 = vand.u32 %v1644, 4294901760
        %1646 = vmatpush1.msra.mxu0 %v1645
        %1647 = vmatprep.subr.mxu0 0.0
        %v1648 = vand.u32 %v1154, 4294901760
        %v1649 = vsub.f32 %v1154, %v1648
        %v1650 = vand.u32 %v1649, 4294901760
        %1651 = vmatpush1.msra.mxu0 %v1650
        %1652 = vmatprep.subr.mxu0 0.0
        %v1653 = vand.u32 %v1155, 4294901760
        %v1654 = vsub.f32 %v1155, %v1653
        %v1655 = vand.u32 %v1654, 4294901760
        %1656 = vmatpush1.msra.mxu0 %v1655
        %1657 = vmatprep.subr.mxu0 0.0
        %v1658 = vand.u32 %v1156, 4294901760
        %v1659 = vsub.f32 %v1156, %v1658
        %v1660 = vand.u32 %v1659, 4294901760
        %1661 = vmatpush1.msra.mxu0 %v1660
        %1662 = vmatprep.subr.mxu0 0.0
        %v1663 = vand.u32 %v1157, 4294901760
        %v1664 = vsub.f32 %v1157, %v1663
        %v1665 = vand.u32 %v1664, 4294901760
        %1666 = vmatpush1.msra.mxu0 %v1665
        %1667 = vmatprep.subr.mxu0 0.0
        %1668 = vmatpush1.msra.mxu0 0.0
        %1669 = vmatprep.subr.mxu0 0.0
        %1670 = vmatpush1.msra.mxu0 0.0
        %1671 = vmatprep.subr.mxu0 0.0
        %1672 = vmatpush1.msra.mxu0 0.0
        %1673 = vmatprep.subr.mxu0 0.0
        %1674 = vmatpush1.msra.mxu0 0.0
        %1675 = vmatprep.subr.mxu0 0.0
        %1676 = vmatpush1.msra.mxu0 0.0
        %1677 = vmatprep.subr.mxu0 0.0
        %1678 = vmatpush1.msra.mxu0 0.0
        %1679 = vmatprep.subr.mxu0 0.0
        %1680 = vmatpush1.msra.mxu0 0.0
        %1681 = vmatprep.subr.mxu0 0.0
        %1682 = vmatpush1.msra.mxu0 0.0
        %1683 = vmatprep.subr.mxu0 0.0
        %1684 = vmatpush1.msra.mxu0 0.0
        %1685 = vmatprep.subr.mxu0 0.0
        %1686 = vmatpush1.msra.mxu0 0.0
        %1687 = vmatprep.subr.mxu0 0.0
        %1688 = vmatpush1.msra.mxu0 0.0
        %1689 = vmatprep.subr.mxu0 0.0
        %1690 = vmatpush1.msra.mxu0 0.0
        %1691 = vmatprep.subr.mxu0 0.0
        %1692 = vmatpush1.msra.mxu0 0.0
        %1693 = vmatprep.subr.mxu0 0.0
        %1694 = vmatpush1.msra.mxu0 0.0
        %1695 = vmatprep.subr.mxu0 0.0
        %1696 = vmatpush1.msra.mxu0 0.0
        %1697 = vmatprep.subr.mxu0 0.0
        %1698 = vmatpush1.msra.mxu0 0.0
        %1699 = vmatprep.subr.mxu0 0.0
        %1700 = vmatpush1.msra.mxu0 0.0
        %1701 = vmatprep.subr.mxu0 0.0
        %1702 = vmatpush1.msra.mxu0 0.0
        %1703 = vmatprep.subr.mxu0 0.0
        %1704 = vmatpush1.msra.mxu0 0.0
        %1705 = vmatprep.subr.mxu0 0.0
        %1706 = vmatpush1.msra.mxu0 0.0
        %1707 = vmatprep.subr.mxu0 0.0
        %1708 = vmatpush1.msra.mxu0 0.0
        %1709 = vmatprep.subr.mxu0 0.0
        %1710 = vmatpush1.msra.mxu0 0.0
        %1711 = vmatprep.subr.mxu0 0.0
        %1712 = vmatpush1.msra.mxu0 0.0
        %1713 = vmatprep.subr.mxu0 0.0
        %1714 = vmatpush1.msra.mxu0 0.0
        %1715 = vmatprep.mubr.f32.mxu0 0.0
        %v1716 = vand.u32 %v1160, 4294901760
        %1717 = vmatmul.mubr.f32.gmra.mrb[0].mxu0 %v1716
        %v1718 = vpop.f32.mrb[0].mxu0
        %v1719 = vadd.f32 %v1600, %v1718
        %v1720 = vpop.f32.mrb[0].mxu0
        %1721 = vmatprep.mubr.f32.mxu0 0.0
        %v1722 = vand.u32 %v1163, 4294901760
        %1723 = vmatmul.mubr.f32.gmra.mrb[0].mxu0 %v1722
        %v1724 = vpop.f32.mrb[0].mxu0
        %v1725 = vadd.f32 %v1608, %v1724
        %v1726 = vpop.f32.mrb[0].mxu0
        %1727 = vmatprep.mubr.f32.mxu0 0.0
        %v1728 = vand.u32 %v1166, 4294901760
        %1729 = vmatmul.mubr.f32.gmra.mrb[0].mxu0 %v1728
        %v1730 = vpop.f32.mrb[0].mxu0
        %v1731 = vadd.f32 %v1616, %v1730
        %v1732 = vpop.f32.mrb[0].mxu0
        %1733 = vmatprep.mubr.f32.mxu0 0.0
        %v1734 = vand.u32 %v1169, 4294901760
        %1735 = vmatmul.mubr.f32.gmra.mrb[0].mxu0 %v1734
        %v1736 = vpop.f32.mrb[0].mxu0
        %v1737 = vadd.f32 %v1624, %v1736
        %v1738 = vpop.f32.mrb[0].mxu0
        %1739 = vdwg.mxu0
        %1740 = vmatprep.subr.mxu0 0.0
        %v1741 = vand.u32 %v1150, 4294901760
        %1742 = vmatpush1.msra.mxu0 %v1741
        %1743 = vmatprep.subr.mxu0 0.0
        %v1744 = vand.u32 %v1151, 4294901760
        %1745 = vmatpush1.msra.mxu0 %v1744
        %1746 = vmatprep.subr.mxu0 0.0
        %v1747 = vand.u32 %v1152, 4294901760
        %1748 = vmatpush1.msra.mxu0 %v1747
        %1749 = vmatprep.subr.mxu0 0.0
        %v1750 = vand.u32 %v1153, 4294901760
        %1751 = vmatpush1.msra.mxu0 %v1750
        %1752 = vmatprep.subr.mxu0 0.0
        %v1753 = vand.u32 %v1154, 4294901760
        %1754 = vmatpush1.msra.mxu0 %v1753
        %1755 = vmatprep.subr.mxu0 0.0
        %v1756 = vand.u32 %v1155, 4294901760
        %1757 = vmatpush1.msra.mxu0 %v1756
        %1758 = vmatprep.subr.mxu0 0.0
        %v1759 = vand.u32 %v1156, 4294901760
        %1760 = vmatpush1.msra.mxu0 %v1759
        %1761 = vmatprep.subr.mxu0 0.0
        %v1762 = vand.u32 %v1157, 4294901760
        %1763 = vmatpush1.msra.mxu0 %v1762
        %1764 = vmatprep.subr.mxu0 0.0
        %1765 = vmatpush1.msra.mxu0 0.0
        %1766 = vmatprep.subr.mxu0 0.0
        %1767 = vmatpush1.msra.mxu0 0.0
        %1768 = vmatprep.subr.mxu0 0.0
        %1769 = vmatpush1.msra.mxu0 0.0
        %1770 = vmatprep.subr.mxu0 0.0
        %1771 = vmatpush1.msra.mxu0 0.0
        %1772 = vmatprep.subr.mxu0 0.0
        %1773 = vmatpush1.msra.mxu0 0.0
        %1774 = vmatprep.subr.mxu0 0.0
        %1775 = vmatpush1.msra.mxu0 0.0
        %1776 = vmatprep.subr.mxu0 0.0
        %1777 = vmatpush1.msra.mxu0 0.0
        %1778 = vmatprep.subr.mxu0 0.0
        %1779 = vmatpush1.msra.mxu0 0.0
        %1780 = vmatprep.subr.mxu0 0.0
        %1781 = vmatpush1.msra.mxu0 0.0
        %1782 = vmatprep.subr.mxu0 0.0
        %1783 = vmatpush1.msra.mxu0 0.0
        %1784 = vmatprep.subr.mxu0 0.0
        %1785 = vmatpush1.msra.mxu0 0.0
        %1786 = vmatprep.subr.mxu0 0.0
        %1787 = vmatpush1.msra.mxu0 0.0
        %1788 = vmatprep.subr.mxu0 0.0
        %1789 = vmatpush1.msra.mxu0 0.0
        %1790 = vmatprep.subr.mxu0 0.0
        %1791 = vmatpush1.msra.mxu0 0.0
        %1792 = vmatprep.subr.mxu0 0.0
        %1793 = vmatpush1.msra.mxu0 0.0
        %1794 = vmatprep.subr.mxu0 0.0
        %1795 = vmatpush1.msra.mxu0 0.0
        %1796 = vmatprep.subr.mxu0 0.0
        %1797 = vmatpush1.msra.mxu0 0.0
        %1798 = vmatprep.subr.mxu0 0.0
        %1799 = vmatpush1.msra.mxu0 0.0
        %1800 = vmatprep.subr.mxu0 0.0
        %1801 = vmatpush1.msra.mxu0 0.0
        %1802 = vmatprep.subr.mxu0 0.0
        %1803 = vmatpush1.msra.mxu0 0.0
        %1804 = vmatprep.subr.mxu0 0.0
        %1805 = vmatpush1.msra.mxu0 0.0
        %1806 = vmatprep.subr.mxu0 0.0
        %1807 = vmatpush1.msra.mxu0 0.0
        %1808 = vmatprep.subr.mxu0 0.0
        %1809 = vmatpush1.msra.mxu0 0.0
        %1810 = vmatprep.subr.mxu0 0.0
        %1811 = vmatpush1.msra.mxu0 0.0
        %1812 = vmatprep.mubr.f32.mxu0 0.0
        %v1813 = vand.u32 %v1160, 4294901760
        %1814 = vmatmul.mubr.f32.gmra.mrb[0].mxu0 %v1813
        %v1815 = vpop.f32.mrb[0].mxu0
        %v1816 = vadd.f32 %v1719, %v1815
        %v1817 = vpop.f32.mrb[0].mxu0
        %1818 = vmatprep.mubr.f32.mxu0 0.0
        %v1819 = vand.u32 %v1163, 4294901760
        %1820 = vmatmul.mubr.f32.gmra.mrb[0].mxu0 %v1819
        %v1821 = vpop.f32.mrb[0].mxu0
        %v1822 = vadd.f32 %v1725, %v1821
        %v1823 = vpop.f32.mrb[0].mxu0
        %1824 = vmatprep.mubr.f32.mxu0 0.0
        %v1825 = vand.u32 %v1166, 4294901760
        %1826 = vmatmul.mubr.f32.gmra.mrb[0].mxu0 %v1825
        %v1827 = vpop.f32.mrb[0].mxu0
        %v1828 = vadd.f32 %v1731, %v1827
        %v1829 = vpop.f32.mrb[0].mxu0
        %1830 = vmatprep.mubr.f32.mxu0 0.0
        %v1831 = vand.u32 %v1169, 4294901760
        %1832 = vmatmul.mubr.f32.gmra.mrb[0].mxu0 %v1831
        %v1833 = vpop.f32.mrb[0].mxu0
        %v1834 = vadd.f32 %v1737, %v1833
        %v1835 = vpop.f32.mrb[0].mxu0
        %1836 = vdwg.mxu0
        %v1838 = vsel %vm1158, %v1122, 0
        %v1841 = vsel %vm1158, %v1123, 0
        %v1844 = vsel %vm1158, %v1124, 0
        %v1847 = vsel %vm1158, %v1125, 0
        %1849 = vmatprep.subr.mxu0 0.0
        %v1850 = vand.u32 %v1150, 4294901760
        %1851 = vmatpush1.msra.mxu0 %v1850
        %1852 = vmatprep.subr.mxu0 0.0
        %v1853 = vand.u32 %v1151, 4294901760
        %1854 = vmatpush1.msra.mxu0 %v1853
        %1855 = vmatprep.subr.mxu0 0.0
        %v1856 = vand.u32 %v1152, 4294901760
        %1857 = vmatpush1.msra.mxu0 %v1856
        %1858 = vmatprep.subr.mxu0 0.0
        %v1859 = vand.u32 %v1153, 4294901760
        %1860 = vmatpush1.msra.mxu0 %v1859
        %1861 = vmatprep.subr.mxu0 0.0
        %v1862 = vand.u32 %v1154, 4294901760
        %1863 = vmatpush1.msra.mxu0 %v1862
        %1864 = vmatprep.subr.mxu0 0.0
        %v1865 = vand.u32 %v1155, 4294901760
        %1866 = vmatpush1.msra.mxu0 %v1865
        %1867 = vmatprep.subr.mxu0 0.0
        %v1868 = vand.u32 %v1156, 4294901760
        %1869 = vmatpush1.msra.mxu0 %v1868
        %1870 = vmatprep.subr.mxu0 0.0
        %v1871 = vand.u32 %v1157, 4294901760
        %1872 = vmatpush1.msra.mxu0 %v1871
        %1873 = vmatprep.subr.mxu0 0.0
        %1874 = vmatpush1.msra.mxu0 0.0
        %1875 = vmatprep.subr.mxu0 0.0
        %1876 = vmatpush1.msra.mxu0 0.0
        %1877 = vmatprep.subr.mxu0 0.0
        %1878 = vmatpush1.msra.mxu0 0.0
        %1879 = vmatprep.subr.mxu0 0.0
        %1880 = vmatpush1.msra.mxu0 0.0
        %1881 = vmatprep.subr.mxu0 0.0
        %1882 = vmatpush1.msra.mxu0 0.0
        %1883 = vmatprep.subr.mxu0 0.0
        %1884 = vmatpush1.msra.mxu0 0.0
        %1885 = vmatprep.subr.mxu0 0.0
        %1886 = vmatpush1.msra.mxu0 0.0
        %1887 = vmatprep.subr.mxu0 0.0
        %1888 = vmatpush1.msra.mxu0 0.0
        %1889 = vmatprep.subr.mxu0 0.0
        %1890 = vmatpush1.msra.mxu0 0.0
        %1891 = vmatprep.subr.mxu0 0.0
        %1892 = vmatpush1.msra.mxu0 0.0
        %1893 = vmatprep.subr.mxu0 0.0
        %1894 = vmatpush1.msra.mxu0 0.0
        %1895 = vmatprep.subr.mxu0 0.0
        %1896 = vmatpush1.msra.mxu0 0.0
        %1897 = vmatprep.subr.mxu0 0.0
        %1898 = vmatpush1.msra.mxu0 0.0
        %1899 = vmatprep.subr.mxu0 0.0
        %1900 = vmatpush1.msra.mxu0 0.0
        %1901 = vmatprep.subr.mxu0 0.0
        %1902 = vmatpush1.msra.mxu0 0.0
        %1903 = vmatprep.subr.mxu0 0.0
        %1904 = vmatpush1.msra.mxu0 0.0
        %1905 = vmatprep.subr.mxu0 0.0
        %1906 = vmatpush1.msra.mxu0 0.0
        %1907 = vmatprep.subr.mxu0 0.0
        %1908 = vmatpush1.msra.mxu0 0.0
        %1909 = vmatprep.subr.mxu0 0.0
        %1910 = vmatpush1.msra.mxu0 0.0
        %1911 = vmatprep.subr.mxu0 0.0
        %1912 = vmatpush1.msra.mxu0 0.0
        %1913 = vmatprep.subr.mxu0 0.0
        %1914 = vmatpush1.msra.mxu0 0.0
        %1915 = vmatprep.subr.mxu0 0.0
        %1916 = vmatpush1.msra.mxu0 0.0
        %1917 = vmatprep.subr.mxu0 0.0
        %1918 = vmatpush1.msra.mxu0 0.0
        %1919 = vmatprep.subr.mxu0 0.0
        %1920 = vmatpush1.msra.mxu0 0.0
        %1921 = vmatprep.mubr.f32.mxu0 0.0
        %v1922 = vand.u32 %v1838, 4294901760
        %v1923 = vsub.f32 %v1838, %v1922
        %v1924 = vand.u32 %v1923, 4294901760
        %v1925 = vsub.f32 %v1923, %v1924
        %v1926 = vand.u32 %v1925, 4294901760
        %1927 = vmatmul.mubr.f32.gmra.mrb[0].mxu0 %v1926
        %v1928 = vpop.f32.mrb[0].mxu0
        %v1929 = vadd.f32 0.0, %v1928
        %v1930 = vpop.f32.mrb[0].mxu0
        %1931 = vmatprep.mubr.f32.mxu0 0.0
        %v1932 = vand.u32 %v1841, 4294901760
        %v1933 = vsub.f32 %v1841, %v1932
        %v1934 = vand.u32 %v1933, 4294901760
        %v1935 = vsub.f32 %v1933, %v1934
        %v1936 = vand.u32 %v1935, 4294901760
        %1937 = vmatmul.mubr.f32.gmra.mrb[0].mxu0 %v1936
        %v1938 = vpop.f32.mrb[0].mxu0
        %v1939 = vadd.f32 0.0, %v1938
        %v1940 = vpop.f32.mrb[0].mxu0
        %1941 = vmatprep.mubr.f32.mxu0 0.0
        %v1942 = vand.u32 %v1844, 4294901760
        %v1943 = vsub.f32 %v1844, %v1942
        %v1944 = vand.u32 %v1943, 4294901760
        %v1945 = vsub.f32 %v1943, %v1944
        %v1946 = vand.u32 %v1945, 4294901760
        %1947 = vmatmul.mubr.f32.gmra.mrb[0].mxu0 %v1946
        %v1948 = vpop.f32.mrb[0].mxu0
        %v1949 = vadd.f32 0.0, %v1948
        %v1950 = vpop.f32.mrb[0].mxu0
        %1951 = vmatprep.mubr.f32.mxu0 0.0
        %v1952 = vand.u32 %v1847, 4294901760
        %v1953 = vsub.f32 %v1847, %v1952
        %v1954 = vand.u32 %v1953, 4294901760
        %v1955 = vsub.f32 %v1953, %v1954
        %v1956 = vand.u32 %v1955, 4294901760
        %1957 = vmatmul.mubr.f32.gmra.mrb[0].mxu0 %v1956
        %v1958 = vpop.f32.mrb[0].mxu0
        %v1959 = vadd.f32 0.0, %v1958
        %v1960 = vpop.f32.mrb[0].mxu0
        %1961 = vdwg.mxu0
        %1962 = vmatprep.subr.mxu0 0.0
        %v1963 = vand.u32 %v1150, 4294901760
        %v1964 = vsub.f32 %v1150, %v1963
        %v1965 = vand.u32 %v1964, 4294901760
        %v1966 = vsub.f32 %v1964, %v1965
        %v1967 = vand.u32 %v1966, 4294901760
        %1968 = vmatpush1.msra.mxu0 %v1967
        %1969 = vmatprep.subr.mxu0 0.0
        %v1970 = vand.u32 %v1151, 4294901760
        %v1971 = vsub.f32 %v1151, %v1970
        %v1972 = vand.u32 %v1971, 4294901760
        %v1973 = vsub.f32 %v1971, %v1972
        %v1974 = vand.u32 %v1973, 4294901760
        %1975 = vmatpush1.msra.mxu0 %v1974
        %1976 = vmatprep.subr.mxu0 0.0
        %v1977 = vand.u32 %v1152, 4294901760
        %v1978 = vsub.f32 %v1152, %v1977
        %v1979 = vand.u32 %v1978, 4294901760
        %v1980 = vsub.f32 %v1978, %v1979
        %v1981 = vand.u32 %v1980, 4294901760
        %1982 = vmatpush1.msra.mxu0 %v1981
        %1983 = vmatprep.subr.mxu0 0.0
        %v1984 = vand.u32 %v1153, 4294901760
        %v1985 = vsub.f32 %v1153, %v1984
        %v1986 = vand.u32 %v1985, 4294901760
        %v1987 = vsub.f32 %v1985, %v1986
        %v1988 = vand.u32 %v1987, 4294901760
        %1989 = vmatpush1.msra.mxu0 %v1988
        %1990 = vmatprep.subr.mxu0 0.0
        %v1991 = vand.u32 %v1154, 4294901760
        %v1992 = vsub.f32 %v1154, %v1991
        %v1993 = vand.u32 %v1992, 4294901760
        %v1994 = vsub.f32 %v1992, %v1993
        %v1995 = vand.u32 %v1994, 4294901760
        %1996 = vmatpush1.msra.mxu0 %v1995
        %1997 = vmatprep.subr.mxu0 0.0
        %v1998 = vand.u32 %v1155, 4294901760
        %v1999 = vsub.f32 %v1155, %v1998
        %v2000 = vand.u32 %v1999, 4294901760
        %v2001 = vsub.f32 %v1999, %v2000
        %v2002 = vand.u32 %v2001, 4294901760
        %2003 = vmatpush1.msra.mxu0 %v2002
        %2004 = vmatprep.subr.mxu0 0.0
        %v2005 = vand.u32 %v1156, 4294901760
        %v2006 = vsub.f32 %v1156, %v2005
        %v2007 = vand.u32 %v2006, 4294901760
        %v2008 = vsub.f32 %v2006, %v2007
        %v2009 = vand.u32 %v2008, 4294901760
        %2010 = vmatpush1.msra.mxu0 %v2009
        %2011 = vmatprep.subr.mxu0 0.0
        %v2012 = vand.u32 %v1157, 4294901760
        %v2013 = vsub.f32 %v1157, %v2012
        %v2014 = vand.u32 %v2013, 4294901760
        %v2015 = vsub.f32 %v2013, %v2014
        %v2016 = vand.u32 %v2015, 4294901760
        %2017 = vmatpush1.msra.mxu0 %v2016
        %2018 = vmatprep.subr.mxu0 0.0
        %2019 = vmatpush1.msra.mxu0 0.0
        %2020 = vmatprep.subr.mxu0 0.0
        %2021 = vmatpush1.msra.mxu0 0.0
        %2022 = vmatprep.subr.mxu0 0.0
        %2023 = vmatpush1.msra.mxu0 0.0
        %2024 = vmatprep.subr.mxu0 0.0
        %2025 = vmatpush1.msra.mxu0 0.0
        %2026 = vmatprep.subr.mxu0 0.0
        %2027 = vmatpush1.msra.mxu0 0.0
        %2028 = vmatprep.subr.mxu0 0.0
        %2029 = vmatpush1.msra.mxu0 0.0
        %2030 = vmatprep.subr.mxu0 0.0
        %2031 = vmatpush1.msra.mxu0 0.0
        %2032 = vmatprep.subr.mxu0 0.0
        %2033 = vmatpush1.msra.mxu0 0.0
        %2034 = vmatprep.subr.mxu0 0.0
        %2035 = vmatpush1.msra.mxu0 0.0
        %2036 = vmatprep.subr.mxu0 0.0
        %2037 = vmatpush1.msra.mxu0 0.0
        %2038 = vmatprep.subr.mxu0 0.0
        %2039 = vmatpush1.msra.mxu0 0.0
        %2040 = vmatprep.subr.mxu0 0.0
        %2041 = vmatpush1.msra.mxu0 0.0
        %2042 = vmatprep.subr.mxu0 0.0
        %2043 = vmatpush1.msra.mxu0 0.0
        %2044 = vmatprep.subr.mxu0 0.0
        %2045 = vmatpush1.msra.mxu0 0.0
        %2046 = vmatprep.subr.mxu0 0.0
        %2047 = vmatpush1.msra.mxu0 0.0
        %2048 = vmatprep.subr.mxu0 0.0
        %2049 = vmatpush1.msra.mxu0 0.0
        %2050 = vmatprep.subr.mxu0 0.0
        %2051 = vmatpush1.msra.mxu0 0.0
        %2052 = vmatprep.subr.mxu0 0.0
        %2053 = vmatpush1.msra.mxu0 0.0
        %2054 = vmatprep.subr.mxu0 0.0
        %2055 = vmatpush1.msra.mxu0 0.0
        %2056 = vmatprep.subr.mxu0 0.0
        %2057 = vmatpush1.msra.mxu0 0.0
        %2058 = vmatprep.subr.mxu0 0.0
        %2059 = vmatpush1.msra.mxu0 0.0
        %2060 = vmatprep.subr.mxu0 0.0
        %2061 = vmatpush1.msra.mxu0 0.0
        %2062 = vmatprep.subr.mxu0 0.0
        %2063 = vmatpush1.msra.mxu0 0.0
        %2064 = vmatprep.subr.mxu0 0.0
        %2065 = vmatpush1.msra.mxu0 0.0
        %2066 = vmatprep.mubr.f32.mxu0 0.0
        %v2067 = vand.u32 %v1838, 4294901760
        %2068 = vmatmul.mubr.f32.gmra.mrb[0].mxu0 %v2067
        %v2069 = vpop.f32.mrb[0].mxu0
        %v2070 = vadd.f32 %v1929, %v2069
        %v2071 = vpop.f32.mrb[0].mxu0
        %2072 = vmatprep.mubr.f32.mxu0 0.0
        %v2073 = vand.u32 %v1841, 4294901760
        %2074 = vmatmul.mubr.f32.gmra.mrb[0].mxu0 %v2073
        %v2075 = vpop.f32.mrb[0].mxu0
        %v2076 = vadd.f32 %v1939, %v2075
        %v2077 = vpop.f32.mrb[0].mxu0
        %2078 = vmatprep.mubr.f32.mxu0 0.0
        %v2079 = vand.u32 %v1844, 4294901760
        %2080 = vmatmul.mubr.f32.gmra.mrb[0].mxu0 %v2079
        %v2081 = vpop.f32.mrb[0].mxu0
        %v2082 = vadd.f32 %v1949, %v2081
        %v2083 = vpop.f32.mrb[0].mxu0
        %2084 = vmatprep.mubr.f32.mxu0 0.0
        %v2085 = vand.u32 %v1847, 4294901760
        %2086 = vmatmul.mubr.f32.gmra.mrb[0].mxu0 %v2085
        %v2087 = vpop.f32.mrb[0].mxu0
        %v2088 = vadd.f32 %v1959, %v2087
        %v2089 = vpop.f32.mrb[0].mxu0
        %2090 = vdwg.mxu0
        %2091 = vmatprep.subr.mxu0 0.0
        %v2092 = vand.u32 %v1150, 4294901760
        %v2093 = vsub.f32 %v1150, %v2092
        %2094 = vmatpush1.msra.mxu0 %v2093
        %2095 = vmatprep.subr.mxu0 0.0
        %v2096 = vand.u32 %v1151, 4294901760
        %v2097 = vsub.f32 %v1151, %v2096
        %2098 = vmatpush1.msra.mxu0 %v2097
        %2099 = vmatprep.subr.mxu0 0.0
        %v2100 = vand.u32 %v1152, 4294901760
        %v2101 = vsub.f32 %v1152, %v2100
        %2102 = vmatpush1.msra.mxu0 %v2101
        %2103 = vmatprep.subr.mxu0 0.0
        %v2104 = vand.u32 %v1153, 4294901760
        %v2105 = vsub.f32 %v1153, %v2104
        %2106 = vmatpush1.msra.mxu0 %v2105
        %2107 = vmatprep.subr.mxu0 0.0
        %v2108 = vand.u32 %v1154, 4294901760
        %v2109 = vsub.f32 %v1154, %v2108
        %2110 = vmatpush1.msra.mxu0 %v2109
        %2111 = vmatprep.subr.mxu0 0.0
        %v2112 = vand.u32 %v1155, 4294901760
        %v2113 = vsub.f32 %v1155, %v2112
        %2114 = vmatpush1.msra.mxu0 %v2113
        %2115 = vmatprep.subr.mxu0 0.0
        %v2116 = vand.u32 %v1156, 4294901760
        %v2117 = vsub.f32 %v1156, %v2116
        %2118 = vmatpush1.msra.mxu0 %v2117
        %2119 = vmatprep.subr.mxu0 0.0
        %v2120 = vand.u32 %v1157, 4294901760
        %v2121 = vsub.f32 %v1157, %v2120
        %2122 = vmatpush1.msra.mxu0 %v2121
        %2123 = vmatprep.subr.mxu0 0.0
        %2124 = vmatpush1.msra.mxu0 0.0
        %2125 = vmatprep.subr.mxu0 0.0
        %2126 = vmatpush1.msra.mxu0 0.0
        %2127 = vmatprep.subr.mxu0 0.0
        %2128 = vmatpush1.msra.mxu0 0.0
        %2129 = vmatprep.subr.mxu0 0.0
        %2130 = vmatpush1.msra.mxu0 0.0
        %2131 = vmatprep.subr.mxu0 0.0
        %2132 = vmatpush1.msra.mxu0 0.0
        %2133 = vmatprep.subr.mxu0 0.0
        %2134 = vmatpush1.msra.mxu0 0.0
        %2135 = vmatprep.subr.mxu0 0.0
        %2136 = vmatpush1.msra.mxu0 0.0
        %2137 = vmatprep.subr.mxu0 0.0
        %2138 = vmatpush1.msra.mxu0 0.0
        %2139 = vmatprep.subr.mxu0 0.0
        %2140 = vmatpush1.msra.mxu0 0.0
        %2141 = vmatprep.subr.mxu0 0.0
        %2142 = vmatpush1.msra.mxu0 0.0
        %2143 = vmatprep.subr.mxu0 0.0
        %2144 = vmatpush1.msra.mxu0 0.0
        %2145 = vmatprep.subr.mxu0 0.0
        %2146 = vmatpush1.msra.mxu0 0.0
        %2147 = vmatprep.subr.mxu0 0.0
        %2148 = vmatpush1.msra.mxu0 0.0
        %2149 = vmatprep.subr.mxu0 0.0
        %2150 = vmatpush1.msra.mxu0 0.0
        %2151 = vmatprep.subr.mxu0 0.0
        %2152 = vmatpush1.msra.mxu0 0.0
        %2153 = vmatprep.subr.mxu0 0.0
        %2154 = vmatpush1.msra.mxu0 0.0
        %2155 = vmatprep.subr.mxu0 0.0
        %2156 = vmatpush1.msra.mxu0 0.0
        %2157 = vmatprep.subr.mxu0 0.0
        %2158 = vmatpush1.msra.mxu0 0.0
        %2159 = vmatprep.subr.mxu0 0.0
        %2160 = vmatpush1.msra.mxu0 0.0
        %2161 = vmatprep.subr.mxu0 0.0
        %2162 = vmatpush1.msra.mxu0 0.0
        %2163 = vmatprep.subr.mxu0 0.0
        %2164 = vmatpush1.msra.mxu0 0.0
        %2165 = vmatprep.subr.mxu0 0.0
        %2166 = vmatpush1.msra.mxu0 0.0
        %2167 = vmatprep.subr.mxu0 0.0
        %2168 = vmatpush1.msra.mxu0 0.0
        %2169 = vmatprep.subr.mxu0 0.0
        %2170 = vmatpush1.msra.mxu0 0.0
        %2171 = vmatprep.mubr.f32.mxu0 0.0
        %v2172 = vand.u32 %v1838, 4294901760
        %v2173 = vsub.f32 %v1838, %v2172
        %2174 = vmatmul.mubr.f32.gmra.mrb[0].mxu0 %v2173
        %v2175 = vpop.f32.mrb[0].mxu0
        %v2176 = vadd.f32 %v2070, %v2175
        %v2177 = vpop.f32.mrb[0].mxu0
        %2178 = vmatprep.mubr.f32.mxu0 0.0
        %v2179 = vand.u32 %v1841, 4294901760
        %v2180 = vsub.f32 %v1841, %v2179
        %2181 = vmatmul.mubr.f32.gmra.mrb[0].mxu0 %v2180
        %v2182 = vpop.f32.mrb[0].mxu0
        %v2183 = vadd.f32 %v2076, %v2182
        %v2184 = vpop.f32.mrb[0].mxu0
        %2185 = vmatprep.mubr.f32.mxu0 0.0
        %v2186 = vand.u32 %v1844, 4294901760
        %v2187 = vsub.f32 %v1844, %v2186
        %2188 = vmatmul.mubr.f32.gmra.mrb[0].mxu0 %v2187
        %v2189 = vpop.f32.mrb[0].mxu0
        %v2190 = vadd.f32 %v2082, %v2189
        %v2191 = vpop.f32.mrb[0].mxu0
        %2192 = vmatprep.mubr.f32.mxu0 0.0
        %v2193 = vand.u32 %v1847, 4294901760
        %v2194 = vsub.f32 %v1847, %v2193
        %2195 = vmatmul.mubr.f32.gmra.mrb[0].mxu0 %v2194
        %v2196 = vpop.f32.mrb[0].mxu0
        %v2197 = vadd.f32 %v2088, %v2196
        %v2198 = vpop.f32.mrb[0].mxu0
        %2199 = vdwg.mxu0
        %2200 = vmatprep.subr.mxu0 0.0
        %v2201 = vand.u32 %v1150, 4294901760
        %2202 = vmatpush1.msra.mxu0 %v2201
        %2203 = vmatprep.subr.mxu0 0.0
        %v2204 = vand.u32 %v1151, 4294901760
        %2205 = vmatpush1.msra.mxu0 %v2204
        %2206 = vmatprep.subr.mxu0 0.0
        %v2207 = vand.u32 %v1152, 4294901760
        %2208 = vmatpush1.msra.mxu0 %v2207
        %2209 = vmatprep.subr.mxu0 0.0
        %v2210 = vand.u32 %v1153, 4294901760
        %2211 = vmatpush1.msra.mxu0 %v2210
        %2212 = vmatprep.subr.mxu0 0.0
        %v2213 = vand.u32 %v1154, 4294901760
        %2214 = vmatpush1.msra.mxu0 %v2213
        %2215 = vmatprep.subr.mxu0 0.0
        %v2216 = vand.u32 %v1155, 4294901760
        %2217 = vmatpush1.msra.mxu0 %v2216
        %2218 = vmatprep.subr.mxu0 0.0
        %v2219 = vand.u32 %v1156, 4294901760
        %2220 = vmatpush1.msra.mxu0 %v2219
        %2221 = vmatprep.subr.mxu0 0.0
        %v2222 = vand.u32 %v1157, 4294901760
        %2223 = vmatpush1.msra.mxu0 %v2222
        %2224 = vmatprep.subr.mxu0 0.0
        %2225 = vmatpush1.msra.mxu0 0.0
        %2226 = vmatprep.subr.mxu0 0.0
        %2227 = vmatpush1.msra.mxu0 0.0
        %2228 = vmatprep.subr.mxu0 0.0
        %2229 = vmatpush1.msra.mxu0 0.0
        %2230 = vmatprep.subr.mxu0 0.0
        %2231 = vmatpush1.msra.mxu0 0.0
        %2232 = vmatprep.subr.mxu0 0.0
        %2233 = vmatpush1.msra.mxu0 0.0
        %2234 = vmatprep.subr.mxu0 0.0
        %2235 = vmatpush1.msra.mxu0 0.0
        %2236 = vmatprep.subr.mxu0 0.0
        %2237 = vmatpush1.msra.mxu0 0.0
        %2238 = vmatprep.subr.mxu0 0.0
        %2239 = vmatpush1.msra.mxu0 0.0
        %2240 = vmatprep.subr.mxu0 0.0
        %2241 = vmatpush1.msra.mxu0 0.0
        %2242 = vmatprep.subr.mxu0 0.0
        %2243 = vmatpush1.msra.mxu0 0.0
        %2244 = vmatprep.subr.mxu0 0.0
        %2245 = vmatpush1.msra.mxu0 0.0
        %2246 = vmatprep.subr.mxu0 0.0
        %2247 = vmatpush1.msra.mxu0 0.0
        %2248 = vmatprep.subr.mxu0 0.0
        %2249 = vmatpush1.msra.mxu0 0.0
        %2250 = vmatprep.subr.mxu0 0.0
        %2251 = vmatpush1.msra.mxu0 0.0
        %2252 = vmatprep.subr.mxu0 0.0
        %2253 = vmatpush1.msra.mxu0 0.0
        %2254 = vmatprep.subr.mxu0 0.0
        %2255 = vmatpush1.msra.mxu0 0.0
        %2256 = vmatprep.subr.mxu0 0.0
        %2257 = vmatpush1.msra.mxu0 0.0
        %2258 = vmatprep.subr.mxu0 0.0
        %2259 = vmatpush1.msra.mxu0 0.0
        %2260 = vmatprep.subr.mxu0 0.0
        %2261 = vmatpush1.msra.mxu0 0.0
        %2262 = vmatprep.subr.mxu0 0.0
        %2263 = vmatpush1.msra.mxu0 0.0
        %2264 = vmatprep.subr.mxu0 0.0
        %2265 = vmatpush1.msra.mxu0 0.0
        %2266 = vmatprep.subr.mxu0 0.0
        %2267 = vmatpush1.msra.mxu0 0.0
        %2268 = vmatprep.subr.mxu0 0.0
        %2269 = vmatpush1.msra.mxu0 0.0
        %2270 = vmatprep.subr.mxu0 0.0
        %2271 = vmatpush1.msra.mxu0 0.0
        %2272 = vmatprep.mubr.f32.mxu0 0.0
        %v2273 = vand.u32 %v1838, 4294901760
        %v2274 = vsub.f32 %v1838, %v2273
        %v2275 = vand.u32 %v2274, 4294901760
        %2276 = vmatmul.mubr.f32.gmra.mrb[0].mxu0 %v2275
        %v2277 = vpop.f32.mrb[0].mxu0
        %v2278 = vadd.f32 %v2176, %v2277
        %v2279 = vpop.f32.mrb[0].mxu0
        %2280 = vmatprep.mubr.f32.mxu0 0.0
        %v2281 = vand.u32 %v1841, 4294901760
        %v2282 = vsub.f32 %v1841, %v2281
        %v2283 = vand.u32 %v2282, 4294901760
        %2284 = vmatmul.mubr.f32.gmra.mrb[0].mxu0 %v2283
        %v2285 = vpop.f32.mrb[0].mxu0
        %v2286 = vadd.f32 %v2183, %v2285
        %v2287 = vpop.f32.mrb[0].mxu0
        %2288 = vmatprep.mubr.f32.mxu0 0.0
        %v2289 = vand.u32 %v1844, 4294901760
        %v2290 = vsub.f32 %v1844, %v2289
        %v2291 = vand.u32 %v2290, 4294901760
        %2292 = vmatmul.mubr.f32.gmra.mrb[0].mxu0 %v2291
        %v2293 = vpop.f32.mrb[0].mxu0
        %v2294 = vadd.f32 %v2190, %v2293
        %v2295 = vpop.f32.mrb[0].mxu0
        %2296 = vmatprep.mubr.f32.mxu0 0.0
        %v2297 = vand.u32 %v1847, 4294901760
        %v2298 = vsub.f32 %v1847, %v2297
        %v2299 = vand.u32 %v2298, 4294901760
        %2300 = vmatmul.mubr.f32.gmra.mrb[0].mxu0 %v2299
        %v2301 = vpop.f32.mrb[0].mxu0
        %v2302 = vadd.f32 %v2197, %v2301
        %v2303 = vpop.f32.mrb[0].mxu0
        %2304 = vdwg.mxu0
        %2305 = vmatprep.subr.mxu0 0.0
        %v2306 = vand.u32 %v1150, 4294901760
        %v2307 = vsub.f32 %v1150, %v2306
        %v2308 = vand.u32 %v2307, 4294901760
        %2309 = vmatpush1.msra.mxu0 %v2308
        %2310 = vmatprep.subr.mxu0 0.0
        %v2311 = vand.u32 %v1151, 4294901760
        %v2312 = vsub.f32 %v1151, %v2311
        %v2313 = vand.u32 %v2312, 4294901760
        %2314 = vmatpush1.msra.mxu0 %v2313
        %2315 = vmatprep.subr.mxu0 0.0
        %v2316 = vand.u32 %v1152, 4294901760
        %v2317 = vsub.f32 %v1152, %v2316
        %v2318 = vand.u32 %v2317, 4294901760
        %2319 = vmatpush1.msra.mxu0 %v2318
        %2320 = vmatprep.subr.mxu0 0.0
        %v2321 = vand.u32 %v1153, 4294901760
        %v2322 = vsub.f32 %v1153, %v2321
        %v2323 = vand.u32 %v2322, 4294901760
        %2324 = vmatpush1.msra.mxu0 %v2323
        %2325 = vmatprep.subr.mxu0 0.0
        %v2326 = vand.u32 %v1154, 4294901760
        %v2327 = vsub.f32 %v1154, %v2326
        %v2328 = vand.u32 %v2327, 4294901760
        %2329 = vmatpush1.msra.mxu0 %v2328
        %2330 = vmatprep.subr.mxu0 0.0
        %v2331 = vand.u32 %v1155, 4294901760
        %v2332 = vsub.f32 %v1155, %v2331
        %v2333 = vand.u32 %v2332, 4294901760
        %2334 = vmatpush1.msra.mxu0 %v2333
        %2335 = vmatprep.subr.mxu0 0.0
        %v2336 = vand.u32 %v1156, 4294901760
        %v2337 = vsub.f32 %v1156, %v2336
        %v2338 = vand.u32 %v2337, 4294901760
        %2339 = vmatpush1.msra.mxu0 %v2338
        %2340 = vmatprep.subr.mxu0 0.0
        %v2341 = vand.u32 %v1157, 4294901760
        %v2342 = vsub.f32 %v1157, %v2341
        %v2343 = vand.u32 %v2342, 4294901760
        %2344 = vmatpush1.msra.mxu0 %v2343
        %2345 = vmatprep.subr.mxu0 0.0
        %2346 = vmatpush1.msra.mxu0 0.0
        %2347 = vmatprep.subr.mxu0 0.0
        %2348 = vmatpush1.msra.mxu0 0.0
        %2349 = vmatprep.subr.mxu0 0.0
        %2350 = vmatpush1.msra.mxu0 0.0
        %2351 = vmatprep.subr.mxu0 0.0
        %2352 = vmatpush1.msra.mxu0 0.0
        %2353 = vmatprep.subr.mxu0 0.0
        %2354 = vmatpush1.msra.mxu0 0.0
        %2355 = vmatprep.subr.mxu0 0.0
        %2356 = vmatpush1.msra.mxu0 0.0
        %2357 = vmatprep.subr.mxu0 0.0
        %2358 = vmatpush1.msra.mxu0 0.0
        %2359 = vmatprep.subr.mxu0 0.0
        %2360 = vmatpush1.msra.mxu0 0.0
        %2361 = vmatprep.subr.mxu0 0.0
        %2362 = vmatpush1.msra.mxu0 0.0
        %2363 = vmatprep.subr.mxu0 0.0
        %2364 = vmatpush1.msra.mxu0 0.0
        %2365 = vmatprep.subr.mxu0 0.0
        %2366 = vmatpush1.msra.mxu0 0.0
        %2367 = vmatprep.subr.mxu0 0.0
        %2368 = vmatpush1.msra.mxu0 0.0
        %2369 = vmatprep.subr.mxu0 0.0
        %2370 = vmatpush1.msra.mxu0 0.0
        %2371 = vmatprep.subr.mxu0 0.0
        %2372 = vmatpush1.msra.mxu0 0.0
        %2373 = vmatprep.subr.mxu0 0.0
        %2374 = vmatpush1.msra.mxu0 0.0
        %2375 = vmatprep.subr.mxu0 0.0
        %2376 = vmatpush1.msra.mxu0 0.0
        %2377 = vmatprep.subr.mxu0 0.0
        %2378 = vmatpush1.msra.mxu0 0.0
        %2379 = vmatprep.subr.mxu0 0.0
        %2380 = vmatpush1.msra.mxu0 0.0
        %2381 = vmatprep.subr.mxu0 0.0
        %2382 = vmatpush1.msra.mxu0 0.0
        %2383 = vmatprep.subr.mxu0 0.0
        %2384 = vmatpush1.msra.mxu0 0.0
        %2385 = vmatprep.subr.mxu0 0.0
        %2386 = vmatpush1.msra.mxu0 0.0
        %2387 = vmatprep.subr.mxu0 0.0
        %2388 = vmatpush1.msra.mxu0 0.0
        %2389 = vmatprep.subr.mxu0 0.0
        %2390 = vmatpush1.msra.mxu0 0.0
        %2391 = vmatprep.subr.mxu0 0.0
        %2392 = vmatpush1.msra.mxu0 0.0
        %2393 = vmatprep.mubr.f32.mxu0 0.0
        %v2394 = vand.u32 %v1838, 4294901760
        %2395 = vmatmul.mubr.f32.gmra.mrb[0].mxu0 %v2394
        %v2396 = vpop.f32.mrb[0].mxu0
        %v2397 = vadd.f32 %v2278, %v2396
        %v2398 = vpop.f32.mrb[0].mxu0
        %2399 = vmatprep.mubr.f32.mxu0 0.0
        %v2400 = vand.u32 %v1841, 4294901760
        %2401 = vmatmul.mubr.f32.gmra.mrb[0].mxu0 %v2400
        %v2402 = vpop.f32.mrb[0].mxu0
        %v2403 = vadd.f32 %v2286, %v2402
        %v2404 = vpop.f32.mrb[0].mxu0
        %2405 = vmatprep.mubr.f32.mxu0 0.0
        %v2406 = vand.u32 %v1844, 4294901760
        %2407 = vmatmul.mubr.f32.gmra.mrb[0].mxu0 %v2406
        %v2408 = vpop.f32.mrb[0].mxu0
        %v2409 = vadd.f32 %v2294, %v2408
        %v2410 = vpop.f32.mrb[0].mxu0
        %2411 = vmatprep.mubr.f32.mxu0 0.0
        %v2412 = vand.u32 %v1847, 4294901760
        %2413 = vmatmul.mubr.f32.gmra.mrb[0].mxu0 %v2412
        %v2414 = vpop.f32.mrb[0].mxu0
        %v2415 = vadd.f32 %v2302, %v2414
        %v2416 = vpop.f32.mrb[0].mxu0
        %2417 = vdwg.mxu0
        %2418 = vmatprep.subr.mxu0 0.0
        %v2419 = vand.u32 %v1150, 4294901760
        %2420 = vmatpush1.msra.mxu0 %v2419
        %2421 = vmatprep.subr.mxu0 0.0
        %v2422 = vand.u32 %v1151, 4294901760
        %2423 = vmatpush1.msra.mxu0 %v2422
        %2424 = vmatprep.subr.mxu0 0.0
        %v2425 = vand.u32 %v1152, 4294901760
        %2426 = vmatpush1.msra.mxu0 %v2425
        %2427 = vmatprep.subr.mxu0 0.0
        %v2428 = vand.u32 %v1153, 4294901760
        %2429 = vmatpush1.msra.mxu0 %v2428
        %2430 = vmatprep.subr.mxu0 0.0
        %v2431 = vand.u32 %v1154, 4294901760
        %2432 = vmatpush1.msra.mxu0 %v2431
        %2433 = vmatprep.subr.mxu0 0.0
        %v2434 = vand.u32 %v1155, 4294901760
        %2435 = vmatpush1.msra.mxu0 %v2434
        %2436 = vmatprep.subr.mxu0 0.0
        %v2437 = vand.u32 %v1156, 4294901760
        %2438 = vmatpush1.msra.mxu0 %v2437
        %2439 = vmatprep.subr.mxu0 0.0
        %v2440 = vand.u32 %v1157, 4294901760
        %2441 = vmatpush1.msra.mxu0 %v2440
        %2442 = vmatprep.subr.mxu0 0.0
        %2443 = vmatpush1.msra.mxu0 0.0
        %2444 = vmatprep.subr.mxu0 0.0
        %2445 = vmatpush1.msra.mxu0 0.0
        %2446 = vmatprep.subr.mxu0 0.0
        %2447 = vmatpush1.msra.mxu0 0.0
        %2448 = vmatprep.subr.mxu0 0.0
        %2449 = vmatpush1.msra.mxu0 0.0
        %2450 = vmatprep.subr.mxu0 0.0
        %2451 = vmatpush1.msra.mxu0 0.0
        %2452 = vmatprep.subr.mxu0 0.0
        %2453 = vmatpush1.msra.mxu0 0.0
        %2454 = vmatprep.subr.mxu0 0.0
        %2455 = vmatpush1.msra.mxu0 0.0
        %2456 = vmatprep.subr.mxu0 0.0
        %2457 = vmatpush1.msra.mxu0 0.0
        %2458 = vmatprep.subr.mxu0 0.0
        %2459 = vmatpush1.msra.mxu0 0.0
        %2460 = vmatprep.subr.mxu0 0.0
        %2461 = vmatpush1.msra.mxu0 0.0
        %2462 = vmatprep.subr.mxu0 0.0
        %2463 = vmatpush1.msra.mxu0 0.0
        %2464 = vmatprep.subr.mxu0 0.0
        %2465 = vmatpush1.msra.mxu0 0.0
        %2466 = vmatprep.subr.mxu0 0.0
        %2467 = vmatpush1.msra.mxu0 0.0
        %2468 = vmatprep.subr.mxu0 0.0
        %2469 = vmatpush1.msra.mxu0 0.0
        %2470 = vmatprep.subr.mxu0 0.0
        %2471 = vmatpush1.msra.mxu0 0.0
        %2472 = vmatprep.subr.mxu0 0.0
        %2473 = vmatpush1.msra.mxu0 0.0
        %2474 = vmatprep.subr.mxu0 0.0
        %2475 = vmatpush1.msra.mxu0 0.0
        %2476 = vmatprep.subr.mxu0 0.0
        %2477 = vmatpush1.msra.mxu0 0.0
        %2478 = vmatprep.subr.mxu0 0.0
        %2479 = vmatpush1.msra.mxu0 0.0
        %2480 = vmatprep.subr.mxu0 0.0
        %2481 = vmatpush1.msra.mxu0 0.0
        %2482 = vmatprep.subr.mxu0 0.0
        %2483 = vmatpush1.msra.mxu0 0.0
        %2484 = vmatprep.subr.mxu0 0.0
        %2485 = vmatpush1.msra.mxu0 0.0
        %2486 = vmatprep.subr.mxu0 0.0
        %2487 = vmatpush1.msra.mxu0 0.0
        %2488 = vmatprep.subr.mxu0 0.0
        %2489 = vmatpush1.msra.mxu0 0.0
        %2490 = vmatprep.mubr.f32.mxu0 0.0
        %v2491 = vand.u32 %v1838, 4294901760
        %2492 = vmatmul.mubr.f32.gmra.mrb[0].mxu0 %v2491
        %v2493 = vpop.f32.mrb[0].mxu0
        %v2494 = vadd.f32 %v2397, %v2493
        %v2495 = vpop.f32.mrb[0].mxu0
        %2496 = vmatprep.mubr.f32.mxu0 0.0
        %v2497 = vand.u32 %v1841, 4294901760
        %2498 = vmatmul.mubr.f32.gmra.mrb[0].mxu0 %v2497
        %v2499 = vpop.f32.mrb[0].mxu0
        %v2500 = vadd.f32 %v2403, %v2499
        %v2501 = vpop.f32.mrb[0].mxu0
        %2502 = vmatprep.mubr.f32.mxu0 0.0
        %v2503 = vand.u32 %v1844, 4294901760
        %2504 = vmatmul.mubr.f32.gmra.mrb[0].mxu0 %v2503
        %v2505 = vpop.f32.mrb[0].mxu0
        %v2506 = vadd.f32 %v2409, %v2505
        %v2507 = vpop.f32.mrb[0].mxu0
        %2508 = vmatprep.mubr.f32.mxu0 0.0
        %v2509 = vand.u32 %v1847, 4294901760
        %2510 = vmatmul.mubr.f32.gmra.mrb[0].mxu0 %v2509
        %v2511 = vpop.f32.mrb[0].mxu0
        %v2512 = vadd.f32 %v2415, %v2511
        %v2513 = vpop.f32.mrb[0].mxu0
        %2514 = vdwg.mxu0
        %v2515 = vmul.f32 %v1816, %v2494
        %v2516 = vmul.f32 %v1822, %v2500
        %v2517 = vmul.f32 %v1828, %v2506
        %v2518 = vmul.f32 %v1834, %v2512
        %v2519 = vmul.f32 %v2515, %v1146
        %v2520 = vmul.f32 %v2516, %v1147
        %v2521 = vmul.f32 %v2517, %v1148
        %v2522 = vmul.f32 %v2518, %v1149
        %vm2523 = vcmask 48128
        %v2524 = vsel %vm2523, %v2519, 0.0
        %2525 = vadd.xlane.f32.xlu0 %v2524
        %v2526 = vpop.xlane.xlu0 %2525
        %v2527 = vsel %vm2523, %v2520, 0.0
        %2528 = vadd.xlane.f32.xlu0 %v2527
        %v2529 = vpop.xlane.xlu0 %2528
        %v2530 = vsel %vm2523, %v2521, 0.0
        %2531 = vadd.xlane.f32.xlu0 %v2530
        %v2532 = vpop.xlane.xlu0 %2531
        %v2533 = vsel %vm2523, %v2522, 0.0
        %2534 = vadd.xlane.f32.xlu0 %v2533
        %v2535 = vpop.xlane.xlu0 %2534
        %v2536 = vsel %vm1072, %v2526, -1e+30
        %v2537 = vsel %vm1073, %v2529, -1e+30
        %v2538 = vsel %vm1074, %v2532, -1e+30
        %v2539 = vsel %vm1075, %v2535, -1e+30
        // Predicated region
        $region45: #{tpu_custom_call.1} parent=39 // pred_check
          %p2540 = pneg %p290
        $region46: #{tpu_custom_call.1} parent=39 // pred_check_branch
          %2542 = sbr.rel (%p2540) target = $region48
        $region47: #{tpu_custom_call.1} parent=39 // pred_region
          %2544 = vset.pattern.permute.xlu0 0
          %2545 = vperm.xlu0 %2544, %v2536
          %v2546 = vpop.permute.xlu0 %2545
          %2549 = vset.pattern.permute.xlu0 0
          %2550 = vperm.xlu0 %2549, %v2537
          %v2551 = vpop.permute.xlu0 %2550
          %2554 = vset.pattern.permute.xlu0 0
          %2555 = vperm.xlu0 %2554, %v2538
          %v2556 = vpop.permute.xlu0 %2555
          %2559 = vset.pattern.permute.xlu0 0
          %2560 = vperm.xlu0 %2559, %v2539
          %v2561 = vpop.permute.xlu0 %2560
          %v2563 = vsel %vm1090, %v2546, -1e+30
          %v2564 = vsel %vm1091, %v2551, -1e+30
          %v2565 = vsel %vm1092, %v2556, -1e+30
          %v2566 = vsel %vm1093, %v2561, -1e+30
          %v2567 = vsel %vm1158, %v2563, -inf
          %v2568 = vsel %vm1158, %v2564, -inf
          %v2569 = vsel %vm1158, %v2565, -inf
          %v2570 = vsel %vm1158, %v2566, -inf
          %v2571 = vmax.f32 %v2567, %v2568
          %v2572 = vmax.f32 %v2569, %v2570
          %v2573 = vmax.f32 %v2571, %v2572
          %v2574 = vrot.slane %v2573, 4
          %v2575 = vmax.f32 %v2573, %v2574
          %v2576 = vrot.slane %v2575, 2
          %v2577 = vmax.f32 %v2575, %v2576
          %v2578 = vrot.slane %v2577, 1
          %v2579 = vmax.f32 %v2577, %v2578
          %v2580 = vld [vmem:[#allocation3] sm:$0x1]
          %v2581 = vmax.f32 %v2580, %v2579
          %vm2582 = vcmask 516096
          %2583 = vst.msk [vmem:[#allocation3] sm:$0x1] %vm2582, %v2581
        $region48: #{tpu_custom_call.1} parent=39 // pred_fallthru
          _
        %p2584 = scmp.eq.s32.totalorder %s21, 1
        // Predicated region
        $region49: #{tpu_custom_call.1} parent=39 // pred_check
          %p2585 = pneg %p2584
        $region50: #{tpu_custom_call.1} parent=39 // pred_check_branch
          %2587 = sbr.rel (%p2585) target = $region52
        $region51: #{tpu_custom_call.1} parent=39 // pred_region
          %v2588 = vld [vmem:[#allocation3] sm:$0x1]
          %v2590 = vlaneseq
          %v2591 = vshrl.u32 %v2590, 7
          %v2592 = vsub.s32 0, %v2591
          %v2593 = vrot.slane %v2588, %v2592
          %v2595 = vsel %vm1090, %v2593, 0.0
          %v2596 = vsel %vm1091, %v2593, 0.0
          %v2597 = vsel %vm1092, %v2593, 0.0
          %v2598 = vsel %vm1093, %v2593, 0.0
          %v2599 = vsel %vm1158, %v2595, 0.0
          %2600 = vadd.xlane.f32.xlu0 %v2599
          %v2601 = vpop.xlane.xlu0 %2600
          %v2602 = vsel %vm1158, %v2596, 0.0
          %2603 = vadd.xlane.f32.xlu0 %v2602
          %v2604 = vpop.xlane.xlu0 %2603
          %v2605 = vsel %vm1158, %v2597, 0.0
          %2606 = vadd.xlane.f32.xlu0 %v2605
          %v2607 = vpop.xlane.xlu0 %2606
          %v2608 = vsel %vm1158, %v2598, 0.0
          %2609 = vadd.xlane.f32.xlu0 %v2608
          %v2610 = vpop.xlane.xlu0 %2609
          %v2611 = vsub.f32 %v2536, %v2601
          %v2612 = vsub.f32 %v2537, %v2604
          %v2613 = vsub.f32 %v2538, %v2607
          %v2614 = vsub.f32 %v2539, %v2610
          %v2615 = vmul.f32 %v2611, 1.442695
          %v2616 = vpow.pop %v2615
          %v2617 = vmul.f32 %v2612, 1.442695
          %v2618 = vpow.pop %v2617
          %v2619 = vmul.f32 %v2613, 1.442695
          %v2620 = vpow.pop %v2619
          %v2621 = vmul.f32 %v2614, 1.442695
          %v2622 = vpow.pop %v2621
          %v2623 = vld [vmem:[#allocation4] sm:$0x1]
          %2625 = vset.pattern.permute.xlu0 0
          %2626 = vperm.xlu0 %2625, %v2616
          %v2627 = vpop.permute.xlu0 %2626
          %2630 = vset.pattern.permute.xlu0 0
          %2631 = vperm.xlu0 %2630, %v2618
          %v2632 = vpop.permute.xlu0 %2631
          %2635 = vset.pattern.permute.xlu0 0
          %2636 = vperm.xlu0 %2635, %v2620
          %v2637 = vpop.permute.xlu0 %2636
          %2640 = vset.pattern.permute.xlu0 0
          %2641 = vperm.xlu0 %2640, %v2622
          %v2642 = vpop.permute.xlu0 %2641
          %v2644 = vsel %vm1090, %v2627, 0.0
          %v2645 = vsel %vm1091, %v2632, 0.0
          %v2646 = vsel %vm1092, %v2637, 0.0
          %v2647 = vsel %vm1093, %v2642, 0.0
          %v2648 = vsel %vm1158, %v2644, 0.0
          %v2649 = vsel %vm1158, %v2645, 0.0
          %v2650 = vadd.f32 %v2648, %v2649
          %v2651 = vsel %vm1158, %v2646, 0.0
          %v2652 = vadd.f32 %v2650, %v2651
          %v2653 = vsel %vm1158, %v2647, 0.0
          %v2654 = vadd.f32 %v2652, %v2653
          %v2655 = vrot.slane %v2654, 4
          %v2656 = vadd.f32 %v2654, %v2655
          %v2657 = vrot.slane %v2656, 2
          %v2658 = vadd.f32 %v2656, %v2657
          %v2659 = vrot.slane %v2658, 1
          %v2660 = vadd.f32 %v2658, %v2659
          %v2661 = vadd.f32 %v2623, %v2660
          %vm2662 = vcmask 516096
          %2663 = vst.msk [vmem:[#allocation4] sm:$0x1] %vm2662, %v2661
        $region52: #{tpu_custom_call.1} parent=39 // pred_fallthru
          _
        %p2664 = scmp.eq.s32.totalorder %s21, 2
        // Predicated region
        $region53: #{tpu_custom_call.1} parent=39 // pred_check
          %p2665 = pneg %p2664
        $region54: #{tpu_custom_call.1} parent=39 // pred_check_branch
          %2667 = sbr.rel (%p2665) target = $region56
        $region55: #{tpu_custom_call.1} parent=39 // pred_region
          %v2668 = vld [vmem:[#allocation3] sm:$0x1]
          %v2670 = vlaneseq
          %v2671 = vshrl.u32 %v2670, 7
          %v2672 = vsub.s32 0, %v2671
          %v2673 = vrot.slane %v2668, %v2672
          %v2675 = vsel %vm1090, %v2673, 0.0
          %v2676 = vsel %vm1091, %v2673, 0.0
          %v2677 = vsel %vm1092, %v2673, 0.0
          %v2678 = vsel %vm1093, %v2673, 0.0
          %v2679 = vsel %vm1158, %v2675, 0.0
          %2680 = vadd.xlane.f32.xlu0 %v2679
          %v2681 = vpop.xlane.xlu0 %2680
          %v2682 = vsel %vm1158, %v2676, 0.0
          %2683 = vadd.xlane.f32.xlu0 %v2682
          %v2684 = vpop.xlane.xlu0 %2683
          %v2685 = vsel %vm1158, %v2677, 0.0
          %2686 = vadd.xlane.f32.xlu0 %v2685
          %v2687 = vpop.xlane.xlu0 %2686
          %v2688 = vsel %vm1158, %v2678, 0.0
          %2689 = vadd.xlane.f32.xlu0 %v2688
          %v2690 = vpop.xlane.xlu0 %2689
          %v2691 = vld [vmem:[#allocation4] sm:$0x1]
          %v2693 = vlaneseq
          %v2694 = vshrl.u32 %v2693, 7
          %v2695 = vsub.s32 0, %v2694
          %v2696 = vrot.slane %v2691, %v2695
          %v2698 = vsel %vm1090, %v2696, 0.0
          %v2699 = vsel %vm1091, %v2696, 0.0
          %v2700 = vsel %vm1092, %v2696, 0.0
          %v2701 = vsel %vm1093, %v2696, 0.0
          %v2702 = vsel %vm1158, %v2698, 0.0
          %2703 = vadd.xlane.f32.xlu0 %v2702
          %v2704 = vpop.xlane.xlu0 %2703
          %v2705 = vsel %vm1158, %v2699, 0.0
          %2706 = vadd.xlane.f32.xlu0 %v2705
          %v2707 = vpop.xlane.xlu0 %2706
          %v2708 = vsel %vm1158, %v2700, 0.0
          %2709 = vadd.xlane.f32.xlu0 %v2708
          %v2710 = vpop.xlane.xlu0 %2709
          %v2711 = vsel %vm1158, %v2701, 0.0
          %2712 = vadd.xlane.f32.xlu0 %v2711
          %v2713 = vpop.xlane.xlu0 %2712
          %v2714 = vsub.f32 %v2536, %v2681
          %v2715 = vsub.f32 %v2537, %v2684
          %v2716 = vsub.f32 %v2538, %v2687
          %v2717 = vsub.f32 %v2539, %v2690
          %v2718 = vmul.f32 %v2714, 1.442695
          %v2719 = vpow.pop %v2718
          %v2720 = vmul.f32 %v2715, 1.442695
          %v2721 = vpow.pop %v2720
          %v2722 = vmul.f32 %v2716, 1.442695
          %v2723 = vpow.pop %v2722
          %v2724 = vmul.f32 %v2717, 1.442695
          %v2725 = vpow.pop %v2724
          %vm2726 = vcmp.gt.f32.partialorder %v2704, 0.0
          %vm2727 = vcmp.gt.f32.partialorder %v2707, 0.0
          %vm2728 = vcmp.gt.f32.partialorder %v2710, 0.0
          %vm2729 = vcmp.gt.f32.partialorder %v2713, 0.0
          %v2730 = vrcp.pop %v2704
          %v2731 = vmul.f32 %v2719, %v2730
          %v2732 = vrcp.pop %v2707
          %v2733 = vmul.f32 %v2721, %v2732
          %v2734 = vrcp.pop %v2710
          %v2735 = vmul.f32 %v2723, %v2734
          %v2736 = vrcp.pop %v2713
          %v2737 = vmul.f32 %v2725, %v2736
          %v2738 = vsel %vm2726, %v2731, 0.0
          %v2739 = vsel %vm2727, %v2733, 0.0
          %v2740 = vsel %vm2728, %v2735, 0.0
          %v2741 = vsel %vm2729, %v2737, 0.0
          %v2743 = vsel %vm2523, %v1146, 0
          %v2746 = vsel %vm2523, %v1147, 0
          %v2749 = vsel %vm2523, %v1148, 0
          %v2752 = vsel %vm2523, %v1149, 0
          %vm2754 = vcmask 1045504
          %v2756 = vsel %vm2754, %v277, 0
          %2758 = vmatprep.subr.mxu0 0.0
          %v2759 = vand.u32 %v2756, 4294901760
          %2760 = vmatpush1.msra.mxu0 %v2759
          %2761 = vmatprep.subr.mxu0 0.0
          %2762 = vmatpush1.msra.mxu0 0.0
          %2763 = vmatprep.subr.mxu0 0.0
          %2764 = vmatpush1.msra.mxu0 0.0
          %2765 = vmatprep.subr.mxu0 0.0
          %2766 = vmatpush1.msra.mxu0 0.0
          %2767 = vmatprep.subr.mxu0 0.0
          %2768 = vmatpush1.msra.mxu0 0.0
          %2769 = vmatprep.subr.mxu0 0.0
          %2770 = vmatpush1.msra.mxu0 0.0
          %2771 = vmatprep.subr.mxu0 0.0
          %2772 = vmatpush1.msra.mxu0 0.0
          %2773 = vmatprep.subr.mxu0 0.0
          %2774 = vmatpush1.msra.mxu0 0.0
          %2775 = vmatprep.subr.mxu0 0.0
          %2776 = vmatpush1.msra.mxu0 0.0
          %2777 = vmatprep.subr.mxu0 0.0
          %2778 = vmatpush1.msra.mxu0 0.0
          %2779 = vmatprep.subr.mxu0 0.0
          %2780 = vmatpush1.msra.mxu0 0.0
          %2781 = vmatprep.subr.mxu0 0.0
          %2782 = vmatpush1.msra.mxu0 0.0
          %2783 = vmatprep.subr.mxu0 0.0
          %2784 = vmatpush1.msra.mxu0 0.0
          %2785 = vmatprep.subr.mxu0 0.0
          %2786 = vmatpush1.msra.mxu0 0.0
          %2787 = vmatprep.subr.mxu0 0.0
          %2788 = vmatpush1.msra.mxu0 0.0
          %2789 = vmatprep.subr.mxu0 0.0
          %2790 = vmatpush1.msra.mxu0 0.0
          %2791 = vmatprep.subr.mxu0 0.0
          %2792 = vmatpush1.msra.mxu0 0.0
          %2793 = vmatprep.subr.mxu0 0.0
          %2794 = vmatpush1.msra.mxu0 0.0
          %2795 = vmatprep.subr.mxu0 0.0
          %2796 = vmatpush1.msra.mxu0 0.0
          %2797 = vmatprep.subr.mxu0 0.0
          %2798 = vmatpush1.msra.mxu0 0.0
          %2799 = vmatprep.subr.mxu0 0.0
          %2800 = vmatpush1.msra.mxu0 0.0
          %2801 = vmatprep.subr.mxu0 0.0
          %2802 = vmatpush1.msra.mxu0 0.0
          %2803 = vmatprep.subr.mxu0 0.0
          %2804 = vmatpush1.msra.mxu0 0.0
          %2805 = vmatprep.subr.mxu0 0.0
          %2806 = vmatpush1.msra.mxu0 0.0
          %2807 = vmatprep.subr.mxu0 0.0
          %2808 = vmatpush1.msra.mxu0 0.0
          %2809 = vmatprep.subr.mxu0 0.0
          %2810 = vmatpush1.msra.mxu0 0.0
          %2811 = vmatprep.subr.mxu0 0.0
          %2812 = vmatpush1.msra.mxu0 0.0
          %2813 = vmatprep.subr.mxu0 0.0
          %2814 = vmatpush1.msra.mxu0 0.0
          %2815 = vmatprep.subr.mxu0 0.0
          %2816 = vmatpush1.msra.mxu0 0.0
          %2817 = vmatprep.subr.mxu0 0.0
          %2818 = vmatpush1.msra.mxu0 0.0
          %2819 = vmatprep.subr.mxu0 0.0
          %2820 = vmatpush1.msra.mxu0 0.0
          %2821 = vmatprep.subr.mxu0 0.0
          %2822 = vmatpush1.msra.mxu0 0.0
          %2823 = vmatprep.mubr.f32.mxu0 0.0
          %v2824 = vand.u32 %v2743, 4294901760
          %v2825 = vsub.f32 %v2743, %v2824
          %v2826 = vand.u32 %v2825, 4294901760
          %v2827 = vsub.f32 %v2825, %v2826
          %v2828 = vand.u32 %v2827, 4294901760
          %2829 = vmatmul.mubr.f32.gmra.mrb[0].mxu0 %v2828
          %v2830 = vpop.f32.mrb[0].mxu0
          %v2831 = vadd.f32 0.0, %v2830
          %v2832 = vpop.f32.mrb[0].mxu0
          %2833 = vmatprep.mubr.f32.mxu0 0.0
          %v2834 = vand.u32 %v2746, 4294901760
          %v2835 = vsub.f32 %v2746, %v2834
          %v2836 = vand.u32 %v2835, 4294901760
          %v2837 = vsub.f32 %v2835, %v2836
          %v2838 = vand.u32 %v2837, 4294901760
          %2839 = vmatmul.mubr.f32.gmra.mrb[0].mxu0 %v2838
          %v2840 = vpop.f32.mrb[0].mxu0
          %v2841 = vadd.f32 0.0, %v2840
          %v2842 = vpop.f32.mrb[0].mxu0
          %2843 = vmatprep.mubr.f32.mxu0 0.0
          %v2844 = vand.u32 %v2749, 4294901760
          %v2845 = vsub.f32 %v2749, %v2844
          %v2846 = vand.u32 %v2845, 4294901760
          %v2847 = vsub.f32 %v2845, %v2846
          %v2848 = vand.u32 %v2847, 4294901760
          %2849 = vmatmul.mubr.f32.gmra.mrb[0].mxu0 %v2848
          %v2850 = vpop.f32.mrb[0].mxu0
          %v2851 = vadd.f32 0.0, %v2850
          %v2852 = vpop.f32.mrb[0].mxu0
          %2853 = vmatprep.mubr.f32.mxu0 0.0
          %v2854 = vand.u32 %v2752, 4294901760
          %v2855 = vsub.f32 %v2752, %v2854
          %v2856 = vand.u32 %v2855, 4294901760
          %v2857 = vsub.f32 %v2855, %v2856
          %v2858 = vand.u32 %v2857, 4294901760
          %2859 = vmatmul.mubr.f32.gmra.mrb[0].mxu0 %v2858
          %v2860 = vpop.f32.mrb[0].mxu0
          %v2861 = vadd.f32 0.0, %v2860
          %v2862 = vpop.f32.mrb[0].mxu0
          %2863 = vdwg.mxu0
          %2864 = vmatprep.subr.mxu0 0.0
          %v2865 = vand.u32 %v2756, 4294901760
          %v2866 = vsub.f32 %v2756, %v2865
          %v2867 = vand.u32 %v2866, 4294901760
          %v2868 = vsub.f32 %v2866, %v2867
          %v2869 = vand.u32 %v2868, 4294901760
          %2870 = vmatpush1.msra.mxu0 %v2869
          %2871 = vmatprep.subr.mxu0 0.0
          %2872 = vmatpush1.msra.mxu0 0.0
          %2873 = vmatprep.subr.mxu0 0.0
          %2874 = vmatpush1.msra.mxu0 0.0
          %2875 = vmatprep.subr.mxu0 0.0
          %2876 = vmatpush1.msra.mxu0 0.0
          %2877 = vmatprep.subr.mxu0 0.0
          %2878 = vmatpush1.msra.mxu0 0.0
          %2879 = vmatprep.subr.mxu0 0.0
          %2880 = vmatpush1.msra.mxu0 0.0
          %2881 = vmatprep.subr.mxu0 0.0
          %2882 = vmatpush1.msra.mxu0 0.0
          %2883 = vmatprep.subr.mxu0 0.0
          %2884 = vmatpush1.msra.mxu0 0.0
          %2885 = vmatprep.subr.mxu0 0.0
          %2886 = vmatpush1.msra.mxu0 0.0
          %2887 = vmatprep.subr.mxu0 0.0
          %2888 = vmatpush1.msra.mxu0 0.0
          %2889 = vmatprep.subr.mxu0 0.0
          %2890 = vmatpush1.msra.mxu0 0.0
          %2891 = vmatprep.subr.mxu0 0.0
          %2892 = vmatpush1.msra.mxu0 0.0
          %2893 = vmatprep.subr.mxu0 0.0
          %2894 = vmatpush1.msra.mxu0 0.0
          %2895 = vmatprep.subr.mxu0 0.0
          %2896 = vmatpush1.msra.mxu0 0.0
          %2897 = vmatprep.subr.mxu0 0.0
          %2898 = vmatpush1.msra.mxu0 0.0
          %2899 = vmatprep.subr.mxu0 0.0
          %2900 = vmatpush1.msra.mxu0 0.0
          %2901 = vmatprep.subr.mxu0 0.0
          %2902 = vmatpush1.msra.mxu0 0.0
          %2903 = vmatprep.subr.mxu0 0.0
          %2904 = vmatpush1.msra.mxu0 0.0
          %2905 = vmatprep.subr.mxu0 0.0
          %2906 = vmatpush1.msra.mxu0 0.0
          %2907 = vmatprep.subr.mxu0 0.0
          %2908 = vmatpush1.msra.mxu0 0.0
          %2909 = vmatprep.subr.mxu0 0.0
          %2910 = vmatpush1.msra.mxu0 0.0
          %2911 = vmatprep.subr.mxu0 0.0
          %2912 = vmatpush1.msra.mxu0 0.0
          %2913 = vmatprep.subr.mxu0 0.0
          %2914 = vmatpush1.msra.mxu0 0.0
          %2915 = vmatprep.subr.mxu0 0.0
          %2916 = vmatpush1.msra.mxu0 0.0
          %2917 = vmatprep.subr.mxu0 0.0
          %2918 = vmatpush1.msra.mxu0 0.0
          %2919 = vmatprep.subr.mxu0 0.0
          %2920 = vmatpush1.msra.mxu0 0.0
          %2921 = vmatprep.subr.mxu0 0.0
          %2922 = vmatpush1.msra.mxu0 0.0
          %2923 = vmatprep.subr.mxu0 0.0
          %2924 = vmatpush1.msra.mxu0 0.0
          %2925 = vmatprep.subr.mxu0 0.0
          %2926 = vmatpush1.msra.mxu0 0.0
          %2927 = vmatprep.subr.mxu0 0.0
          %2928 = vmatpush1.msra.mxu0 0.0
          %2929 = vmatprep.subr.mxu0 0.0
          %2930 = vmatpush1.msra.mxu0 0.0
          %2931 = vmatprep.subr.mxu0 0.0
          %2932 = vmatpush1.msra.mxu0 0.0
          %2933 = vmatprep.mubr.f32.mxu0 0.0
          %v2934 = vand.u32 %v2743, 4294901760
          %2935 = vmatmul.mubr.f32.gmra.mrb[0].mxu0 %v2934
          %v2936 = vpop.f32.mrb[0].mxu0
          %v2937 = vadd.f32 %v2831, %v2936
          %v2938 = vpop.f32.mrb[0].mxu0
          %2939 = vmatprep.mubr.f32.mxu0 0.0
          %v2940 = vand.u32 %v2746, 4294901760
          %2941 = vmatmul.mubr.f32.gmra.mrb[0].mxu0 %v2940
          %v2942 = vpop.f32.mrb[0].mxu0
          %v2943 = vadd.f32 %v2841, %v2942
          %v2944 = vpop.f32.mrb[0].mxu0
          %2945 = vmatprep.mubr.f32.mxu0 0.0
          %v2946 = vand.u32 %v2749, 4294901760
          %2947 = vmatmul.mubr.f32.gmra.mrb[0].mxu0 %v2946
          %v2948 = vpop.f32.mrb[0].mxu0
          %v2949 = vadd.f32 %v2851, %v2948
          %v2950 = vpop.f32.mrb[0].mxu0
          %2951 = vmatprep.mubr.f32.mxu0 0.0
          %v2952 = vand.u32 %v2752, 4294901760
          %2953 = vmatmul.mubr.f32.gmra.mrb[0].mxu0 %v2952
          %v2954 = vpop.f32.mrb[0].mxu0
          %v2955 = vadd.f32 %v2861, %v2954
          %v2956 = vpop.f32.mrb[0].mxu0
          %2957 = vdwg.mxu0
          %2958 = vmatprep.subr.mxu0 0.0
          %v2959 = vand.u32 %v2756, 4294901760
          %v2960 = vsub.f32 %v2756, %v2959
          %2961 = vmatpush1.msra.mxu0 %v2960
          %2962 = vmatprep.subr.mxu0 0.0
          %2963 = vmatpush1.msra.mxu0 0.0
          %2964 = vmatprep.subr.mxu0 0.0
          %2965 = vmatpush1.msra.mxu0 0.0
          %2966 = vmatprep.subr.mxu0 0.0
          %2967 = vmatpush1.msra.mxu0 0.0
          %2968 = vmatprep.subr.mxu0 0.0
          %2969 = vmatpush1.msra.mxu0 0.0
          %2970 = vmatprep.subr.mxu0 0.0
          %2971 = vmatpush1.msra.mxu0 0.0
          %2972 = vmatprep.subr.mxu0 0.0
          %2973 = vmatpush1.msra.mxu0 0.0
          %2974 = vmatprep.subr.mxu0 0.0
          %2975 = vmatpush1.msra.mxu0 0.0
          %2976 = vmatprep.subr.mxu0 0.0
          %2977 = vmatpush1.msra.mxu0 0.0
          %2978 = vmatprep.subr.mxu0 0.0
          %2979 = vmatpush1.msra.mxu0 0.0
          %2980 = vmatprep.subr.mxu0 0.0
          %2981 = vmatpush1.msra.mxu0 0.0
          %2982 = vmatprep.subr.mxu0 0.0
          %2983 = vmatpush1.msra.mxu0 0.0
          %2984 = vmatprep.subr.mxu0 0.0
          %2985 = vmatpush1.msra.mxu0 0.0
          %2986 = vmatprep.subr.mxu0 0.0
          %2987 = vmatpush1.msra.mxu0 0.0
          %2988 = vmatprep.subr.mxu0 0.0
          %2989 = vmatpush1.msra.mxu0 0.0
          %2990 = vmatprep.subr.mxu0 0.0
          %2991 = vmatpush1.msra.mxu0 0.0
          %2992 = vmatprep.subr.mxu0 0.0
          %2993 = vmatpush1.msra.mxu0 0.0
          %2994 = vmatprep.subr.mxu0 0.0
          %2995 = vmatpush1.msra.mxu0 0.0
          %2996 = vmatprep.subr.mxu0 0.0
          %2997 = vmatpush1.msra.mxu0 0.0
          %2998 = vmatprep.subr.mxu0 0.0
          %2999 = vmatpush1.msra.mxu0 0.0
          %3000 = vmatprep.subr.mxu0 0.0
          %3001 = vmatpush1.msra.mxu0 0.0
          %3002 = vmatprep.subr.mxu0 0.0
          %3003 = vmatpush1.msra.mxu0 0.0
          %3004 = vmatprep.subr.mxu0 0.0
          %3005 = vmatpush1.msra.mxu0 0.0
          %3006 = vmatprep.subr.mxu0 0.0
          %3007 = vmatpush1.msra.mxu0 0.0
          %3008 = vmatprep.subr.mxu0 0.0
          %3009 = vmatpush1.msra.mxu0 0.0
          %3010 = vmatprep.subr.mxu0 0.0
          %3011 = vmatpush1.msra.mxu0 0.0
          %3012 = vmatprep.subr.mxu0 0.0
          %3013 = vmatpush1.msra.mxu0 0.0
          %3014 = vmatprep.subr.mxu0 0.0
          %3015 = vmatpush1.msra.mxu0 0.0
          %3016 = vmatprep.subr.mxu0 0.0
          %3017 = vmatpush1.msra.mxu0 0.0
          %3018 = vmatprep.subr.mxu0 0.0
          %3019 = vmatpush1.msra.mxu0 0.0
          %3020 = vmatprep.subr.mxu0 0.0
          %3021 = vmatpush1.msra.mxu0 0.0
          %3022 = vmatprep.subr.mxu0 0.0
          %3023 = vmatpush1.msra.mxu0 0.0
          %3024 = vmatprep.mubr.f32.mxu0 0.0
          %v3025 = vand.u32 %v2743, 4294901760
          %v3026 = vsub.f32 %v2743, %v3025
          %3027 = vmatmul.mubr.f32.gmra.mrb[0].mxu0 %v3026
          %v3028 = vpop.f32.mrb[0].mxu0
          %v3029 = vadd.f32 %v2937, %v3028
          %v3030 = vpop.f32.mrb[0].mxu0
          %3031 = vmatprep.mubr.f32.mxu0 0.0
          %v3032 = vand.u32 %v2746, 4294901760
          %v3033 = vsub.f32 %v2746, %v3032
          %3034 = vmatmul.mubr.f32.gmra.mrb[0].mxu0 %v3033
          %v3035 = vpop.f32.mrb[0].mxu0
          %v3036 = vadd.f32 %v2943, %v3035
          %v3037 = vpop.f32.mrb[0].mxu0
          %3038 = vmatprep.mubr.f32.mxu0 0.0
          %v3039 = vand.u32 %v2749, 4294901760
          %v3040 = vsub.f32 %v2749, %v3039
          %3041 = vmatmul.mubr.f32.gmra.mrb[0].mxu0 %v3040
          %v3042 = vpop.f32.mrb[0].mxu0
          %v3043 = vadd.f32 %v2949, %v3042
          %v3044 = vpop.f32.mrb[0].mxu0
          %3045 = vmatprep.mubr.f32.mxu0 0.0
          %v3046 = vand.u32 %v2752, 4294901760
          %v3047 = vsub.f32 %v2752, %v3046
          %3048 = vmatmul.mubr.f32.gmra.mrb[0].mxu0 %v3047
          %v3049 = vpop.f32.mrb[0].mxu0
          %v3050 = vadd.f32 %v2955, %v3049
          %v3051 = vpop.f32.mrb[0].mxu0
          %3052 = vdwg.mxu0
          %3053 = vmatprep.subr.mxu0 0.0
          %v3054 = vand.u32 %v2756, 4294901760
          %3055 = vmatpush1.msra.mxu0 %v3054
          %3056 = vmatprep.subr.mxu0 0.0
          %3057 = vmatpush1.msra.mxu0 0.0
          %3058 = vmatprep.subr.mxu0 0.0
          %3059 = vmatpush1.msra.mxu0 0.0
          %3060 = vmatprep.subr.mxu0 0.0
          %3061 = vmatpush1.msra.mxu0 0.0
          %3062 = vmatprep.subr.mxu0 0.0
          %3063 = vmatpush1.msra.mxu0 0.0
          %3064 = vmatprep.subr.mxu0 0.0
          %3065 = vmatpush1.msra.mxu0 0.0
          %3066 = vmatprep.subr.mxu0 0.0
          %3067 = vmatpush1.msra.mxu0 0.0
          %3068 = vmatprep.subr.mxu0 0.0
          %3069 = vmatpush1.msra.mxu0 0.0
          %3070 = vmatprep.subr.mxu0 0.0
          %3071 = vmatpush1.msra.mxu0 0.0
          %3072 = vmatprep.subr.mxu0 0.0
          %3073 = vmatpush1.msra.mxu0 0.0
          %3074 = vmatprep.subr.mxu0 0.0
          %3075 = vmatpush1.msra.mxu0 0.0
          %3076 = vmatprep.subr.mxu0 0.0
          %3077 = vmatpush1.msra.mxu0 0.0
          %3078 = vmatprep.subr.mxu0 0.0
          %3079 = vmatpush1.msra.mxu0 0.0
          %3080 = vmatprep.subr.mxu0 0.0
          %3081 = vmatpush1.msra.mxu0 0.0
          %3082 = vmatprep.subr.mxu0 0.0
          %3083 = vmatpush1.msra.mxu0 0.0
          %3084 = vmatprep.subr.mxu0 0.0
          %3085 = vmatpush1.msra.mxu0 0.0
          %3086 = vmatprep.subr.mxu0 0.0
          %3087 = vmatpush1.msra.mxu0 0.0
          %3088 = vmatprep.subr.mxu0 0.0
          %3089 = vmatpush1.msra.mxu0 0.0
          %3090 = vmatprep.subr.mxu0 0.0
          %3091 = vmatpush1.msra.mxu0 0.0
          %3092 = vmatprep.subr.mxu0 0.0
          %3093 = vmatpush1.msra.mxu0 0.0
          %3094 = vmatprep.subr.mxu0 0.0
          %3095 = vmatpush1.msra.mxu0 0.0
          %3096 = vmatprep.subr.mxu0 0.0
          %3097 = vmatpush1.msra.mxu0 0.0
          %3098 = vmatprep.subr.mxu0 0.0
          %3099 = vmatpush1.msra.mxu0 0.0
          %3100 = vmatprep.subr.mxu0 0.0
          %3101 = vmatpush1.msra.mxu0 0.0
          %3102 = vmatprep.subr.mxu0 0.0
          %3103 = vmatpush1.msra.mxu0 0.0
          %3104 = vmatprep.subr.mxu0 0.0
          %3105 = vmatpush1.msra.mxu0 0.0
          %3106 = vmatprep.subr.mxu0 0.0
          %3107 = vmatpush1.msra.mxu0 0.0
          %3108 = vmatprep.subr.mxu0 0.0
          %3109 = vmatpush1.msra.mxu0 0.0
          %3110 = vmatprep.subr.mxu0 0.0
          %3111 = vmatpush1.msra.mxu0 0.0
          %3112 = vmatprep.subr.mxu0 0.0
          %3113 = vmatpush1.msra.mxu0 0.0
          %3114 = vmatprep.subr.mxu0 0.0
          %3115 = vmatpush1.msra.mxu0 0.0
          %3116 = vmatprep.subr.mxu0 0.0
          %3117 = vmatpush1.msra.mxu0 0.0
          %3118 = vmatprep.mubr.f32.mxu0 0.0
          %v3119 = vand.u32 %v2743, 4294901760
          %v3120 = vsub.f32 %v2743, %v3119
          %v3121 = vand.u32 %v3120, 4294901760
          %3122 = vmatmul.mubr.f32.gmra.mrb[0].mxu0 %v3121
          %v3123 = vpop.f32.mrb[0].mxu0
          %v3124 = vadd.f32 %v3029, %v3123
          %v3125 = vpop.f32.mrb[0].mxu0
          %3126 = vmatprep.mubr.f32.mxu0 0.0
          %v3127 = vand.u32 %v2746, 4294901760
          %v3128 = vsub.f32 %v2746, %v3127
          %v3129 = vand.u32 %v3128, 4294901760
          %3130 = vmatmul.mubr.f32.gmra.mrb[0].mxu0 %v3129
          %v3131 = vpop.f32.mrb[0].mxu0
          %v3132 = vadd.f32 %v3036, %v3131
          %v3133 = vpop.f32.mrb[0].mxu0
          %3134 = vmatprep.mubr.f32.mxu0 0.0
          %v3135 = vand.u32 %v2749, 4294901760
          %v3136 = vsub.f32 %v2749, %v3135
          %v3137 = vand.u32 %v3136, 4294901760
          %3138 = vmatmul.mubr.f32.gmra.mrb[0].mxu0 %v3137
          %v3139 = vpop.f32.mrb[0].mxu0
          %v3140 = vadd.f32 %v3043, %v3139
          %v3141 = vpop.f32.mrb[0].mxu0
          %3142 = vmatprep.mubr.f32.mxu0 0.0
          %v3143 = vand.u32 %v2752, 4294901760
          %v3144 = vsub.f32 %v2752, %v3143
          %v3145 = vand.u32 %v3144, 4294901760
          %3146 = vmatmul.mubr.f32.gmra.mrb[0].mxu0 %v3145
          %v3147 = vpop.f32.mrb[0].mxu0
          %v3148 = vadd.f32 %v3050, %v3147
          %v3149 = vpop.f32.mrb[0].mxu0
          %3150 = vdwg.mxu0
          %3151 = vmatprep.subr.mxu0 0.0
          %v3152 = vand.u32 %v2756, 4294901760
          %v3153 = vsub.f32 %v2756, %v3152
          %v3154 = vand.u32 %v3153, 4294901760
          %3155 = vmatpush1.msra.mxu0 %v3154
          %3156 = vmatprep.subr.mxu0 0.0
          %3157 = vmatpush1.msra.mxu0 0.0
          %3158 = vmatprep.subr.mxu0 0.0
          %3159 = vmatpush1.msra.mxu0 0.0
          %3160 = vmatprep.subr.mxu0 0.0
          %3161 = vmatpush1.msra.mxu0 0.0
          %3162 = vmatprep.subr.mxu0 0.0
          %3163 = vmatpush1.msra.mxu0 0.0
          %3164 = vmatprep.subr.mxu0 0.0
          %3165 = vmatpush1.msra.mxu0 0.0
          %3166 = vmatprep.subr.mxu0 0.0
          %3167 = vmatpush1.msra.mxu0 0.0
          %3168 = vmatprep.subr.mxu0 0.0
          %3169 = vmatpush1.msra.mxu0 0.0
          %3170 = vmatprep.subr.mxu0 0.0
          %3171 = vmatpush1.msra.mxu0 0.0
          %3172 = vmatprep.subr.mxu0 0.0
          %3173 = vmatpush1.msra.mxu0 0.0
          %3174 = vmatprep.subr.mxu0 0.0
          %3175 = vmatpush1.msra.mxu0 0.0
          %3176 = vmatprep.subr.mxu0 0.0
          %3177 = vmatpush1.msra.mxu0 0.0
          %3178 = vmatprep.subr.mxu0 0.0
          %3179 = vmatpush1.msra.mxu0 0.0
          %3180 = vmatprep.subr.mxu0 0.0
          %3181 = vmatpush1.msra.mxu0 0.0
          %3182 = vmatprep.subr.mxu0 0.0
          %3183 = vmatpush1.msra.mxu0 0.0
          %3184 = vmatprep.subr.mxu0 0.0
          %3185 = vmatpush1.msra.mxu0 0.0
          %3186 = vmatprep.subr.mxu0 0.0
          %3187 = vmatpush1.msra.mxu0 0.0
          %3188 = vmatprep.subr.mxu0 0.0
          %3189 = vmatpush1.msra.mxu0 0.0
          %3190 = vmatprep.subr.mxu0 0.0
          %3191 = vmatpush1.msra.mxu0 0.0
          %3192 = vmatprep.subr.mxu0 0.0
          %3193 = vmatpush1.msra.mxu0 0.0
          %3194 = vmatprep.subr.mxu0 0.0
          %3195 = vmatpush1.msra.mxu0 0.0
          %3196 = vmatprep.subr.mxu0 0.0
          %3197 = vmatpush1.msra.mxu0 0.0
          %3198 = vmatprep.subr.mxu0 0.0
          %3199 = vmatpush1.msra.mxu0 0.0
          %3200 = vmatprep.subr.mxu0 0.0
          %3201 = vmatpush1.msra.mxu0 0.0
          %3202 = vmatprep.subr.mxu0 0.0
          %3203 = vmatpush1.msra.mxu0 0.0
          %3204 = vmatprep.subr.mxu0 0.0
          %3205 = vmatpush1.msra.mxu0 0.0
          %3206 = vmatprep.subr.mxu0 0.0
          %3207 = vmatpush1.msra.mxu0 0.0
          %3208 = vmatprep.subr.mxu0 0.0
          %3209 = vmatpush1.msra.mxu0 0.0
          %3210 = vmatprep.subr.mxu0 0.0
          %3211 = vmatpush1.msra.mxu0 0.0
          %3212 = vmatprep.subr.mxu0 0.0
          %3213 = vmatpush1.msra.mxu0 0.0
          %3214 = vmatprep.subr.mxu0 0.0
          %3215 = vmatpush1.msra.mxu0 0.0
          %3216 = vmatprep.subr.mxu0 0.0
          %3217 = vmatpush1.msra.mxu0 0.0
          %3218 = vmatprep.mubr.f32.mxu0 0.0
          %v3219 = vand.u32 %v2743, 4294901760
          %3220 = vmatmul.mubr.f32.gmra.mrb[0].mxu0 %v3219
          %v3221 = vpop.f32.mrb[0].mxu0
          %v3222 = vadd.f32 %v3124, %v3221
          %v3223 = vpop.f32.mrb[0].mxu0
          %3224 = vmatprep.mubr.f32.mxu0 0.0
          %v3225 = vand.u32 %v2746, 4294901760
          %3226 = vmatmul.mubr.f32.gmra.mrb[0].mxu0 %v3225
          %v3227 = vpop.f32.mrb[0].mxu0
          %v3228 = vadd.f32 %v3132, %v3227
          %v3229 = vpop.f32.mrb[0].mxu0
          %3230 = vmatprep.mubr.f32.mxu0 0.0
          %v3231 = vand.u32 %v2749, 4294901760
          %3232 = vmatmul.mubr.f32.gmra.mrb[0].mxu0 %v3231
          %v3233 = vpop.f32.mrb[0].mxu0
          %v3234 = vadd.f32 %v3140, %v3233
          %v3235 = vpop.f32.mrb[0].mxu0
          %3236 = vmatprep.mubr.f32.mxu0 0.0
          %v3237 = vand.u32 %v2752, 4294901760
          %3238 = vmatmul.mubr.f32.gmra.mrb[0].mxu0 %v3237
          %v3239 = vpop.f32.mrb[0].mxu0
          %v3240 = vadd.f32 %v3148, %v3239
          %v3241 = vpop.f32.mrb[0].mxu0
          %3242 = vdwg.mxu0
          %3243 = vmatprep.subr.mxu0 0.0
          %v3244 = vand.u32 %v2756, 4294901760
          %3245 = vmatpush1.msra.mxu0 %v3244
          %3246 = vmatprep.subr.mxu0 0.0
          %3247 = vmatpush1.msra.mxu0 0.0
          %3248 = vmatprep.subr.mxu0 0.0
          %3249 = vmatpush1.msra.mxu0 0.0
          %3250 = vmatprep.subr.mxu0 0.0
          %3251 = vmatpush1.msra.mxu0 0.0
          %3252 = vmatprep.subr.mxu0 0.0
          %3253 = vmatpush1.msra.mxu0 0.0
          %3254 = vmatprep.subr.mxu0 0.0
          %3255 = vmatpush1.msra.mxu0 0.0
          %3256 = vmatprep.subr.mxu0 0.0
          %3257 = vmatpush1.msra.mxu0 0.0
          %3258 = vmatprep.subr.mxu0 0.0
          %3259 = vmatpush1.msra.mxu0 0.0
          %3260 = vmatprep.subr.mxu0 0.0
          %3261 = vmatpush1.msra.mxu0 0.0
          %3262 = vmatprep.subr.mxu0 0.0
          %3263 = vmatpush1.msra.mxu0 0.0
          %3264 = vmatprep.subr.mxu0 0.0
          %3265 = vmatpush1.msra.mxu0 0.0
          %3266 = vmatprep.subr.mxu0 0.0
          %3267 = vmatpush1.msra.mxu0 0.0
          %3268 = vmatprep.subr.mxu0 0.0
          %3269 = vmatpush1.msra.mxu0 0.0
          %3270 = vmatprep.subr.mxu0 0.0
          %3271 = vmatpush1.msra.mxu0 0.0
          %3272 = vmatprep.subr.mxu0 0.0
          %3273 = vmatpush1.msra.mxu0 0.0
          %3274 = vmatprep.subr.mxu0 0.0
          %3275 = vmatpush1.msra.mxu0 0.0
          %3276 = vmatprep.subr.mxu0 0.0
          %3277 = vmatpush1.msra.mxu0 0.0
          %3278 = vmatprep.subr.mxu0 0.0
          %3279 = vmatpush1.msra.mxu0 0.0
          %3280 = vmatprep.subr.mxu0 0.0
          %3281 = vmatpush1.msra.mxu0 0.0
          %3282 = vmatprep.subr.mxu0 0.0
          %3283 = vmatpush1.msra.mxu0 0.0
          %3284 = vmatprep.subr.mxu0 0.0
          %3285 = vmatpush1.msra.mxu0 0.0
          %3286 = vmatprep.subr.mxu0 0.0
          %3287 = vmatpush1.msra.mxu0 0.0
          %3288 = vmatprep.subr.mxu0 0.0
          %3289 = vmatpush1.msra.mxu0 0.0
          %3290 = vmatprep.subr.mxu0 0.0
          %3291 = vmatpush1.msra.mxu0 0.0
          %3292 = vmatprep.subr.mxu0 0.0
          %3293 = vmatpush1.msra.mxu0 0.0
          %3294 = vmatprep.subr.mxu0 0.0
          %3295 = vmatpush1.msra.mxu0 0.0
          %3296 = vmatprep.subr.mxu0 0.0
          %3297 = vmatpush1.msra.mxu0 0.0
          %3298 = vmatprep.subr.mxu0 0.0
          %3299 = vmatpush1.msra.mxu0 0.0
          %3300 = vmatprep.subr.mxu0 0.0
          %3301 = vmatpush1.msra.mxu0 0.0
          %3302 = vmatprep.subr.mxu0 0.0
          %3303 = vmatpush1.msra.mxu0 0.0
          %3304 = vmatprep.subr.mxu0 0.0
          %3305 = vmatpush1.msra.mxu0 0.0
          %3306 = vmatprep.subr.mxu0 0.0
          %3307 = vmatpush1.msra.mxu0 0.0
          %3308 = vmatprep.mubr.f32.mxu0 0.0
          %v3309 = vand.u32 %v2743, 4294901760
          %3310 = vmatmul.mubr.f32.gmra.mrb[0].mxu0 %v3309
          %v3311 = vpop.f32.mrb[0].mxu0
          %v3312 = vadd.f32 %v3222, %v3311
          %v3313 = vpop.f32.mrb[0].mxu0
          %3314 = vmatprep.mubr.f32.mxu0 0.0
          %v3315 = vand.u32 %v2746, 4294901760
          %3316 = vmatmul.mubr.f32.gmra.mrb[0].mxu0 %v3315
          %v3317 = vpop.f32.mrb[0].mxu0
          %v3318 = vadd.f32 %v3228, %v3317
          %v3319 = vpop.f32.mrb[0].mxu0
          %3320 = vmatprep.mubr.f32.mxu0 0.0
          %v3321 = vand.u32 %v2749, 4294901760
          %3322 = vmatmul.mubr.f32.gmra.mrb[0].mxu0 %v3321
          %v3323 = vpop.f32.mrb[0].mxu0
          %v3324 = vadd.f32 %v3234, %v3323
          %v3325 = vpop.f32.mrb[0].mxu0
          %3326 = vmatprep.mubr.f32.mxu0 0.0
          %v3327 = vand.u32 %v2752, 4294901760
          %3328 = vmatmul.mubr.f32.gmra.mrb[0].mxu0 %v3327
          %v3329 = vpop.f32.mrb[0].mxu0
          %v3330 = vadd.f32 %v3240, %v3329
          %v3331 = vpop.f32.mrb[0].mxu0
          %3332 = vdwg.mxu0
          %3333 = vmatprep.subr.mxu0 0.0
          %3334 = vmatpush1.msra.mxu0 %v269
          %3335 = vmatprep.subr.mxu0 0.0
          %3336 = vmatpush1.msra.mxu0 %v270
          %3337 = vmatprep.subr.mxu0 0.0
          %3338 = vmatpush1.msra.mxu0 %v271
          %3339 = vmatprep.subr.mxu0 0.0
          %3340 = vmatpush1.msra.mxu0 %v272
          %3341 = vmatprep.subr.mxu0 0.0
          %3342 = vmatpush1.msra.mxu0 %v273
          %3343 = vmatprep.subr.mxu0 0.0
          %3344 = vmatpush1.msra.mxu0 %v274
          %3345 = vmatprep.subr.mxu0 0.0
          %3346 = vmatpush1.msra.mxu0 %v275
          %3347 = vmatprep.subr.mxu0 0.0
          %3348 = vmatpush1.msra.mxu0 %v276
          %3349 = vmatprep.subr.mxu0 0.0
          %3350 = vmatpush1.msra.mxu0 0.0
          %3351 = vmatprep.subr.mxu0 0.0
          %3352 = vmatpush1.msra.mxu0 0.0
          %3353 = vmatprep.subr.mxu0 0.0
          %3354 = vmatpush1.msra.mxu0 0.0
          %3355 = vmatprep.subr.mxu0 0.0
          %3356 = vmatpush1.msra.mxu0 0.0
          %3357 = vmatprep.subr.mxu0 0.0
          %3358 = vmatpush1.msra.mxu0 0.0
          %3359 = vmatprep.subr.mxu0 0.0
          %3360 = vmatpush1.msra.mxu0 0.0
          %3361 = vmatprep.subr.mxu0 0.0
          %3362 = vmatpush1.msra.mxu0 0.0
          %3363 = vmatprep.subr.mxu0 0.0
          %3364 = vmatpush1.msra.mxu0 0.0
          %3365 = vmatprep.subr.mxu0 0.0
          %3366 = vmatpush1.msra.mxu0 0.0
          %3367 = vmatprep.subr.mxu0 0.0
          %3368 = vmatpush1.msra.mxu0 0.0
          %3369 = vmatprep.subr.mxu0 0.0
          %3370 = vmatpush1.msra.mxu0 0.0
          %3371 = vmatprep.subr.mxu0 0.0
          %3372 = vmatpush1.msra.mxu0 0.0
          %3373 = vmatprep.subr.mxu0 0.0
          %3374 = vmatpush1.msra.mxu0 0.0
          %3375 = vmatprep.subr.mxu0 0.0
          %3376 = vmatpush1.msra.mxu0 0.0
          %3377 = vmatprep.subr.mxu0 0.0
          %3378 = vmatpush1.msra.mxu0 0.0
          %3379 = vmatprep.subr.mxu0 0.0
          %3380 = vmatpush1.msra.mxu0 0.0
          %3381 = vmatprep.subr.mxu0 0.0
          %3382 = vmatpush1.msra.mxu0 0.0
          %3383 = vmatprep.subr.mxu0 0.0
          %3384 = vmatpush1.msra.mxu0 0.0
          %3385 = vmatprep.subr.mxu0 0.0
          %3386 = vmatpush1.msra.mxu0 0.0
          %3387 = vmatprep.subr.mxu0 0.0
          %3388 = vmatpush1.msra.mxu0 0.0
          %3389 = vmatprep.subr.mxu0 0.0
          %3390 = vmatpush1.msra.mxu0 0.0
          %3391 = vmatprep.subr.mxu0 0.0
          %3392 = vmatpush1.msra.mxu0 0.0
          %3393 = vmatprep.subr.mxu0 0.0
          %3394 = vmatpush1.msra.mxu0 0.0
          %3395 = vmatprep.subr.mxu0 0.0
          %3396 = vmatpush1.msra.mxu0 0.0
          %3397 = vmatprep.mubr.f32.mxu0 0.0
          %3398 = vmatmul.mubr.f32.gmra.mrb[0].mxu0 %v1838
          %v3399 = vpop.f32.mrb[0].mxu0
          %v3400 = vadd.f32 0.0, %v3399
          %v3401 = vpop.f32.mrb[0].mxu0
          %3402 = vmatprep.mubr.f32.mxu0 0.0
          %3403 = vmatmul.mubr.f32.gmra.mrb[0].mxu0 %v1841
          %v3404 = vpop.f32.mrb[0].mxu0
          %v3405 = vadd.f32 0.0, %v3404
          %v3406 = vpop.f32.mrb[0].mxu0
          %3407 = vmatprep.mubr.f32.mxu0 0.0
          %3408 = vmatmul.mubr.f32.gmra.mrb[0].mxu0 %v1844
          %v3409 = vpop.f32.mrb[0].mxu0
          %v3410 = vadd.f32 0.0, %v3409
          %v3411 = vpop.f32.mrb[0].mxu0
          %3412 = vmatprep.mubr.f32.mxu0 0.0
          %3413 = vmatmul.mubr.f32.gmra.mrb[0].mxu0 %v1847
          %v3414 = vpop.f32.mrb[0].mxu0
          %v3415 = vadd.f32 0.0, %v3414
          %v3416 = vpop.f32.mrb[0].mxu0
          %3417 = vdwg.mxu0
          %3419 = vset.pattern.permute.xlu0 0
          %3420 = vperm.xlu0 %3419, %v2738
          %v3421 = vpop.permute.xlu0 %3420
          %3424 = vset.pattern.permute.xlu0 0
          %3425 = vperm.xlu0 %3424, %v2739
          %v3426 = vpop.permute.xlu0 %3425
          %3429 = vset.pattern.permute.xlu0 0
          %3430 = vperm.xlu0 %3429, %v2740
          %v3431 = vpop.permute.xlu0 %3430
          %3434 = vset.pattern.permute.xlu0 0
          %3435 = vperm.xlu0 %3434, %v2741
          %v3436 = vpop.permute.xlu0 %3435
          %v3438 = vmul.f32 %v3421, %v3400
          %v3439 = vmul.f32 %v3426, %v3405
          %v3440 = vmul.f32 %v3431, %v3410
          %v3441 = vmul.f32 %v3436, %v3415
          %v3442 = vmul.f32 %v3438, %v3312
          %v3443 = vmul.f32 %v3439, %v3318
          %v3444 = vmul.f32 %v3440, %v3324
          %v3445 = vmul.f32 %v3441, %v3330
          %v3446 = vld [vmem:[#allocation5] sm:$0xff]
          %v3447 = vld [vmem:[#allocation5 + $0x8] sm:$0xff]
          %v3448 = vld [vmem:[#allocation5 + $0x10] sm:$0xff]
          %v3449 = vld [vmem:[#allocation5 + $0x18] sm:$0xff]
          %v3450 = vld [vmem:[#allocation5 + $0x20] sm:$0xff]
          %v3451 = vld [vmem:[#allocation5 + $0x28] sm:$0xff]
          %v3452 = vld [vmem:[#allocation5 + $0x30] sm:$0xff]
          %v3453 = vld [vmem:[#allocation5 + $0x38] sm:$0xff]
          %3454 = vxpose.xlu0.b32.start [1/16] %v1098, 128
          %3455 = vxpose.xlu0.b32.cont [2/16] %v1099, 128
          %3456 = vxpose.xlu0.b32.cont [3/16] %v1100, 128
          %3457 = vxpose.xlu0.b32.cont [4/16] %v1101, 128
          %3458 = vxpose.xlu0.b32.cont [5/16] 0.0, 128
          %3459 = vxpose.xlu0.b32.cont [6/16] 0.0, 128
          %3460 = vxpose.xlu0.b32.cont [7/16] 0.0, 128
          %3461 = vxpose.xlu0.b32.cont [8/16] 0.0, 128
          %3462 = vxpose.xlu0.b32.cont [9/16] 0.0, 128
          %3463 = vxpose.xlu0.b32.cont [10/16] 0.0, 128
          %3464 = vxpose.xlu0.b32.cont [11/16] 0.0, 128
          %3465 = vxpose.xlu0.b32.cont [12/16] 0.0, 128
          %3466 = vxpose.xlu0.b32.cont [13/16] 0.0, 128
          %3467 = vxpose.xlu0.b32.cont [14/16] 0.0, 128
          %3468 = vxpose.xlu0.b32.cont [15/16] 0.0, 128
          %3469 = vxpose.xlu0.b32.end [16/16] 0.0, 128
          %v3470 = vpop.trf.xlu0
          %v3471 = vpop.trf.xlu0
          %v3472 = vpop.trf.xlu0
          %v3473 = vpop.trf.xlu0
          %v3474 = vpop.trf.xlu0
          %v3475 = vpop.trf.xlu0
          %v3476 = vpop.trf.xlu0
          %v3477 = vpop.trf.xlu0
          %v3478 = vpop.trf.xlu0
          %v3479 = vpop.trf.xlu0
          %v3480 = vpop.trf.xlu0
          %v3481 = vpop.trf.xlu0
          %v3482 = vpop.trf.xlu0
          %v3483 = vpop.trf.xlu0
          %v3484 = vpop.trf.xlu0
          %v3485 = vpop.trf.xlu0
          %vm3486 = vcmask 261120
          %v3488 = vsel %vm3486, %v3470, 0
          %v3491 = vsel %vm3486, %v3471, 0
          %v3494 = vsel %vm3486, %v3472, 0
          %v3497 = vsel %vm3486, %v3473, 0
          %v3500 = vsel %vm3486, %v3474, 0
          %v3503 = vsel %vm3486, %v3475, 0
          %v3506 = vsel %vm3486, %v3476, 0
          %v3509 = vsel %vm3486, %v3477, 0
          %3511 = vmatprep.subr.mxu0 0.0
          %3512 = vmatpush1.msra.mxu0 %v3442
          %3513 = vmatprep.subr.mxu0 0.0
          %3514 = vmatpush1.msra.mxu0 %v3443
          %3515 = vmatprep.subr.mxu0 0.0
          %3516 = vmatpush1.msra.mxu0 %v3444
          %3517 = vmatprep.subr.mxu0 0.0
          %3518 = vmatpush1.msra.mxu0 %v3445
          %3519 = vmatprep.subr.mxu0 0.0
          %3520 = vmatpush1.msra.mxu0 0.0
          %3521 = vmatprep.subr.mxu0 0.0
          %3522 = vmatpush1.msra.mxu0 0.0
          %3523 = vmatprep.subr.mxu0 0.0
          %3524 = vmatpush1.msra.mxu0 0.0
          %3525 = vmatprep.subr.mxu0 0.0
          %3526 = vmatpush1.msra.mxu0 0.0
          %3527 = vmatprep.subr.mxu0 0.0
          %3528 = vmatpush1.msra.mxu0 0.0
          %3529 = vmatprep.subr.mxu0 0.0
          %3530 = vmatpush1.msra.mxu0 0.0
          %3531 = vmatprep.subr.mxu0 0.0
          %3532 = vmatpush1.msra.mxu0 0.0
          %3533 = vmatprep.subr.mxu0 0.0
          %3534 = vmatpush1.msra.mxu0 0.0
          %3535 = vmatprep.subr.mxu0 0.0
          %3536 = vmatpush1.msra.mxu0 0.0
          %3537 = vmatprep.subr.mxu0 0.0
          %3538 = vmatpush1.msra.mxu0 0.0
          %3539 = vmatprep.subr.mxu0 0.0
          %3540 = vmatpush1.msra.mxu0 0.0
          %3541 = vmatprep.subr.mxu0 0.0
          %3542 = vmatpush1.msra.mxu0 0.0
          %3543 = vmatprep.subr.mxu0 0.0
          %3544 = vmatpush1.msra.mxu0 0.0
          %3545 = vmatprep.subr.mxu0 0.0
          %3546 = vmatpush1.msra.mxu0 0.0
          %3547 = vmatprep.subr.mxu0 0.0
          %3548 = vmatpush1.msra.mxu0 0.0
          %3549 = vmatprep.subr.mxu0 0.0
          %3550 = vmatpush1.msra.mxu0 0.0
          %3551 = vmatprep.subr.mxu0 0.0
          %3552 = vmatpush1.msra.mxu0 0.0
          %3553 = vmatprep.subr.mxu0 0.0
          %3554 = vmatpush1.msra.mxu0 0.0
          %3555 = vmatprep.subr.mxu0 0.0
          %3556 = vmatpush1.msra.mxu0 0.0
          %3557 = vmatprep.subr.mxu0 0.0
          %3558 = vmatpush1.msra.mxu0 0.0
          %3559 = vmatprep.subr.mxu0 0.0
          %3560 = vmatpush1.msra.mxu0 0.0
          %3561 = vmatprep.subr.mxu0 0.0
          %3562 = vmatpush1.msra.mxu0 0.0
          %3563 = vmatprep.subr.mxu0 0.0
          %3564 = vmatpush1.msra.mxu0 0.0
          %3565 = vmatprep.subr.mxu0 0.0
          %3566 = vmatpush1.msra.mxu0 0.0
          %3567 = vmatprep.subr.mxu0 0.0
          %3568 = vmatpush1.msra.mxu0 0.0
          %3569 = vmatprep.subr.mxu0 0.0
          %3570 = vmatpush1.msra.mxu0 0.0
          %3571 = vmatprep.subr.mxu0 0.0
          %3572 = vmatpush1.msra.mxu0 0.0
          %3573 = vmatprep.subr.mxu0 0.0
          %3574 = vmatpush1.msra.mxu0 0.0
          %3575 = vmatprep.mubr.f32.mxu0 0.0
          %3576 = vmatmul.mubr.f32.gmra.mrb[0].mxu0 %v3488
          %v3577 = vpop.f32.mrb[0].mxu0
          %v3578 = vadd.f32 0.0, %v3577
          %v3579 = vpop.f32.mrb[0].mxu0
          %3580 = vmatprep.mubr.f32.mxu0 0.0
          %3581 = vmatmul.mubr.f32.gmra.mrb[0].mxu0 %v3491
          %v3582 = vpop.f32.mrb[0].mxu0
          %v3583 = vadd.f32 0.0, %v3582
          %v3584 = vpop.f32.mrb[0].mxu0
          %3585 = vmatprep.mubr.f32.mxu0 0.0
          %3586 = vmatmul.mubr.f32.gmra.mrb[0].mxu0 %v3494
          %v3587 = vpop.f32.mrb[0].mxu0
          %v3588 = vadd.f32 0.0, %v3587
          %v3589 = vpop.f32.mrb[0].mxu0
          %3590 = vmatprep.mubr.f32.mxu0 0.0
          %3591 = vmatmul.mubr.f32.gmra.mrb[0].mxu0 %v3497
          %v3592 = vpop.f32.mrb[0].mxu0
          %v3593 = vadd.f32 0.0, %v3592
          %v3594 = vpop.f32.mrb[0].mxu0
          %3595 = vmatprep.mubr.f32.mxu0 0.0
          %3596 = vmatmul.mubr.f32.gmra.mrb[0].mxu0 %v3500
          %v3597 = vpop.f32.mrb[0].mxu0
          %v3598 = vadd.f32 0.0, %v3597
          %v3599 = vpop.f32.mrb[0].mxu0
          %3600 = vmatprep.mubr.f32.mxu0 0.0
          %3601 = vmatmul.mubr.f32.gmra.mrb[0].mxu0 %v3503
          %v3602 = vpop.f32.mrb[0].mxu0
          %v3603 = vadd.f32 0.0, %v3602
          %v3604 = vpop.f32.mrb[0].mxu0
          %3605 = vmatprep.mubr.f32.mxu0 0.0
          %3606 = vmatmul.mubr.f32.gmra.mrb[0].mxu0 %v3506
          %v3607 = vpop.f32.mrb[0].mxu0
          %v3608 = vadd.f32 0.0, %v3607
          %v3609 = vpop.f32.mrb[0].mxu0
          %3610 = vmatprep.mubr.f32.mxu0 0.0
          %3611 = vmatmul.mubr.f32.gmra.mrb[0].mxu0 %v3509
          %v3612 = vpop.f32.mrb[0].mxu0
          %v3613 = vadd.f32 0.0, %v3612
          %v3614 = vpop.f32.mrb[0].mxu0
          %3615 = vdwg.mxu0
          %v3616 = vadd.f32 %v3446, %v3578
          %v3617 = vadd.f32 %v3447, %v3583
          %v3618 = vadd.f32 %v3448, %v3588
          %v3619 = vadd.f32 %v3449, %v3593
          %v3620 = vadd.f32 %v3450, %v3598
          %v3621 = vadd.f32 %v3451, %v3603
          %v3622 = vadd.f32 %v3452, %v3608
          %v3623 = vadd.f32 %v3453, %v3613
          %3624 = vst [vmem:[#allocation5] sm:$0xff] %v3616
          %3625 = vst [vmem:[#allocation5 + $0x8] sm:$0xff] %v3617
          %3626 = vst [vmem:[#allocation5 + $0x10] sm:$0xff] %v3618
          %3627 = vst [vmem:[#allocation5 + $0x18] sm:$0xff] %v3619
          %3628 = vst [vmem:[#allocation5 + $0x20] sm:$0xff] %v3620
          %3629 = vst [vmem:[#allocation5 + $0x28] sm:$0xff] %v3621
          %3630 = vst [vmem:[#allocation5 + $0x30] sm:$0xff] %v3622
          %3631 = vst [vmem:[#allocation5 + $0x38] sm:$0xff] %v3623
        $region56: #{tpu_custom_call.1} parent=39 // pred_fallthru
          _
        // Predicated region
        $region57: #{tpu_custom_call.1} parent=39 // pred_check
          %p3632 = pneg %p162
        $region58: #{tpu_custom_call.1} parent=39 // pred_check_branch
          %3634 = sbr.rel (%p3632) target = $region60
        $region59: #{tpu_custom_call.1} parent=39 // pred_region
          %s3636 = ssub.s32 1024, 1024
          %3637 = vsyncadd [#allocation6], %s3636
          %s3638 = sshll.u32 [#allocation5], 4
          %s3639 = int_to_ptr.vmem [resolvable:$true] %s3638
          %3644 = dma.vmem_to_hbm [thread:$0]  %s3639, 1024, %s5, [#allocation6], 128, 128, 8
        $region60: #{tpu_custom_call.1} parent=39 // pred_fallthru
          _
        // Predicated region
        $region61: #{tpu_custom_call.1} parent=39 // pred_check
          %p3645 = pneg %p162
        $region62: #{tpu_custom_call.1} parent=39 // pred_check_branch
          %3647 = sbr.rel (%p3645) target = $region64
        $region63: #{tpu_custom_call.1} parent=39 // pred_region
          %3648 = dma.done [#allocation6], 1024
        $region64: #{tpu_custom_call.1} parent=39 // pred_fallthru
          _
      $region40: #{tpu_custom_call.1} parent=5 // pred_fallthru
        _
      %p3649 = scmp.le.s32.totalorder 2, %s12
      // Predicated region
      $region65: #{tpu_custom_call.1} parent=5 // pred_check
        %p3650 = pneg %p3649
      $region66: #{tpu_custom_call.1} parent=5 // pred_check_branch
        %3652 = sbr.rel (%p3650) target = $region68
      $region67: #{tpu_custom_call.1} parent=5 // pred_region
        %s3653 = ssub.s32 %s12, 2
      $region68: #{tpu_custom_call.1} parent=5 // pred_fallthru
        _
    $region6: #{tpu_custom_call.1} parent=1 // loop_footer
      %s16 = sadd.s32 1, %s12
    $region7: #{tpu_custom_call.1} parent=1 // loop_footer_branch
      %11 = sbr.rel target = $region3
    $region8: #{tpu_custom_call.1} parent=1 // loop_exit
      _
    %3654 = vsyncpa [#allocation6], 1
    %s3655 = scalar_lea.sflag [#allocation6], 1
    %3656 = vsyncpa %s3655, 1

</llo_original>
